<compile_context>
chip_gen: v5e
topology: v5e:2x2
jax: 0.10.0
libtpu: 0.0.40
codegen_flags: <defaults>
</compile_context>

<pallas_src>
import functools

import jax
import jax.numpy as jnp
from jax.experimental import pallas as pl
from jax.experimental.pallas import tpu as pltpu


# ----------------------------------------------------------------------------
# Fused kernel: one invocation, time loop unrolled in-kernel, state in vregs.
# ----------------------------------------------------------------------------
def csnn_fused_kernel(
    xpatch_ref,   # (K*K*B + 1, F1)   conv1 im2col patches + ones row (time-invariant)
    a1_ref,       # (C*B, K*K*B + 1)  kron(W1, I_B) with bias column folded in
    q1_ref,       # (F1, FP1)         bf16 0/1 2x2 sum-pool matrix
    g2_ref,       # (C, FP1, C2*F2)   f32 per-input-channel unrolled conv2 matrices
    b2_ref,       # (1, C2*F2)        conv2 bias, lane-dense row
    q2_ref,       # (C2*F2, C2*FP2)   bf16 0/1 block-diag pool (output == torch flatten)
    wft_ref,      # (C2*FP2, L)       FC weight, transposed
    bf_ref,       # (1, L)            FC bias row
    lab_ref,      # (B, L)            one-hot labels
    mean_ref,     # (B, L)            OUT: temporal mean of classifier spikes
    loss_ref,     # (1, 1)            OUT: MSE loss
    *, T, inv_tau):
    B, L = mean_ref.shape
    C = g2_ref.shape[0]            # conv2 input channels
    N2 = g2_ref.shape[2]           # C2 * F2

    # ---- prologue: conv_1 input current (time-invariant, bias folded) ----
    cur1 = jnp.dot(a1_ref[...], xpatch_ref[...],
                   preferred_element_type=jnp.float32)       # (C*B, F1)

    v1 = jnp.zeros_like(cur1)
    v2 = jnp.zeros((B, N2), jnp.float32)
    v3 = jnp.zeros((B, L), jnp.float32)
    acc = jnp.zeros((B, L), jnp.float32)

    # T is static & small -> trace-time unroll; state stays in vregs.
    for _ in range(T):
        # ---- conv_1 LIF:  v += (I - v)/tau, spike = v>=1, hard reset ----
        v1 = v1 + (cur1 - v1) * inv_tau
        s1 = (v1 >= 1.0).astype(jnp.float32)
        v1 = v1 * (1.0 - s1)

        # ---- 2x2 max-pool of 0/1 spikes == (sum-pool > 0); bf16 is exact ----
        sp1 = (jnp.dot(s1.astype(jnp.bfloat16), q1_ref[...],
                       preferred_element_type=jnp.float32) > 0.5
               ).astype(jnp.float32)                          # (C*B, FP1)

        # ---- conv_2: one deep dot per input channel (rows c*B .. c*B+B) ----
        cur2 = b2_ref[...]                                    # (1, N2) broadcast
        for c in range(C):
            cur2 = cur2 + jnp.dot(sp1[c * B:(c + 1) * B, :], g2_ref[c],
                                  preferred_element_type=jnp.float32)

        # ---- conv_2 LIF ----
        v2 = v2 + (cur2 - v2) * inv_tau
        s2 = (v2 >= 1.0).astype(jnp.float32)
        v2 = v2 * (1.0 - s2)

        # ---- 2x2 max-pool; block-diag per channel, output == flatten layout ----
        sp2 = (jnp.dot(s2.astype(jnp.bfloat16), q2_ref[...],
                       preferred_element_type=jnp.float32) > 0.5
               ).astype(jnp.float32)                          # (B, C2*FP2)

        # ---- classifier FC LIF (single deep dot) ----
        cur3 = jnp.dot(sp2, wft_ref[...],
                       preferred_element_type=jnp.float32) + bf_ref[...]
        v3 = v3 + (cur3 - v3) * inv_tau
        s3 = (v3 >= 1.0).astype(jnp.float32)
        v3 = v3 * (1.0 - s3)
        acc = acc + s3

    m = acc * (1.0 / T)                                       # mean over time
    mean_ref[...] = m
    d = m - lab_ref[...]
    loss_ref[...] = jnp.mean(d * d, keepdims=True)            # F.mse_loss, 'mean'


# ----------------------------------------------------------------------------
# Constant-matrix builders (depend only on params / static geometry).
# ----------------------------------------------------------------------------
def _pool_sum_matrix(h, w):
    """0/1 matrix summing non-overlapping 2x2 windows: (h*w, (h//2)*(w//2))."""
    hi = jnp.arange(h * w) // w
    wi = jnp.arange(h * w) % w
    ho = jnp.arange((h // 2) * (w // 2)) // (w // 2)
    wo = jnp.arange((h // 2) * (w // 2)) % (w // 2)
    return (((hi[:, None] // 2) == ho[None, :]) &
            ((wi[:, None] // 2) == wo[None, :])).astype(jnp.float32)


def _unrolled_conv_matrices(w, h_in, w_in):
    """w: (Cout, Cin, K, K), valid conv stride 1 ->
       (Cin, h_in*w_in, Cout*h_out*w_out); column = co*(ho*wo) + yo*wo + xo."""
    cout, cin, k, _ = w.shape
    h_out, w_out = h_in - k + 1, w_in - k + 1
    yi = jnp.arange(h_in * w_in) // w_in
    xi = jnp.arange(h_in * w_in) % w_in
    yo = jnp.arange(h_out * w_out) // w_out
    xo = jnp.arange(h_out * w_out) % w_out
    ki = yi[:, None] - yo[None, :]
    kj = xi[:, None] - xo[None, :]
    valid = (ki >= 0) & (ki < k) & (kj >= 0) & (kj < k)
    vals = w[:, :, jnp.clip(ki, 0, k - 1), jnp.clip(kj, 0, k - 1)]  # (Cout,Cin,IN,OUT)
    vals = jnp.where(valid[None, None], vals, 0.0)
    return vals.transpose(1, 2, 0, 3).reshape(cin, h_in * w_in,
                                              cout * h_out * w_out)


def _im2col_channel_major(x, k):
    """x: (B,1,H,W) -> (K*K*B, OH*OW), row index = (ki*K+kj)*B + b."""
    b, _, h, w = x.shape
    oh, ow = h - k + 1, w - k + 1
    cols = [x[:, 0, ki:ki + oh, kj:kj + ow].reshape(b, oh * ow)
            for ki in range(k) for kj in range(k)]
    return jnp.stack(cols, axis=0).reshape(k * k * b, oh * ow)


def build_csnn_constants(params, *, batch, image_hw=(28, 28)):
    """Build all parameter-derived constant operands ONCE (outside the jitted
    per-call forward path)."""
    wc1, bc1, wc2, bc2, wfc, bfc = params
    c1 = wc1.shape[0]
    c2 = wc2.shape[0]
    k = wc1.shape[-1]
    h, w = image_hw
    h1, w1 = h - k + 1, w - k + 1            # conv1 out (24, 24)
    p1h, p1w = h1 // 2, w1 // 2              # pool1 out (12, 12)
    h2, w2 = p1h - k + 1, p1w - k + 1        # conv2 out (8, 8)
    f2 = h2 * w2

    eye_b = jnp.eye(batch, dtype=jnp.float32)
    a1 = jnp.kron(wc1.reshape(c1, k * k).astype(jnp.float32), eye_b)  # (C*B, KK*B)
    a1 = jnp.concatenate(
        [a1, jnp.repeat(bc1.astype(jnp.float32), batch)[:, None]], axis=1)

    q1 = _pool_sum_matrix(h1, w1).astype(jnp.bfloat16)                 # (576, 144)
    g2 = _unrolled_conv_matrices(wc2.astype(jnp.float32), p1h, p1w)    # (C, 144, 512)
    b2 = jnp.repeat(bc2.astype(jnp.float32), f2)[None, :]              # (1, 512)
    q2 = jnp.kron(jnp.eye(c2, dtype=jnp.float32),
                  _pool_sum_matrix(h2, w2)).astype(jnp.bfloat16)       # (512, 128)
    wft = wfc.astype(jnp.float32).T                                    # (128, L)
    bf = bfc.astype(jnp.float32)[None, :]                              # (1, L)
    return dict(a1=a1, q1=q1, g2=g2, b2=b2, q2=q2, wft=wft, bf=bf)


# ----------------------------------------------------------------------------
# Full CSNN forward:  (mean_spikes_over_T, mse_loss)
# ----------------------------------------------------------------------------
@functools.partial(jax.jit, static_argnames=("T", "tau", "kernel_size"))
def csnn_forward(x, labels, consts, *, T, tau, kernel_size=5):
    b = x.shape[0]
    l = consts["wft"].shape[1]

    # Input-dependent (but time-invariant) im2col patches + ones row for bias.
    xp = _im2col_channel_major(x.astype(jnp.float32), kernel_size)
    xp = jnp.concatenate([xp, jnp.ones((1, xp.shape[1]), jnp.float32)], axis=0)

    kern = functools.partial(csnn_fused_kernel, T=T, inv_tau=1.0 / tau)

    mean_out, loss = pl.pallas_call(
        kern,
        out_shape=(jax.ShapeDtypeStruct((b, l), jnp.float32),
                   jax.ShapeDtypeStruct((1, 1), jnp.float32)),
        compiler_params=pltpu.CompilerParams(
            vmem_limit_bytes=32 * 1024 * 1024),   # working set < 2 MiB; plenty
    )(xp, consts["a1"], consts["q1"], consts["g2"], consts["b2"],
      consts["q2"], consts["wft"], consts["bf"], labels.astype(jnp.float32))

    return mean_out, loss[0, 0]


# ----------------------------------------------------------------------------
if __name__ == "__main__":
    B, T, C, L = 2, 4, 4, 10
    tau = 2.0

    key = jax.random.PRNGKey(0)
    k1, k2, k3, k4, k5, k6, k7 = jax.random.split(key, 7)

    # Deterministic synthetic parameters (shapes from CSNN.__init__, 28x28 input).
    x = jax.random.uniform(k1, (B, 1, 28, 28), jnp.float32)
    labels = jax.nn.one_hot(jnp.array([3, 7]), L, dtype=jnp.float32)

    W1 = jax.random.normal(k2, (C, 1, 5, 5), jnp.float32) * 0.3
    b1 = jax.random.normal(k3, (C,), jnp.float32) * 0.1
    W2 = jax.random.normal(k4, (2 * C, C, 5, 5), jnp.float32) * 0.15
    b2 = jax.random.normal(k5, (2 * C,), jnp.float32) * 0.1
    Wf = jax.random.normal(k6, (L, 2 * C * 4 * 4), jnp.float32) * 0.15
    bf = jax.random.normal(k7, (L,), jnp.float32) * 0.1

    # Parameter-derived constants built once, outside the per-call jit path.
    consts = build_csnn_constants((W1, b1, W2, b2, Wf, bf), batch=B)

    mean_out, loss = csnn_forward(x, labels, consts, T=T, tau=tau)
    jax.block_until_ready((mean_out, loss))

    assert mean_out.shape == (B, L)
    assert loss.shape == ()
    assert bool(jnp.all(jnp.isfinite(mean_out))) and bool(jnp.isfinite(loss))
    print("KERNEL_OK")
</pallas_src>

<mosaic_0001>
module attributes {stable_mosaic.version = 11 : i64} {
  func.func @csnn_fused_kernel(%arg0: memref<51x576xf32, #tpu.memory_space<vmem>>, %arg1: memref<8x51xf32, #tpu.memory_space<vmem>>, %arg2: memref<576x144xbf16, #tpu.memory_space<vmem>>, %arg3: memref<4x144x512xf32, #tpu.memory_space<vmem>>, %arg4: memref<1x512xf32, #tpu.memory_space<vmem>>, %arg5: memref<512x128xbf16, #tpu.memory_space<vmem>>, %arg6: memref<128x10xf32, #tpu.memory_space<vmem>>, %arg7: memref<1x10xf32, #tpu.memory_space<vmem>>, %arg8: memref<2x10xf32, #tpu.memory_space<vmem>>, %arg9: memref<2x10xf32, #tpu.memory_space<vmem>>, %arg10: memref<1x1xf32, #tpu.memory_space<vmem>>) attributes {dimension_semantics = [], scalar_prefetch = 0 : i64, scratch_operands = 0 : i64, tpu.core_type = #tpu.core_type<tc>} {
    %c0 = arith.constant 0 : index
    %c0_0 = arith.constant 0 : index
    %0 = vector.load %arg1[%c0, %c0_0] : memref<8x51xf32, #tpu.memory_space<vmem>>, vector<8x51xf32>
    %c0_1 = arith.constant 0 : index
    %c0_2 = arith.constant 0 : index
    %1 = vector.load %arg0[%c0_1, %c0_2] : memref<51x576xf32, #tpu.memory_space<vmem>>, vector<51x576xf32>
    %cst = arith.constant dense<0.000000e+00> : vector<8x576xf32>
    %2 = tpu.matmul %0, %1, %cst {dimension_numbers = #tpu.dot_dimension_numbers<[1], [0], [0], [1], [0, 0, 1, 1], [], []>} : vector<8x51xf32>, vector<51x576xf32>, vector<8x576xf32> -> vector<8x576xf32>
    %cst_3 = arith.constant 0.000000e+00 : f32
    %3 = vector.broadcast %cst_3 : f32 to vector<8x576xf32>
    %cst_4 = arith.constant 0.000000e+00 : f32
    %4 = vector.broadcast %cst_4 : f32 to vector<2x512xf32>
    %cst_5 = arith.constant 0.000000e+00 : f32
    %5 = vector.broadcast %cst_5 : f32 to vector<2x10xf32>
    %cst_6 = arith.constant 0.000000e+00 : f32
    %6 = vector.broadcast %cst_6 : f32 to vector<2x10xf32>
    %7 = arith.subf %2, %3 : vector<8x576xf32>
    %cst_7 = arith.constant 5.000000e-01 : f32
    %8 = vector.broadcast %cst_7 : f32 to vector<8x576xf32>
    %9 = arith.mulf %7, %8 : vector<8x576xf32>
    %10 = arith.addf %3, %9 : vector<8x576xf32>
    %cst_8 = arith.constant 1.000000e+00 : f32
    %11 = vector.broadcast %cst_8 : f32 to vector<8x576xf32>
    %12 = arith.cmpf oge, %10, %11 : vector<8x576xf32>
    %13 = arith.extui %12 : vector<8x576xi1> to vector<8x576xi32>
    %14 = arith.sitofp %13 : vector<8x576xi32> to vector<8x576xf32>
    %cst_9 = arith.constant 1.000000e+00 : f32
    %15 = vector.broadcast %cst_9 : f32 to vector<8x576xf32>
    %16 = arith.subf %15, %14 : vector<8x576xf32>
    %17 = arith.mulf %10, %16 : vector<8x576xf32>
    %18 = arith.truncf %14 : vector<8x576xf32> to vector<8x576xbf16>
    %c0_10 = arith.constant 0 : index
    %c0_11 = arith.constant 0 : index
    %19 = vector.load %arg2[%c0_10, %c0_11] : memref<576x144xbf16, #tpu.memory_space<vmem>>, vector<576x144xbf16>
    %cst_12 = arith.constant dense<0.000000e+00> : vector<8x144xf32>
    %20 = tpu.matmul %18, %19, %cst_12 {dimension_numbers = #tpu.dot_dimension_numbers<[1], [0], [0], [1], [0, 0, 1, 1], [], []>} : vector<8x576xbf16>, vector<576x144xbf16>, vector<8x144xf32> -> vector<8x144xf32>
    %cst_13 = arith.constant 5.000000e-01 : f32
    %21 = vector.broadcast %cst_13 : f32 to vector<8x144xf32>
    %22 = arith.cmpf ogt, %20, %21 : vector<8x144xf32>
    %23 = arith.extui %22 : vector<8x144xi1> to vector<8x144xi32>
    %24 = arith.sitofp %23 : vector<8x144xi32> to vector<8x144xf32>
    %c0_14 = arith.constant 0 : index
    %c0_15 = arith.constant 0 : index
    %25 = vector.load %arg4[%c0_14, %c0_15] : memref<1x512xf32, #tpu.memory_space<vmem>>, vector<1x512xf32>
    %26 = vector.extract_strided_slice %24 {offsets = [0, 0], sizes = [2, 144], strides = [1, 1]} : vector<8x144xf32> to vector<2x144xf32>
    %c0_16 = arith.constant 0 : index
    %c0_17 = arith.constant 0 : index
    %c0_18 = arith.constant 0 : index
    %27 = vector.load %arg3[%c0_16, %c0_17, %c0_18] : memref<4x144x512xf32, #tpu.memory_space<vmem>>, vector<1x144x512xf32>
    %28 = vector.shape_cast %27 : vector<1x144x512xf32> to vector<144x512xf32>
    %cst_19 = arith.constant dense<0.000000e+00> : vector<2x512xf32>
    %29 = tpu.matmul %26, %28, %cst_19 {dimension_numbers = #tpu.dot_dimension_numbers<[1], [0], [0], [1], [0, 0, 1, 1], [], []>} : vector<2x144xf32>, vector<144x512xf32>, vector<2x512xf32> -> vector<2x512xf32>
    %30 = vector.broadcast %25 : vector<1x512xf32> to vector<2x512xf32>
    %31 = arith.addf %30, %29 : vector<2x512xf32>
    %32 = vector.extract_strided_slice %24 {offsets = [2, 0], sizes = [2, 144], strides = [1, 1]} : vector<8x144xf32> to vector<2x144xf32>
    %c1 = arith.constant 1 : index
    %c0_20 = arith.constant 0 : index
    %c0_21 = arith.constant 0 : index
    %33 = vector.load %arg3[%c1, %c0_20, %c0_21] : memref<4x144x512xf32, #tpu.memory_space<vmem>>, vector<1x144x512xf32>
    %34 = vector.shape_cast %33 : vector<1x144x512xf32> to vector<144x512xf32>
    %cst_22 = arith.constant dense<0.000000e+00> : vector<2x512xf32>
    %35 = tpu.matmul %32, %34, %cst_22 {dimension_numbers = #tpu.dot_dimension_numbers<[1], [0], [0], [1], [0, 0, 1, 1], [], []>} : vector<2x144xf32>, vector<144x512xf32>, vector<2x512xf32> -> vector<2x512xf32>
    %36 = arith.addf %31, %35 : vector<2x512xf32>
    %37 = vector.extract_strided_slice %24 {offsets = [4, 0], sizes = [2, 144], strides = [1, 1]} : vector<8x144xf32> to vector<2x144xf32>
    %c2 = arith.constant 2 : index
    %c0_23 = arith.constant 0 : index
    %c0_24 = arith.constant 0 : index
    %38 = vector.load %arg3[%c2, %c0_23, %c0_24] : memref<4x144x512xf32, #tpu.memory_space<vmem>>, vector<1x144x512xf32>
    %39 = vector.shape_cast %38 : vector<1x144x512xf32> to vector<144x512xf32>
    %cst_25 = arith.constant dense<0.000000e+00> : vector<2x512xf32>
    %40 = tpu.matmul %37, %39, %cst_25 {dimension_numbers = #tpu.dot_dimension_numbers<[1], [0], [0], [1], [0, 0, 1, 1], [], []>} : vector<2x144xf32>, vector<144x512xf32>, vector<2x512xf32> -> vector<2x512xf32>
    %41 = arith.addf %36, %40 : vector<2x512xf32>
    %42 = vector.extract_strided_slice %24 {offsets = [6, 0], sizes = [2, 144], strides = [1, 1]} : vector<8x144xf32> to vector<2x144xf32>
    %c3 = arith.constant 3 : index
    %c0_26 = arith.constant 0 : index
    %c0_27 = arith.constant 0 : index
    %43 = vector.load %arg3[%c3, %c0_26, %c0_27] : memref<4x144x512xf32, #tpu.memory_space<vmem>>, vector<1x144x512xf32>
    %44 = vector.shape_cast %43 : vector<1x144x512xf32> to vector<144x512xf32>
    %cst_28 = arith.constant dense<0.000000e+00> : vector<2x512xf32>
    %45 = tpu.matmul %42, %44, %cst_28 {dimension_numbers = #tpu.dot_dimension_numbers<[1], [0], [0], [1], [0, 0, 1, 1], [], []>} : vector<2x144xf32>, vector<144x512xf32>, vector<2x512xf32> -> vector<2x512xf32>
    %46 = arith.addf %41, %45 : vector<2x512xf32>
    %47 = arith.subf %46, %4 : vector<2x512xf32>
    %cst_29 = arith.constant 5.000000e-01 : f32
    %48 = vector.broadcast %cst_29 : f32 to vector<2x512xf32>
    %49 = arith.mulf %47, %48 : vector<2x512xf32>
    %50 = arith.addf %4, %49 : vector<2x512xf32>
    %cst_30 = arith.constant 1.000000e+00 : f32
    %51 = vector.broadcast %cst_30 : f32 to vector<2x512xf32>
    %52 = arith.cmpf oge, %50, %51 : vector<2x512xf32>
    %53 = arith.extui %52 : vector<2x512xi1> to vector<2x512xi32>
    %54 = arith.sitofp %53 : vector<2x512xi32> to vector<2x512xf32>
    %cst_31 = arith.constant 1.000000e+00 : f32
    %55 = vector.broadcast %cst_31 : f32 to vector<2x512xf32>
    %56 = arith.subf %55, %54 : vector<2x512xf32>
    %57 = arith.mulf %50, %56 : vector<2x512xf32>
    %58 = arith.truncf %54 : vector<2x512xf32> to vector<2x512xbf16>
    %c0_32 = arith.constant 0 : index
    %c0_33 = arith.constant 0 : index
    %59 = vector.load %arg5[%c0_32, %c0_33] : memref<512x128xbf16, #tpu.memory_space<vmem>>, vector<512x128xbf16>
    %cst_34 = arith.constant dense<0.000000e+00> : vector<2x128xf32>
    %60 = tpu.matmul %58, %59, %cst_34 {dimension_numbers = #tpu.dot_dimension_numbers<[1], [0], [0], [1], [0, 0, 1, 1], [], []>} : vector<2x512xbf16>, vector<512x128xbf16>, vector<2x128xf32> -> vector<2x128xf32>
    %cst_35 = arith.constant 5.000000e-01 : f32
    %61 = vector.broadcast %cst_35 : f32 to vector<2x128xf32>
    %62 = arith.cmpf ogt, %60, %61 : vector<2x128xf32>
    %63 = arith.extui %62 : vector<2x128xi1> to vector<2x128xi32>
    %64 = arith.sitofp %63 : vector<2x128xi32> to vector<2x128xf32>
    %c0_36 = arith.constant 0 : index
    %c0_37 = arith.constant 0 : index
    %65 = vector.load %arg6[%c0_36, %c0_37] : memref<128x10xf32, #tpu.memory_space<vmem>>, vector<128x10xf32>
    %cst_38 = arith.constant dense<0.000000e+00> : vector<2x10xf32>
    %66 = tpu.matmul %64, %65, %cst_38 {dimension_numbers = #tpu.dot_dimension_numbers<[1], [0], [0], [1], [0, 0, 1, 1], [], []>} : vector<2x128xf32>, vector<128x10xf32>, vector<2x10xf32> -> vector<2x10xf32>
    %c0_39 = arith.constant 0 : index
    %c0_40 = arith.constant 0 : index
    %67 = vector.load %arg7[%c0_39, %c0_40] : memref<1x10xf32, #tpu.memory_space<vmem>>, vector<1x10xf32>
    %68 = vector.broadcast %67 : vector<1x10xf32> to vector<2x10xf32>
    %69 = arith.addf %66, %68 : vector<2x10xf32>
    %70 = arith.subf %69, %5 : vector<2x10xf32>
    %cst_41 = arith.constant 5.000000e-01 : f32
    %71 = vector.broadcast %cst_41 : f32 to vector<2x10xf32>
    %72 = arith.mulf %70, %71 : vector<2x10xf32>
    %73 = arith.addf %5, %72 : vector<2x10xf32>
    %cst_42 = arith.constant 1.000000e+00 : f32
    %74 = vector.broadcast %cst_42 : f32 to vector<2x10xf32>
    %75 = arith.cmpf oge, %73, %74 : vector<2x10xf32>
    %76 = arith.extui %75 : vector<2x10xi1> to vector<2x10xi32>
    %77 = arith.sitofp %76 : vector<2x10xi32> to vector<2x10xf32>
    %cst_43 = arith.constant 1.000000e+00 : f32
    %78 = vector.broadcast %cst_43 : f32 to vector<2x10xf32>
    %79 = arith.subf %78, %77 : vector<2x10xf32>
    %80 = arith.mulf %73, %79 : vector<2x10xf32>
    %81 = arith.addf %6, %77 : vector<2x10xf32>
    %82 = arith.subf %2, %17 : vector<8x576xf32>
    %cst_44 = arith.constant 5.000000e-01 : f32
    %83 = vector.broadcast %cst_44 : f32 to vector<8x576xf32>
    %84 = arith.mulf %82, %83 : vector<8x576xf32>
    %85 = arith.addf %17, %84 : vector<8x576xf32>
    %cst_45 = arith.constant 1.000000e+00 : f32
    %86 = vector.broadcast %cst_45 : f32 to vector<8x576xf32>
    %87 = arith.cmpf oge, %85, %86 : vector<8x576xf32>
    %88 = arith.extui %87 : vector<8x576xi1> to vector<8x576xi32>
    %89 = arith.sitofp %88 : vector<8x576xi32> to vector<8x576xf32>
    %cst_46 = arith.constant 1.000000e+00 : f32
    %90 = vector.broadcast %cst_46 : f32 to vector<8x576xf32>
    %91 = arith.subf %90, %89 : vector<8x576xf32>
    %92 = arith.mulf %85, %91 : vector<8x576xf32>
    %93 = arith.truncf %89 : vector<8x576xf32> to vector<8x576xbf16>
    %c0_47 = arith.constant 0 : index
    %c0_48 = arith.constant 0 : index
    %94 = vector.load %arg2[%c0_47, %c0_48] : memref<576x144xbf16, #tpu.memory_space<vmem>>, vector<576x144xbf16>
    %cst_49 = arith.constant dense<0.000000e+00> : vector<8x144xf32>
    %95 = tpu.matmul %93, %94, %cst_49 {dimension_numbers = #tpu.dot_dimension_numbers<[1], [0], [0], [1], [0, 0, 1, 1], [], []>} : vector<8x576xbf16>, vector<576x144xbf16>, vector<8x144xf32> -> vector<8x144xf32>
    %cst_50 = arith.constant 5.000000e-01 : f32
    %96 = vector.broadcast %cst_50 : f32 to vector<8x144xf32>
    %97 = arith.cmpf ogt, %95, %96 : vector<8x144xf32>
    %98 = arith.extui %97 : vector<8x144xi1> to vector<8x144xi32>
    %99 = arith.sitofp %98 : vector<8x144xi32> to vector<8x144xf32>
    %c0_51 = arith.constant 0 : index
    %c0_52 = arith.constant 0 : index
    %100 = vector.load %arg4[%c0_51, %c0_52] : memref<1x512xf32, #tpu.memory_space<vmem>>, vector<1x512xf32>
    %101 = vector.extract_strided_slice %99 {offsets = [0, 0], sizes = [2, 144], strides = [1, 1]} : vector<8x144xf32> to vector<2x144xf32>
    %c0_53 = arith.constant 0 : index
    %c0_54 = arith.constant 0 : index
    %c0_55 = arith.constant 0 : index
    %102 = vector.load %arg3[%c0_53, %c0_54, %c0_55] : memref<4x144x512xf32, #tpu.memory_space<vmem>>, vector<1x144x512xf32>
    %103 = vector.shape_cast %102 : vector<1x144x512xf32> to vector<144x512xf32>
    %cst_56 = arith.constant dense<0.000000e+00> : vector<2x512xf32>
    %104 = tpu.matmul %101, %103, %cst_56 {dimension_numbers = #tpu.dot_dimension_numbers<[1], [0], [0], [1], [0, 0, 1, 1], [], []>} : vector<2x144xf32>, vector<144x512xf32>, vector<2x512xf32> -> vector<2x512xf32>
    %105 = vector.broadcast %100 : vector<1x512xf32> to vector<2x512xf32>
    %106 = arith.addf %105, %104 : vector<2x512xf32>
    %107 = vector.extract_strided_slice %99 {offsets = [2, 0], sizes = [2, 144], strides = [1, 1]} : vector<8x144xf32> to vector<2x144xf32>
    %c1_57 = arith.constant 1 : index
    %c0_58 = arith.constant 0 : index
    %c0_59 = arith.constant 0 : index
    %108 = vector.load %arg3[%c1_57, %c0_58, %c0_59] : memref<4x144x512xf32, #tpu.memory_space<vmem>>, vector<1x144x512xf32>
    %109 = vector.shape_cast %108 : vector<1x144x512xf32> to vector<144x512xf32>
    %cst_60 = arith.constant dense<0.000000e+00> : vector<2x512xf32>
    %110 = tpu.matmul %107, %109, %cst_60 {dimension_numbers = #tpu.dot_dimension_numbers<[1], [0], [0], [1], [0, 0, 1, 1], [], []>} : vector<2x144xf32>, vector<144x512xf32>, vector<2x512xf32> -> vector<2x512xf32>
    %111 = arith.addf %106, %110 : vector<2x512xf32>
    %112 = vector.extract_strided_slice %99 {offsets = [4, 0], sizes = [2, 144], strides = [1, 1]} : vector<8x144xf32> to vector<2x144xf32>
    %c2_61 = arith.constant 2 : index
    %c0_62 = arith.constant 0 : index
    %c0_63 = arith.constant 0 : index
    %113 = vector.load %arg3[%c2_61, %c0_62, %c0_63] : memref<4x144x512xf32, #tpu.memory_space<vmem>>, vector<1x144x512xf32>
    %114 = vector.shape_cast %113 : vector<1x144x512xf32> to vector<144x512xf32>
    %cst_64 = arith.constant dense<0.000000e+00> : vector<2x512xf32>
    %115 = tpu.matmul %112, %114, %cst_64 {dimension_numbers = #tpu.dot_dimension_numbers<[1], [0], [0], [1], [0, 0, 1, 1], [], []>} : vector<2x144xf32>, vector<144x512xf32>, vector<2x512xf32> -> vector<2x512xf32>
    %116 = arith.addf %111, %115 : vector<2x512xf32>
    %117 = vector.extract_strided_slice %99 {offsets = [6, 0], sizes = [2, 144], strides = [1, 1]} : vector<8x144xf32> to vector<2x144xf32>
    %c3_65 = arith.constant 3 : index
    %c0_66 = arith.constant 0 : index
    %c0_67 = arith.constant 0 : index
    %118 = vector.load %arg3[%c3_65, %c0_66, %c0_67] : memref<4x144x512xf32, #tpu.memory_space<vmem>>, vector<1x144x512xf32>
    %119 = vector.shape_cast %118 : vector<1x144x512xf32> to vector<144x512xf32>
    %cst_68 = arith.constant dense<0.000000e+00> : vector<2x512xf32>
    %120 = tpu.matmul %117, %119, %cst_68 {dimension_numbers = #tpu.dot_dimension_numbers<[1], [0], [0], [1], [0, 0, 1, 1], [], []>} : vector<2x144xf32>, vector<144x512xf32>, vector<2x512xf32> -> vector<2x512xf32>
    %121 = arith.addf %116, %120 : vector<2x512xf32>
    %122 = arith.subf %121, %57 : vector<2x512xf32>
    %cst_69 = arith.constant 5.000000e-01 : f32
    %123 = vector.broadcast %cst_69 : f32 to vector<2x512xf32>
    %124 = arith.mulf %122, %123 : vector<2x512xf32>
    %125 = arith.addf %57, %124 : vector<2x512xf32>
    %cst_70 = arith.constant 1.000000e+00 : f32
    %126 = vector.broadcast %cst_70 : f32 to vector<2x512xf32>
    %127 = arith.cmpf oge, %125, %126 : vector<2x512xf32>
    %128 = arith.extui %127 : vector<2x512xi1> to vector<2x512xi32>
    %129 = arith.sitofp %128 : vector<2x512xi32> to vector<2x512xf32>
    %cst_71 = arith.constant 1.000000e+00 : f32
    %130 = vector.broadcast %cst_71 : f32 to vector<2x512xf32>
    %131 = arith.subf %130, %129 : vector<2x512xf32>
    %132 = arith.mulf %125, %131 : vector<2x512xf32>
    %133 = arith.truncf %129 : vector<2x512xf32> to vector<2x512xbf16>
    %c0_72 = arith.constant 0 : index
    %c0_73 = arith.constant 0 : index
    %134 = vector.load %arg5[%c0_72, %c0_73] : memref<512x128xbf16, #tpu.memory_space<vmem>>, vector<512x128xbf16>
    %cst_74 = arith.constant dense<0.000000e+00> : vector<2x128xf32>
    %135 = tpu.matmul %133, %134, %cst_74 {dimension_numbers = #tpu.dot_dimension_numbers<[1], [0], [0], [1], [0, 0, 1, 1], [], []>} : vector<2x512xbf16>, vector<512x128xbf16>, vector<2x128xf32> -> vector<2x128xf32>
    %cst_75 = arith.constant 5.000000e-01 : f32
    %136 = vector.broadcast %cst_75 : f32 to vector<2x128xf32>
    %137 = arith.cmpf ogt, %135, %136 : vector<2x128xf32>
    %138 = arith.extui %137 : vector<2x128xi1> to vector<2x128xi32>
    %139 = arith.sitofp %138 : vector<2x128xi32> to vector<2x128xf32>
    %c0_76 = arith.constant 0 : index
    %c0_77 = arith.constant 0 : index
    %140 = vector.load %arg6[%c0_76, %c0_77] : memref<128x10xf32, #tpu.memory_space<vmem>>, vector<128x10xf32>
    %cst_78 = arith.constant dense<0.000000e+00> : vector<2x10xf32>
    %141 = tpu.matmul %139, %140, %cst_78 {dimension_numbers = #tpu.dot_dimension_numbers<[1], [0], [0], [1], [0, 0, 1, 1], [], []>} : vector<2x128xf32>, vector<128x10xf32>, vector<2x10xf32> -> vector<2x10xf32>
    %c0_79 = arith.constant 0 : index
    %c0_80 = arith.constant 0 : index
    %142 = vector.load %arg7[%c0_79, %c0_80] : memref<1x10xf32, #tpu.memory_space<vmem>>, vector<1x10xf32>
    %143 = vector.broadcast %142 : vector<1x10xf32> to vector<2x10xf32>
    %144 = arith.addf %141, %143 : vector<2x10xf32>
    %145 = arith.subf %144, %80 : vector<2x10xf32>
    %cst_81 = arith.constant 5.000000e-01 : f32
    %146 = vector.broadcast %cst_81 : f32 to vector<2x10xf32>
    %147 = arith.mulf %145, %146 : vector<2x10xf32>
    %148 = arith.addf %80, %147 : vector<2x10xf32>
    %cst_82 = arith.constant 1.000000e+00 : f32
    %149 = vector.broadcast %cst_82 : f32 to vector<2x10xf32>
    %150 = arith.cmpf oge, %148, %149 : vector<2x10xf32>
    %151 = arith.extui %150 : vector<2x10xi1> to vector<2x10xi32>
    %152 = arith.sitofp %151 : vector<2x10xi32> to vector<2x10xf32>
    %cst_83 = arith.constant 1.000000e+00 : f32
    %153 = vector.broadcast %cst_83 : f32 to vector<2x10xf32>
    %154 = arith.subf %153, %152 : vector<2x10xf32>
    %155 = arith.mulf %148, %154 : vector<2x10xf32>
    %156 = arith.addf %81, %152 : vector<2x10xf32>
    %157 = arith.subf %2, %92 : vector<8x576xf32>
    %cst_84 = arith.constant 5.000000e-01 : f32
    %158 = vector.broadcast %cst_84 : f32 to vector<8x576xf32>
    %159 = arith.mulf %157, %158 : vector<8x576xf32>
    %160 = arith.addf %92, %159 : vector<8x576xf32>
    %cst_85 = arith.constant 1.000000e+00 : f32
    %161 = vector.broadcast %cst_85 : f32 to vector<8x576xf32>
    %162 = arith.cmpf oge, %160, %161 : vector<8x576xf32>
    %163 = arith.extui %162 : vector<8x576xi1> to vector<8x576xi32>
    %164 = arith.sitofp %163 : vector<8x576xi32> to vector<8x576xf32>
    %cst_86 = arith.constant 1.000000e+00 : f32
    %165 = vector.broadcast %cst_86 : f32 to vector<8x576xf32>
    %166 = arith.subf %165, %164 : vector<8x576xf32>
    %167 = arith.mulf %160, %166 : vector<8x576xf32>
    %168 = arith.truncf %164 : vector<8x576xf32> to vector<8x576xbf16>
    %c0_87 = arith.constant 0 : index
    %c0_88 = arith.constant 0 : index
    %169 = vector.load %arg2[%c0_87, %c0_88] : memref<576x144xbf16, #tpu.memory_space<vmem>>, vector<576x144xbf16>
    %cst_89 = arith.constant dense<0.000000e+00> : vector<8x144xf32>
    %170 = tpu.matmul %168, %169, %cst_89 {dimension_numbers = #tpu.dot_dimension_numbers<[1], [0], [0], [1], [0, 0, 1, 1], [], []>} : vector<8x576xbf16>, vector<576x144xbf16>, vector<8x144xf32> -> vector<8x144xf32>
    %cst_90 = arith.constant 5.000000e-01 : f32
    %171 = vector.broadcast %cst_90 : f32 to vector<8x144xf32>
    %172 = arith.cmpf ogt, %170, %171 : vector<8x144xf32>
    %173 = arith.extui %172 : vector<8x144xi1> to vector<8x144xi32>
    %174 = arith.sitofp %173 : vector<8x144xi32> to vector<8x144xf32>
    %c0_91 = arith.constant 0 : index
    %c0_92 = arith.constant 0 : index
    %175 = vector.load %arg4[%c0_91, %c0_92] : memref<1x512xf32, #tpu.memory_space<vmem>>, vector<1x512xf32>
    %176 = vector.extract_strided_slice %174 {offsets = [0, 0], sizes = [2, 144], strides = [1, 1]} : vector<8x144xf32> to vector<2x144xf32>
    %c0_93 = arith.constant 0 : index
    %c0_94 = arith.constant 0 : index
    %c0_95 = arith.constant 0 : index
    %177 = vector.load %arg3[%c0_93, %c0_94, %c0_95] : memref<4x144x512xf32, #tpu.memory_space<vmem>>, vector<1x144x512xf32>
    %178 = vector.shape_cast %177 : vector<1x144x512xf32> to vector<144x512xf32>
    %cst_96 = arith.constant dense<0.000000e+00> : vector<2x512xf32>
    %179 = tpu.matmul %176, %178, %cst_96 {dimension_numbers = #tpu.dot_dimension_numbers<[1], [0], [0], [1], [0, 0, 1, 1], [], []>} : vector<2x144xf32>, vector<144x512xf32>, vector<2x512xf32> -> vector<2x512xf32>
    %180 = vector.broadcast %175 : vector<1x512xf32> to vector<2x512xf32>
    %181 = arith.addf %180, %179 : vector<2x512xf32>
    %182 = vector.extract_strided_slice %174 {offsets = [2, 0], sizes = [2, 144], strides = [1, 1]} : vector<8x144xf32> to vector<2x144xf32>
    %c1_97 = arith.constant 1 : index
    %c0_98 = arith.constant 0 : index
    %c0_99 = arith.constant 0 : index
    %183 = vector.load %arg3[%c1_97, %c0_98, %c0_99] : memref<4x144x512xf32, #tpu.memory_space<vmem>>, vector<1x144x512xf32>
    %184 = vector.shape_cast %183 : vector<1x144x512xf32> to vector<144x512xf32>
    %cst_100 = arith.constant dense<0.000000e+00> : vector<2x512xf32>
    %185 = tpu.matmul %182, %184, %cst_100 {dimension_numbers = #tpu.dot_dimension_numbers<[1], [0], [0], [1], [0, 0, 1, 1], [], []>} : vector<2x144xf32>, vector<144x512xf32>, vector<2x512xf32> -> vector<2x512xf32>
    %186 = arith.addf %181, %185 : vector<2x512xf32>
    %187 = vector.extract_strided_slice %174 {offsets = [4, 0], sizes = [2, 144], strides = [1, 1]} : vector<8x144xf32> to vector<2x144xf32>
    %c2_101 = arith.constant 2 : index
    %c0_102 = arith.constant 0 : index
    %c0_103 = arith.constant 0 : index
    %188 = vector.load %arg3[%c2_101, %c0_102, %c0_103] : memref<4x144x512xf32, #tpu.memory_space<vmem>>, vector<1x144x512xf32>
    %189 = vector.shape_cast %188 : vector<1x144x512xf32> to vector<144x512xf32>
    %cst_104 = arith.constant dense<0.000000e+00> : vector<2x512xf32>
    %190 = tpu.matmul %187, %189, %cst_104 {dimension_numbers = #tpu.dot_dimension_numbers<[1], [0], [0], [1], [0, 0, 1, 1], [], []>} : vector<2x144xf32>, vector<144x512xf32>, vector<2x512xf32> -> vector<2x512xf32>
    %191 = arith.addf %186, %190 : vector<2x512xf32>
    %192 = vector.extract_strided_slice %174 {offsets = [6, 0], sizes = [2, 144], strides = [1, 1]} : vector<8x144xf32> to vector<2x144xf32>
    %c3_105 = arith.constant 3 : index
    %c0_106 = arith.constant 0 : index
    %c0_107 = arith.constant 0 : index
    %193 = vector.load %arg3[%c3_105, %c0_106, %c0_107] : memref<4x144x512xf32, #tpu.memory_space<vmem>>, vector<1x144x512xf32>
    %194 = vector.shape_cast %193 : vector<1x144x512xf32> to vector<144x512xf32>
    %cst_108 = arith.constant dense<0.000000e+00> : vector<2x512xf32>
    %195 = tpu.matmul %192, %194, %cst_108 {dimension_numbers = #tpu.dot_dimension_numbers<[1], [0], [0], [1], [0, 0, 1, 1], [], []>} : vector<2x144xf32>, vector<144x512xf32>, vector<2x512xf32> -> vector<2x512xf32>
    %196 = arith.addf %191, %195 : vector<2x512xf32>
    %197 = arith.subf %196, %132 : vector<2x512xf32>
    %cst_109 = arith.constant 5.000000e-01 : f32
    %198 = vector.broadcast %cst_109 : f32 to vector<2x512xf32>
    %199 = arith.mulf %197, %198 : vector<2x512xf32>
    %200 = arith.addf %132, %199 : vector<2x512xf32>
    %cst_110 = arith.constant 1.000000e+00 : f32
    %201 = vector.broadcast %cst_110 : f32 to vector<2x512xf32>
    %202 = arith.cmpf oge, %200, %201 : vector<2x512xf32>
    %203 = arith.extui %202 : vector<2x512xi1> to vector<2x512xi32>
    %204 = arith.sitofp %203 : vector<2x512xi32> to vector<2x512xf32>
    %cst_111 = arith.constant 1.000000e+00 : f32
    %205 = vector.broadcast %cst_111 : f32 to vector<2x512xf32>
    %206 = arith.subf %205, %204 : vector<2x512xf32>
    %207 = arith.mulf %200, %206 : vector<2x512xf32>
    %208 = arith.truncf %204 : vector<2x512xf32> to vector<2x512xbf16>
    %c0_112 = arith.constant 0 : index
    %c0_113 = arith.constant 0 : index
    %209 = vector.load %arg5[%c0_112, %c0_113] : memref<512x128xbf16, #tpu.memory_space<vmem>>, vector<512x128xbf16>
    %cst_114 = arith.constant dense<0.000000e+00> : vector<2x128xf32>
    %210 = tpu.matmul %208, %209, %cst_114 {dimension_numbers = #tpu.dot_dimension_numbers<[1], [0], [0], [1], [0, 0, 1, 1], [], []>} : vector<2x512xbf16>, vector<512x128xbf16>, vector<2x128xf32> -> vector<2x128xf32>
    %cst_115 = arith.constant 5.000000e-01 : f32
    %211 = vector.broadcast %cst_115 : f32 to vector<2x128xf32>
    %212 = arith.cmpf ogt, %210, %211 : vector<2x128xf32>
    %213 = arith.extui %212 : vector<2x128xi1> to vector<2x128xi32>
    %214 = arith.sitofp %213 : vector<2x128xi32> to vector<2x128xf32>
    %c0_116 = arith.constant 0 : index
    %c0_117 = arith.constant 0 : index
    %215 = vector.load %arg6[%c0_116, %c0_117] : memref<128x10xf32, #tpu.memory_space<vmem>>, vector<128x10xf32>
    %cst_118 = arith.constant dense<0.000000e+00> : vector<2x10xf32>
    %216 = tpu.matmul %214, %215, %cst_118 {dimension_numbers = #tpu.dot_dimension_numbers<[1], [0], [0], [1], [0, 0, 1, 1], [], []>} : vector<2x128xf32>, vector<128x10xf32>, vector<2x10xf32> -> vector<2x10xf32>
    %c0_119 = arith.constant 0 : index
    %c0_120 = arith.constant 0 : index
    %217 = vector.load %arg7[%c0_119, %c0_120] : memref<1x10xf32, #tpu.memory_space<vmem>>, vector<1x10xf32>
    %218 = vector.broadcast %217 : vector<1x10xf32> to vector<2x10xf32>
    %219 = arith.addf %216, %218 : vector<2x10xf32>
    %220 = arith.subf %219, %155 : vector<2x10xf32>
    %cst_121 = arith.constant 5.000000e-01 : f32
    %221 = vector.broadcast %cst_121 : f32 to vector<2x10xf32>
    %222 = arith.mulf %220, %221 : vector<2x10xf32>
    %223 = arith.addf %155, %222 : vector<2x10xf32>
    %cst_122 = arith.constant 1.000000e+00 : f32
    %224 = vector.broadcast %cst_122 : f32 to vector<2x10xf32>
    %225 = arith.cmpf oge, %223, %224 : vector<2x10xf32>
    %226 = arith.extui %225 : vector<2x10xi1> to vector<2x10xi32>
    %227 = arith.sitofp %226 : vector<2x10xi32> to vector<2x10xf32>
    %cst_123 = arith.constant 1.000000e+00 : f32
    %228 = vector.broadcast %cst_123 : f32 to vector<2x10xf32>
    %229 = arith.subf %228, %227 : vector<2x10xf32>
    %230 = arith.mulf %223, %229 : vector<2x10xf32>
    %231 = arith.addf %156, %227 : vector<2x10xf32>
    %232 = arith.subf %2, %167 : vector<8x576xf32>
    %cst_124 = arith.constant 5.000000e-01 : f32
    %233 = vector.broadcast %cst_124 : f32 to vector<8x576xf32>
    %234 = arith.mulf %232, %233 : vector<8x576xf32>
    %235 = arith.addf %167, %234 : vector<8x576xf32>
    %cst_125 = arith.constant 1.000000e+00 : f32
    %236 = vector.broadcast %cst_125 : f32 to vector<8x576xf32>
    %237 = arith.cmpf oge, %235, %236 : vector<8x576xf32>
    %238 = arith.extui %237 : vector<8x576xi1> to vector<8x576xi32>
    %239 = arith.sitofp %238 : vector<8x576xi32> to vector<8x576xf32>
    %240 = arith.truncf %239 : vector<8x576xf32> to vector<8x576xbf16>
    %c0_126 = arith.constant 0 : index
    %c0_127 = arith.constant 0 : index
    %241 = vector.load %arg2[%c0_126, %c0_127] : memref<576x144xbf16, #tpu.memory_space<vmem>>, vector<576x144xbf16>
    %cst_128 = arith.constant dense<0.000000e+00> : vector<8x144xf32>
    %242 = tpu.matmul %240, %241, %cst_128 {dimension_numbers = #tpu.dot_dimension_numbers<[1], [0], [0], [1], [0, 0, 1, 1], [], []>} : vector<8x576xbf16>, vector<576x144xbf16>, vector<8x144xf32> -> vector<8x144xf32>
    %cst_129 = arith.constant 5.000000e-01 : f32
    %243 = vector.broadcast %cst_129 : f32 to vector<8x144xf32>
    %244 = arith.cmpf ogt, %242, %243 : vector<8x144xf32>
    %245 = arith.extui %244 : vector<8x144xi1> to vector<8x144xi32>
    %246 = arith.sitofp %245 : vector<8x144xi32> to vector<8x144xf32>
    %c0_130 = arith.constant 0 : index
    %c0_131 = arith.constant 0 : index
    %247 = vector.load %arg4[%c0_130, %c0_131] : memref<1x512xf32, #tpu.memory_space<vmem>>, vector<1x512xf32>
    %248 = vector.extract_strided_slice %246 {offsets = [0, 0], sizes = [2, 144], strides = [1, 1]} : vector<8x144xf32> to vector<2x144xf32>
    %c0_132 = arith.constant 0 : index
    %c0_133 = arith.constant 0 : index
    %c0_134 = arith.constant 0 : index
    %249 = vector.load %arg3[%c0_132, %c0_133, %c0_134] : memref<4x144x512xf32, #tpu.memory_space<vmem>>, vector<1x144x512xf32>
    %250 = vector.shape_cast %249 : vector<1x144x512xf32> to vector<144x512xf32>
    %cst_135 = arith.constant dense<0.000000e+00> : vector<2x512xf32>
    %251 = tpu.matmul %248, %250, %cst_135 {dimension_numbers = #tpu.dot_dimension_numbers<[1], [0], [0], [1], [0, 0, 1, 1], [], []>} : vector<2x144xf32>, vector<144x512xf32>, vector<2x512xf32> -> vector<2x512xf32>
    %252 = vector.broadcast %247 : vector<1x512xf32> to vector<2x512xf32>
    %253 = arith.addf %252, %251 : vector<2x512xf32>
    %254 = vector.extract_strided_slice %246 {offsets = [2, 0], sizes = [2, 144], strides = [1, 1]} : vector<8x144xf32> to vector<2x144xf32>
    %c1_136 = arith.constant 1 : index
    %c0_137 = arith.constant 0 : index
    %c0_138 = arith.constant 0 : index
    %255 = vector.load %arg3[%c1_136, %c0_137, %c0_138] : memref<4x144x512xf32, #tpu.memory_space<vmem>>, vector<1x144x512xf32>
    %256 = vector.shape_cast %255 : vector<1x144x512xf32> to vector<144x512xf32>
    %cst_139 = arith.constant dense<0.000000e+00> : vector<2x512xf32>
    %257 = tpu.matmul %254, %256, %cst_139 {dimension_numbers = #tpu.dot_dimension_numbers<[1], [0], [0], [1], [0, 0, 1, 1], [], []>} : vector<2x144xf32>, vector<144x512xf32>, vector<2x512xf32> -> vector<2x512xf32>
    %258 = arith.addf %253, %257 : vector<2x512xf32>
    %259 = vector.extract_strided_slice %246 {offsets = [4, 0], sizes = [2, 144], strides = [1, 1]} : vector<8x144xf32> to vector<2x144xf32>
    %c2_140 = arith.constant 2 : index
    %c0_141 = arith.constant 0 : index
    %c0_142 = arith.constant 0 : index
    %260 = vector.load %arg3[%c2_140, %c0_141, %c0_142] : memref<4x144x512xf32, #tpu.memory_space<vmem>>, vector<1x144x512xf32>
    %261 = vector.shape_cast %260 : vector<1x144x512xf32> to vector<144x512xf32>
    %cst_143 = arith.constant dense<0.000000e+00> : vector<2x512xf32>
    %262 = tpu.matmul %259, %261, %cst_143 {dimension_numbers = #tpu.dot_dimension_numbers<[1], [0], [0], [1], [0, 0, 1, 1], [], []>} : vector<2x144xf32>, vector<144x512xf32>, vector<2x512xf32> -> vector<2x512xf32>
    %263 = arith.addf %258, %262 : vector<2x512xf32>
    %264 = vector.extract_strided_slice %246 {offsets = [6, 0], sizes = [2, 144], strides = [1, 1]} : vector<8x144xf32> to vector<2x144xf32>
    %c3_144 = arith.constant 3 : index
    %c0_145 = arith.constant 0 : index
    %c0_146 = arith.constant 0 : index
    %265 = vector.load %arg3[%c3_144, %c0_145, %c0_146] : memref<4x144x512xf32, #tpu.memory_space<vmem>>, vector<1x144x512xf32>
    %266 = vector.shape_cast %265 : vector<1x144x512xf32> to vector<144x512xf32>
    %cst_147 = arith.constant dense<0.000000e+00> : vector<2x512xf32>
    %267 = tpu.matmul %264, %266, %cst_147 {dimension_numbers = #tpu.dot_dimension_numbers<[1], [0], [0], [1], [0, 0, 1, 1], [], []>} : vector<2x144xf32>, vector<144x512xf32>, vector<2x512xf32> -> vector<2x512xf32>
    %268 = arith.addf %263, %267 : vector<2x512xf32>
    %269 = arith.subf %268, %207 : vector<2x512xf32>
    %cst_148 = arith.constant 5.000000e-01 : f32
    %270 = vector.broadcast %cst_148 : f32 to vector<2x512xf32>
    %271 = arith.mulf %269, %270 : vector<2x512xf32>
    %272 = arith.addf %207, %271 : vector<2x512xf32>
    %cst_149 = arith.constant 1.000000e+00 : f32
    %273 = vector.broadcast %cst_149 : f32 to vector<2x512xf32>
    %274 = arith.cmpf oge, %272, %273 : vector<2x512xf32>
    %275 = arith.extui %274 : vector<2x512xi1> to vector<2x512xi32>
    %276 = arith.sitofp %275 : vector<2x512xi32> to vector<2x512xf32>
    %277 = arith.truncf %276 : vector<2x512xf32> to vector<2x512xbf16>
    %c0_150 = arith.constant 0 : index
    %c0_151 = arith.constant 0 : index
    %278 = vector.load %arg5[%c0_150, %c0_151] : memref<512x128xbf16, #tpu.memory_space<vmem>>, vector<512x128xbf16>
    %cst_152 = arith.constant dense<0.000000e+00> : vector<2x128xf32>
    %279 = tpu.matmul %277, %278, %cst_152 {dimension_numbers = #tpu.dot_dimension_numbers<[1], [0], [0], [1], [0, 0, 1, 1], [], []>} : vector<2x512xbf16>, vector<512x128xbf16>, vector<2x128xf32> -> vector<2x128xf32>
    %cst_153 = arith.constant 5.000000e-01 : f32
    %280 = vector.broadcast %cst_153 : f32 to vector<2x128xf32>
    %281 = arith.cmpf ogt, %279, %280 : vector<2x128xf32>
    %282 = arith.extui %281 : vector<2x128xi1> to vector<2x128xi32>
    %283 = arith.sitofp %282 : vector<2x128xi32> to vector<2x128xf32>
    %c0_154 = arith.constant 0 : index
    %c0_155 = arith.constant 0 : index
    %284 = vector.load %arg6[%c0_154, %c0_155] : memref<128x10xf32, #tpu.memory_space<vmem>>, vector<128x10xf32>
    %cst_156 = arith.constant dense<0.000000e+00> : vector<2x10xf32>
    %285 = tpu.matmul %283, %284, %cst_156 {dimension_numbers = #tpu.dot_dimension_numbers<[1], [0], [0], [1], [0, 0, 1, 1], [], []>} : vector<2x128xf32>, vector<128x10xf32>, vector<2x10xf32> -> vector<2x10xf32>
    %c0_157 = arith.constant 0 : index
    %c0_158 = arith.constant 0 : index
    %286 = vector.load %arg7[%c0_157, %c0_158] : memref<1x10xf32, #tpu.memory_space<vmem>>, vector<1x10xf32>
    %287 = vector.broadcast %286 : vector<1x10xf32> to vector<2x10xf32>
    %288 = arith.addf %285, %287 : vector<2x10xf32>
    %289 = arith.subf %288, %230 : vector<2x10xf32>
    %cst_159 = arith.constant 5.000000e-01 : f32
    %290 = vector.broadcast %cst_159 : f32 to vector<2x10xf32>
    %291 = arith.mulf %289, %290 : vector<2x10xf32>
    %292 = arith.addf %230, %291 : vector<2x10xf32>
    %cst_160 = arith.constant 1.000000e+00 : f32
    %293 = vector.broadcast %cst_160 : f32 to vector<2x10xf32>
    %294 = arith.cmpf oge, %292, %293 : vector<2x10xf32>
    %295 = arith.extui %294 : vector<2x10xi1> to vector<2x10xi32>
    %296 = arith.sitofp %295 : vector<2x10xi32> to vector<2x10xf32>
    %297 = arith.addf %231, %296 : vector<2x10xf32>
    %cst_161 = arith.constant 2.500000e-01 : f32
    %298 = vector.broadcast %cst_161 : f32 to vector<2x10xf32>
    %299 = arith.mulf %297, %298 : vector<2x10xf32>
    %c0_162 = arith.constant 0 : index
    %c0_163 = arith.constant 0 : index
    %300 = vector.load %arg9[%c0_162, %c0_163] : memref<2x10xf32, #tpu.memory_space<vmem>>, vector<2x10xf32>
    tpu.vector_store %arg9[%c0_162, %c0_163], %299 {strides = array<i32>} : memref<2x10xf32, #tpu.memory_space<vmem>>, vector<2x10xf32>,
    %c0_164 = arith.constant 0 : index
    %c0_165 = arith.constant 0 : index
    %301 = vector.load %arg8[%c0_164, %c0_165] : memref<2x10xf32, #tpu.memory_space<vmem>>, vector<2x10xf32>
    %302 = arith.subf %299, %301 : vector<2x10xf32>
    %303 = arith.mulf %302, %302 : vector<2x10xf32>
    %304 = vector.shape_cast %303 : vector<2x10xf32> to vector<1x2x10xf32>
    %cst_166 = arith.constant dense<0.000000e+00> : vector<1xf32>
    %305 = vector.multi_reduction <add>, %304, %cst_166 [1, 2] : vector<1x2x10xf32> to vector<1xf32>
    %306 = vector.shape_cast %305 : vector<1xf32> to vector<1x1x1xf32>
    %307 = vector.extract %306[0, 0, 0] : f32 from vector<1x1x1xf32>
    %308 = vector.broadcast %307 : f32 to vector<1x1xf32>
    %cst_167 = arith.constant 2.000000e+01 : f32
    %309 = vector.broadcast %cst_167 : f32 to vector<1x1xf32>
    %310 = arith.divf %308, %309 : vector<1x1xf32>
    %c0_168 = arith.constant 0 : index
    %c0_169 = arith.constant 0 : index
    %311 = vector.load %arg10[%c0_168, %c0_169] : memref<1x1xf32, #tpu.memory_space<vmem>>, vector<1x1xf32>
    tpu.vector_store %arg10[%c0_168, %c0_169], %310 {strides = array<i32>} : memref<1x1xf32, #tpu.memory_space<vmem>>, vector<1x1xf32>,
    return
  }
}

</mosaic_0001>

<llo_original>
// kernel: squeeze.26
$region0: #{squeeze.26}
  %s0 = inlined_call_operand.vmem [shape: f32[2,24,24], index: 0, kind: input, shape index: {}]
  %s1 = inlined_call_operand.vmem [shape: f32[1,2,576], index: 1, kind: output, shape index: {}]
  $region1: #{squeeze.26} parent=0
    #allocation0 [shape = 'u8[20480]{0}', space=vmem, size = 0x5000, scoped, tag = 'scoped mem for output reshape']
    %s2 = smov 3
    %v3 = vld [vmem:[%s0] ss:$16 sm:%s2]
    %vm4 = vcmask 195584
    %5 = vst.msk [vmem:[#allocation0] ss:$24 sm:$0x3] %vm4, %v3
    %s6 = scalar_lea.vmem %s0, 24
    %s7 = smov 3
    %v8 = vld [vmem:[%s6] ss:$16 sm:%s7]
    %vm9 = vcmask 195584
    %s10 = scalar_lea.vmem [#allocation0], 1
    %11 = vst.msk [vmem:[%s10] ss:$24 sm:$0x3] %vm9, %v8
    %s12 = scalar_lea.vmem %s0, 21
    %s13 = smov 3
    %v14 = vld [vmem:[%s12] ss:$24 sm:%s13]
    %s15 = scalar_lea.vmem %s0, 4294967253
    %s16 = smov 12
    %v17 = vld [vmem:[%s15] ss:$24 sm:%s16]
    %vm18 = vcmask 1043458
    %v19 = vsel %vm18, %v17, %v14
    %s20 = scalar_lea.vmem %s0, 5
    %s21 = smov 3
    %v22 = vld [vmem:[%s20] ss:$24 sm:%s21]
    %s23 = scalar_lea.vmem %s0, 4294967269
    %s24 = smov 12
    %v25 = vld [vmem:[%s23] ss:$24 sm:%s24]
    %vm26 = vcmask 1043458
    %v27 = vsel %vm26, %v25, %v22
    %vm28 = vcmask 64512
    %v29 = vsel %vm28, %v27, %v19
    %30 = vrot.lane.b32.xlu0 %v29, 120
    %v31 = vpop.permute.xlu0 %30
    %vm32 = vcmask 130048
    %s33 = scalar_lea.vmem [#allocation0], 32
    %34 = vst.msk [vmem:[%s33] sm:$0x3] %vm32, %v31
    %s35 = scalar_lea.vmem [#allocation0], 6
    %36 = vst.msk [vmem:[%s35] sm:$0xc] %vm32, %v31
    %vm37 = vcmask 1048512
    %38 = vst.msk [vmem:[#allocation0] sm:$0x3] %vm37, %v31
    %s39 = scalar_lea.vmem [#allocation0], 22
    %40 = vst.msk [vmem:[%s39] sm:$0xc] %vm37, %v31
    %s41 = scalar_lea.vmem %s0, 10
    %s42 = smov 3
    %v43 = vld [vmem:[%s41] ss:$24 sm:%s42]
    %s44 = scalar_lea.vmem %s0, 10
    %s45 = smov 3
    %v46 = vld [vmem:[%s44] ss:$24 sm:%s45]
    %vm47 = vcmask 130048
    %v48 = vsel %vm47, %v46, %v43
    %49 = vrot.lane.b32.xlu0 %v48, 112
    %v50 = vpop.permute.xlu0 %49
    %vm51 = vcmask 64512
    %s52 = scalar_lea.vmem [#allocation0], 16
    %53 = vst.msk [vmem:[%s52] sm:$0x3] %vm51, %v50
    %vm54 = vcmask 1048448
    %s55 = scalar_lea.vmem [#allocation0], 8
    %56 = vst.msk [vmem:[%s55] sm:$0x3] %vm54, %v50
    %s57 = scalar_lea.vmem %s0, 15
    %s58 = smov 3
    %v59 = vld [vmem:[%s57] ss:$24 sm:%s58]
    %60 = vrot.lane.b32.xlu0 %v59, 104
    %v61 = vpop.permute.xlu0 %60
    %vm62 = vcmask 1048384
    %s63 = scalar_lea.vmem [#allocation0], 16
    %64 = vst.msk [vmem:[%s63] sm:$0x3] %vm62, %v61
    %s65 = scalar_lea.vmem %s0, 4
    %s66 = smov 3
    %v67 = vld [vmem:[%s65] ss:$24 sm:%s66]
    %s68 = scalar_lea.vmem %s0, 4294967268
    %s69 = smov 12
    %v70 = vld [vmem:[%s68] ss:$24 sm:%s69]
    %vm71 = vcmask 1043458
    %v72 = vsel %vm71, %v70, %v67
    %73 = vrot.lane.b32.xlu0 %v72, 96
    %v74 = vpop.permute.xlu0 %73
    %vm75 = vcmask 982784
    %76 = vst.msk [vmem:[#allocation0] sm:$0x3] %vm75, %v74
    %s77 = scalar_lea.vmem [#allocation0], 22
    %78 = vst.msk [vmem:[%s77] sm:$0xc] %vm75, %v74
    %s79 = scalar_lea.vmem %s0, 9
    %s80 = smov 3
    %v81 = vld [vmem:[%s79] ss:$24 sm:%s80]
    %82 = vrot.lane.b32.xlu0 %v81, 88
    %v83 = vpop.permute.xlu0 %82
    %vm84 = vcmask 917184
    %s85 = scalar_lea.vmem [#allocation0], 8
    %86 = vst.msk [vmem:[%s85] sm:$0x3] %vm84, %v83
    %s87 = scalar_lea.vmem %s0, 14
    %s88 = smov 3
    %v89 = vld [vmem:[%s87] ss:$24 sm:%s88]
    %90 = vrot.lane.b32.xlu0 %v89, 80
    %v91 = vpop.permute.xlu0 %90
    %vm92 = vcmask 851584
    %s93 = scalar_lea.vmem [#allocation0], 16
    %94 = vst.msk [vmem:[%s93] sm:$0x3] %vm92, %v91
    %s95 = scalar_lea.vmem %s0, 3
    %s96 = smov 3
    %v97 = vld [vmem:[%s95] ss:$24 sm:%s96]
    %s98 = scalar_lea.vmem %s0, 4294967267
    %s99 = smov 12
    %v100 = vld [vmem:[%s98] ss:$24 sm:%s99]
    %vm101 = vcmask 1043458
    %v102 = vsel %vm101, %v100, %v97
    %103 = vrot.lane.b32.xlu0 %v102, 72
    %v104 = vpop.permute.xlu0 %103
    %vm105 = vcmask 785984
    %106 = vst.msk [vmem:[#allocation0] sm:$0x3] %vm105, %v104
    %s107 = scalar_lea.vmem [#allocation0], 22
    %108 = vst.msk [vmem:[%s107] sm:$0xc] %vm105, %v104
    %s109 = scalar_lea.vmem %s0, 8
    %s110 = smov 3
    %v111 = vld [vmem:[%s109] ss:$24 sm:%s110]
    %112 = vrot.lane.b32.xlu0 %v111, 64
    %v113 = vpop.permute.xlu0 %112
    %vm114 = vcmask 720384
    %s115 = scalar_lea.vmem [#allocation0], 8
    %116 = vst.msk [vmem:[%s115] sm:$0x3] %vm114, %v113
    %s117 = scalar_lea.vmem %s0, 13
    %s118 = smov 3
    %v119 = vld [vmem:[%s117] ss:$24 sm:%s118]
    %120 = vrot.lane.b32.xlu0 %v119, 56
    %v121 = vpop.permute.xlu0 %120
    %vm122 = vcmask 654784
    %s123 = scalar_lea.vmem [#allocation0], 16
    %124 = vst.msk [vmem:[%s123] sm:$0x3] %vm122, %v121
    %s125 = scalar_lea.vmem %s0, 2
    %s126 = smov 3
    %v127 = vld [vmem:[%s125] ss:$24 sm:%s126]
    %s128 = scalar_lea.vmem %s0, 4294967266
    %s129 = smov 12
    %v130 = vld [vmem:[%s128] ss:$24 sm:%s129]
    %vm131 = vcmask 1043458
    %v132 = vsel %vm131, %v130, %v127
    %133 = vrot.lane.b32.xlu0 %v132, 48
    %v134 = vpop.permute.xlu0 %133
    %vm135 = vcmask 589184
    %136 = vst.msk [vmem:[#allocation0] sm:$0x3] %vm135, %v134
    %s137 = scalar_lea.vmem [#allocation0], 22
    %138 = vst.msk [vmem:[%s137] sm:$0xc] %vm135, %v134
    %s139 = scalar_lea.vmem %s0, 23
    %s140 = smov 3
    %v141 = vld [vmem:[%s139] ss:$24 sm:%s140]
    %s142 = scalar_lea.vmem %s0, 4294967255
    %s143 = smov 12
    %v144 = vld [vmem:[%s142] ss:$24 sm:%s143]
    %vm145 = vcmask 1043458
    %v146 = vsel %vm145, %v144, %v141
    %147 = vrot.lane.b32.xlu0 %v146, 40
    %v148 = vpop.permute.xlu0 %147
    %vm149 = vcmask 523584
    %s150 = scalar_lea.vmem [#allocation0], 32
    %151 = vst.msk [vmem:[%s150] sm:$0x3] %vm149, %v148
    %s152 = scalar_lea.vmem [#allocation0], 6
    %153 = vst.msk [vmem:[%s152] sm:$0xc] %vm149, %v148
    %s154 = scalar_lea.vmem %s0, 12
    %s155 = smov 3
    %v156 = vld [vmem:[%s154] ss:$24 sm:%s155]
    %157 = vrot.lane.b32.xlu0 %v156, 32
    %v158 = vpop.permute.xlu0 %157
    %vm159 = vcmask 457984
    %s160 = scalar_lea.vmem [#allocation0], 16
    %161 = vst.msk [vmem:[%s160] sm:$0x3] %vm159, %v158
    %s162 = scalar_lea.vmem %s0, 1
    %s163 = smov 3
    %v164 = vld [vmem:[%s162] ss:$24 sm:%s163]
    %s165 = scalar_lea.vmem %s0, 4294967265
    %s166 = smov 12
    %v167 = vld [vmem:[%s165] ss:$24 sm:%s166]
    %vm168 = vcmask 1043458
    %v169 = vsel %vm168, %v167, %v164
    %170 = vrot.lane.b32.xlu0 %v169, 24
    %v171 = vpop.permute.xlu0 %170
    %vm172 = vcmask 392384
    %173 = vst.msk [vmem:[#allocation0] sm:$0x3] %vm172, %v171
    %s174 = scalar_lea.vmem [#allocation0], 22
    %175 = vst.msk [vmem:[%s174] sm:$0xc] %vm172, %v171
    %s176 = scalar_lea.vmem %s0, 22
    %s177 = smov 3
    %v178 = vld [vmem:[%s176] ss:$24 sm:%s177]
    %s179 = scalar_lea.vmem %s0, 4294967254
    %s180 = smov 12
    %v181 = vld [vmem:[%s179] ss:$24 sm:%s180]
    %vm182 = vcmask 1043458
    %v183 = vsel %vm182, %v181, %v178
    %184 = vrot.lane.b32.xlu0 %v183, 16
    %v185 = vpop.permute.xlu0 %184
    %vm186 = vcmask 326784
    %s187 = scalar_lea.vmem [#allocation0], 32
    %188 = vst.msk [vmem:[%s187] sm:$0x3] %vm186, %v185
    %s189 = scalar_lea.vmem [#allocation0], 6
    %190 = vst.msk [vmem:[%s189] sm:$0xc] %vm186, %v185
    %s191 = scalar_lea.vmem %s0, 11
    %s192 = smov 3
    %v193 = vld [vmem:[%s191] ss:$24 sm:%s192]
    %194 = vrot.lane.b32.xlu0 %v193, 8
    %v195 = vpop.permute.xlu0 %194
    %vm196 = vcmask 261184
    %s197 = scalar_lea.vmem [#allocation0], 16
    %198 = vst.msk [vmem:[%s197] sm:$0x3] %vm196, %v195
    %s200 = ssub.s32 4, 1
    %v201 = vld [vmem:[#allocation0] sm:%s200]
    %s203 = ssub.s32 4, 1
    %204 = vst [vmem:[%s1] sm:%s203] %v201
    %s205 = scalar_lea.vmem [#allocation0], 8
    %v206 = vld [vmem:[%s205] sm:%s200]
    %s208 = ssub.s32 4, 1
    %s209 = scalar_lea.vmem %s1, 2
    %210 = vst [vmem:[%s209] sm:%s208] %v206
    %s211 = scalar_lea.vmem [#allocation0], 16
    %v212 = vld [vmem:[%s211] sm:%s200]
    %s214 = ssub.s32 4, 1
    %s215 = scalar_lea.vmem %s1, 4
    %216 = vst [vmem:[%s215] sm:%s214] %v212
    %s217 = scalar_lea.vmem [#allocation0], 24
    %v218 = vld [vmem:[%s217] sm:%s200]
    %s220 = ssub.s32 4, 1
    %s221 = scalar_lea.vmem %s1, 6
    %222 = vst [vmem:[%s221] sm:%s220] %v218
    %s223 = scalar_lea.vmem [#allocation0], 32
    %v224 = vld [vmem:[%s223] sm:%s200]
    %s226 = ssub.s32 4, 1
    %s227 = scalar_lea.vmem %s1, 8
    %228 = vst [vmem:[%s227] sm:%s226] %v224

// kernel: csnn_forward.1
$region0: #{csnn_forward.1}
  #allocation0 [shape = 'u32[]', space=smem, size = 0x4, offset = 0x4, fixed_abs, tag = 'smem constant byte address 0x4 - core index']
  #allocation1 [shape = 'u32[72,128]{1,0:T(1,128)}', space=vmem, size = 0x9000, scoped, tag = 'internal scratch']
  %s0 = inlined_call_operand.vmem [shape: f32[51,576], index: 0, kind: input, shape index: {}]
  %s1 = inlined_call_operand.vmem [shape: f32[8,51], index: 1, kind: input, shape index: {}]
  %s2 = inlined_call_operand.vmem [shape: bf16[576,144], index: 2, kind: input, shape index: {}]
  %s3 = inlined_call_operand.vmem [shape: f32[4,144,512], index: 3, kind: input, shape index: {}]
  %s4 = inlined_call_operand.vmem [shape: f32[1,512], index: 4, kind: input, shape index: {}]
  %s5 = inlined_call_operand.vmem [shape: bf16[512,128], index: 5, kind: input, shape index: {}]
  %s6 = inlined_call_operand.vmem [shape: f32[128,10], index: 6, kind: input, shape index: {}]
  %s7 = inlined_call_operand.vmem [shape: f32[1,10], index: 7, kind: input, shape index: {}]
  %s8 = inlined_call_operand.vmem [shape: f32[2,10], index: 8, kind: input, shape index: {}]
  %s9 = inlined_call_operand.hbm [shape: f32[2,10], index: 9, kind: output, shape index: {0}]
  %s10 = inlined_call_operand.hbm [shape: f32[1,1], index: 10, kind: output, shape index: {1}]
  %11 = xla_tuple %s9, %s10
  %s12 = sld [smem:[#allocation0]]
  $region54: #{csnn_forward.1} parent=0
    _
  %s14 = ssub.s32 1, %s12
  %s15 = scalar_select 0, %s14, %s12
  $region1: #{csnn_forward.1} parent=0
    #allocation2 [shape = 'u8[1024]{0}', space=vmem, size = 0x400, scoped, tag = 'output window, operand 0, single buffered']
    #allocation3 [shape = 's32[1]{0}', space=sflag, size = 0x4, scoped, tag = 'scoped memory for csnn_forward.1']
    #allocation4 [shape = 'u8[512]{0}', space=vmem, size = 0x400, scoped, tag = 'output window, operand 1, single buffered']
    #allocation5 [shape = 's32[1]{0}', space=sflag, size = 0x4, scoped, tag = 'scoped memory for csnn_forward.1']
    %16 = vsyncpa [#allocation3], 0
    %17 = vsyncpa [#allocation5], 0
    // Predicated region
    $region2: #{csnn_forward.1} parent=1 // pred_check
      _
    $region3: #{csnn_forward.1} parent=1 // pred_check_branch
      %19 = sbr.rel (0) target = $region5
    $region4: #{csnn_forward.1} parent=1 // pred_region
      _
    $region5: #{csnn_forward.1} parent=1 // pred_fallthru
      _
    // Predicated region
    $region6: #{csnn_forward.1} parent=1 // pred_check
      _
    $region7: #{csnn_forward.1} parent=1 // pred_check_branch
      %21 = sbr.rel (0) target = $region9
    $region8: #{csnn_forward.1} parent=1 // pred_region
      _
    $region9: #{csnn_forward.1} parent=1 // pred_fallthru
      _
    // Predicated region
    $region10: #{csnn_forward.1} parent=1 // pred_check
      _
    $region11: #{csnn_forward.1} parent=1 // pred_check_branch
      %23 = sbr.rel (0) target = $region13
    $region12: #{csnn_forward.1} parent=1 // pred_region
      _
    $region13: #{csnn_forward.1} parent=1 // pred_fallthru
      _
    // Predicated region
    $region14: #{csnn_forward.1} parent=1 // pred_check
      _
    $region15: #{csnn_forward.1} parent=1 // pred_check_branch
      %25 = sbr.rel (0) target = $region17
    $region16: #{csnn_forward.1} parent=1 // pred_region
      _
    $region17: #{csnn_forward.1} parent=1 // pred_fallthru
      _
    // Predicated region
    $region18: #{csnn_forward.1} parent=1 // pred_check
      _
    $region19: #{csnn_forward.1} parent=1 // pred_check_branch
      %27 = sbr.rel (0) target = $region21
    $region20: #{csnn_forward.1} parent=1 // pred_region
      _
    $region21: #{csnn_forward.1} parent=1 // pred_fallthru
      _
    // Predicated region
    $region22: #{csnn_forward.1} parent=1 // pred_check
      _
    $region23: #{csnn_forward.1} parent=1 // pred_check_branch
      %29 = sbr.rel (0) target = $region25
    $region24: #{csnn_forward.1} parent=1 // pred_region
      _
    $region25: #{csnn_forward.1} parent=1 // pred_fallthru
      _
    // Predicated region
    $region26: #{csnn_forward.1} parent=1 // pred_check
      _
    $region27: #{csnn_forward.1} parent=1 // pred_check_branch
      %31 = sbr.rel (0) target = $region29
    $region28: #{csnn_forward.1} parent=1 // pred_region
      _
    $region29: #{csnn_forward.1} parent=1 // pred_fallthru
      _
    // Predicated region
    $region30: #{csnn_forward.1} parent=1 // pred_check
      _
    $region31: #{csnn_forward.1} parent=1 // pred_check_branch
      %33 = sbr.rel (0) target = $region33
    $region32: #{csnn_forward.1} parent=1 // pred_region
      _
    $region33: #{csnn_forward.1} parent=1 // pred_fallthru
      _
    // Predicated region
    $region34: #{csnn_forward.1} parent=1 // pred_check
      _
    $region35: #{csnn_forward.1} parent=1 // pred_check_branch
      %35 = sbr.rel (0) target = $region37
    $region36: #{csnn_forward.1} parent=1 // pred_region
      _
    $region37: #{csnn_forward.1} parent=1 // pred_fallthru
      _
    %v37 = vld [vmem:[%s1] sm:$0xff]
    %v38 = vld [vmem:[%s0] sm:$0xff]
    %v39 = vld [vmem:[%s0 + $0x8] sm:$0xff]
    %v40 = vld [vmem:[%s0 + $0x10] sm:$0xff]
    %v41 = vld [vmem:[%s0 + $0x18] sm:$0xff]
    %v42 = vld [vmem:[%s0 + $0x20] sm:$0xff]
    %v43 = vld [vmem:[%s0 + $0x28] sm:$0xff]
    %v44 = vld [vmem:[%s0 + $0x30] sm:$0xff]
    %v45 = vld [vmem:[%s0 + $0x38] sm:$0xff]
    %v46 = vld [vmem:[%s0 + $0x40] sm:$0xff]
    %v47 = vld [vmem:[%s0 + $0x48] sm:$0xff]
    %v48 = vld [vmem:[%s0 + $0x50] sm:$0xff]
    %v49 = vld [vmem:[%s0 + $0x58] sm:$0xff]
    %v50 = vld [vmem:[%s0 + $0x60] sm:$0xff]
    %v51 = vld [vmem:[%s0 + $0x68] sm:$0xff]
    %v52 = vld [vmem:[%s0 + $0x70] sm:$0xff]
    %v53 = vld [vmem:[%s0 + $0x78] sm:$0xff]
    %v54 = vld [vmem:[%s0 + $0x80] sm:$0xff]
    %v55 = vld [vmem:[%s0 + $0x88] sm:$0xff]
    %v56 = vld [vmem:[%s0 + $0x90] sm:$0xff]
    %v57 = vld [vmem:[%s0 + $0x98] sm:$0xff]
    %v58 = vld [vmem:[%s0 + $0xa0] sm:$0xff]
    %v59 = vld [vmem:[%s0 + $0xa8] sm:$0xff]
    %v60 = vld [vmem:[%s0 + $0xb0] sm:$0xff]
    %v61 = vld [vmem:[%s0 + $0xb8] sm:$0xff]
    %v62 = vld [vmem:[%s0 + $0xc0] sm:$0xff]
    %v63 = vld [vmem:[%s0 + $0xc8] sm:$0xff]
    %v64 = vld [vmem:[%s0 + $0xd0] sm:$0xff]
    %v65 = vld [vmem:[%s0 + $0xd8] sm:$0xff]
    %v66 = vld [vmem:[%s0 + $0xe0] sm:$0xff]
    %v67 = vld [vmem:[%s0 + $0xe8] sm:$0xff]
    %v68 = vld [vmem:[%s0 + $0xf0] sm:$0x7]
    %v69 = vld [vmem:[%s0 + $0xf8] sm:$0x7]
    %v70 = vld [vmem:[%s0 + $0x100] sm:$0x7]
    %v71 = vld [vmem:[%s0 + $0x108] sm:$0x7]
    %v72 = vld [vmem:[%s0 + $0x110] sm:$0x7]
    %vm73 = vcmask 416768
    %v75 = vsel %vm73, %v37, 0
    %vm77 = vcmask 1042432
    %v79 = vsel %vm77, %v68, 0
    %v82 = vsel %vm77, %v69, 0
    %v85 = vsel %vm77, %v70, 0
    %v88 = vsel %vm77, %v71, 0
    %v91 = vsel %vm77, %v72, 0
    %93 = vmatpush.msra.mxu0 0.0
    %94 = vmatpush.msra.mxu0 0.0
    %95 = vmatpush.msra.mxu0 0.0
    %96 = vmatpush.msra.mxu0 0.0
    %97 = vmatpush.msra.mxu0 0.0
    %98 = vmatpush.msra.mxu0 0.0
    %99 = vmatpush.msra.mxu0 0.0
    %100 = vmatpush.msra.mxu0 0.0
    %101 = vmatpush.msra.mxu0 0.0
    %102 = vmatpush.msra.mxu0 %v79
    %103 = vmatpush.msra.mxu0 %v63
    %104 = vmatpush.msra.mxu0 %v58
    %105 = vmatpush.msra.mxu0 %v53
    %106 = vmatpush.msra.mxu0 %v48
    %107 = vmatpush.msra.mxu0 %v43
    %108 = vmatpush.msra.mxu0 %v38
    %109 = vmatmul.f32.gmra.mxu0 %v75
    %v110 = vpop.f32.mrf.mxu0
    %v111 = vadd.f32 0.0, %v110
    %112 = vdwg.mxu0
    %113 = vmatpush.msra.mxu0 0.0
    %114 = vmatpush.msra.mxu0 0.0
    %115 = vmatpush.msra.mxu0 0.0
    %116 = vmatpush.msra.mxu0 0.0
    %117 = vmatpush.msra.mxu0 0.0
    %118 = vmatpush.msra.mxu0 0.0
    %119 = vmatpush.msra.mxu0 0.0
    %120 = vmatpush.msra.mxu0 0.0
    %121 = vmatpush.msra.mxu0 0.0
    %122 = vmatpush.msra.mxu0 %v82
    %123 = vmatpush.msra.mxu0 %v64
    %124 = vmatpush.msra.mxu0 %v59
    %125 = vmatpush.msra.mxu0 %v54
    %126 = vmatpush.msra.mxu0 %v49
    %127 = vmatpush.msra.mxu0 %v44
    %128 = vmatpush.msra.mxu0 %v39
    %129 = vmatmul.f32.gmra.mxu0 %v75
    %v130 = vpop.f32.mrf.mxu0
    %v131 = vadd.f32 0.0, %v130
    %132 = vdwg.mxu0
    %133 = vmatpush.msra.mxu0 0.0
    %134 = vmatpush.msra.mxu0 0.0
    %135 = vmatpush.msra.mxu0 0.0
    %136 = vmatpush.msra.mxu0 0.0
    %137 = vmatpush.msra.mxu0 0.0
    %138 = vmatpush.msra.mxu0 0.0
    %139 = vmatpush.msra.mxu0 0.0
    %140 = vmatpush.msra.mxu0 0.0
    %141 = vmatpush.msra.mxu0 0.0
    %142 = vmatpush.msra.mxu0 %v85
    %143 = vmatpush.msra.mxu0 %v65
    %144 = vmatpush.msra.mxu0 %v60
    %145 = vmatpush.msra.mxu0 %v55
    %146 = vmatpush.msra.mxu0 %v50
    %147 = vmatpush.msra.mxu0 %v45
    %148 = vmatpush.msra.mxu0 %v40
    %149 = vmatmul.f32.gmra.mxu0 %v75
    %v150 = vpop.f32.mrf.mxu0
    %v151 = vadd.f32 0.0, %v150
    %152 = vdwg.mxu0
    %153 = vmatpush.msra.mxu0 0.0
    %154 = vmatpush.msra.mxu0 0.0
    %155 = vmatpush.msra.mxu0 0.0
    %156 = vmatpush.msra.mxu0 0.0
    %157 = vmatpush.msra.mxu0 0.0
    %158 = vmatpush.msra.mxu0 0.0
    %159 = vmatpush.msra.mxu0 0.0
    %160 = vmatpush.msra.mxu0 0.0
    %161 = vmatpush.msra.mxu0 0.0
    %162 = vmatpush.msra.mxu0 %v88
    %163 = vmatpush.msra.mxu0 %v66
    %164 = vmatpush.msra.mxu0 %v61
    %165 = vmatpush.msra.mxu0 %v56
    %166 = vmatpush.msra.mxu0 %v51
    %167 = vmatpush.msra.mxu0 %v46
    %168 = vmatpush.msra.mxu0 %v41
    %169 = vmatmul.f32.gmra.mxu0 %v75
    %v170 = vpop.f32.mrf.mxu0
    %v171 = vadd.f32 0.0, %v170
    %172 = vdwg.mxu0
    %173 = vmatpush.msra.mxu0 0.0
    %174 = vmatpush.msra.mxu0 0.0
    %175 = vmatpush.msra.mxu0 0.0
    %176 = vmatpush.msra.mxu0 0.0
    %177 = vmatpush.msra.mxu0 0.0
    %178 = vmatpush.msra.mxu0 0.0
    %179 = vmatpush.msra.mxu0 0.0
    %180 = vmatpush.msra.mxu0 0.0
    %181 = vmatpush.msra.mxu0 0.0
    %182 = vmatpush.msra.mxu0 %v91
    %183 = vmatpush.msra.mxu0 %v67
    %184 = vmatpush.msra.mxu0 %v62
    %185 = vmatpush.msra.mxu0 %v57
    %186 = vmatpush.msra.mxu0 %v52
    %187 = vmatpush.msra.mxu0 %v47
    %188 = vmatpush.msra.mxu0 %v42
    %189 = vmatmul.f32.gmra.mxu0 %v75
    %v190 = vpop.f32.mrf.mxu0
    %v191 = vadd.f32 0.0, %v190
    %192 = vdwg.mxu0
    %v193 = vmul.f32 %v111, 0.5
    %v194 = vmul.f32 %v131, 0.5
    %v195 = vmul.f32 %v151, 0.5
    %v196 = vmul.f32 %v171, 0.5
    %v197 = vmul.f32 %v191, 0.5
    %v198 = vadd.f32 %v193, 0.0
    %v199 = vadd.f32 %v194, 0.0
    %v200 = vadd.f32 %v195, 0.0
    %v201 = vadd.f32 %v196, 0.0
    %v202 = vadd.f32 %v197, 0.0
    %vm203 = vcmp.ge.f32.partialorder %v198, 1.0
    %vm204 = vcmp.ge.f32.partialorder %v199, 1.0
    %vm205 = vcmp.ge.f32.partialorder %v200, 1.0
    %vm206 = vcmp.ge.f32.partialorder %v201, 1.0
    %vm207 = vcmp.ge.f32.partialorder %v202, 1.0
    %v208 = vsel %vm203, 1, 0
    %v209 = vsel %vm204, 1, 0
    %v210 = vsel %vm205, 1, 0
    %v211 = vsel %vm206, 1, 0
    %v212 = vsel %vm207, 1, 0
    %v213 = vcvt.s32.f32 %v208
    %v214 = vcvt.s32.f32 %v209
    %v215 = vcvt.s32.f32 %v210
    %v216 = vcvt.s32.f32 %v211
    %v217 = vcvt.s32.f32 %v212
    %v218 = vsub.f32 1.0, %v213
    %v219 = vsub.f32 1.0, %v214
    %v220 = vsub.f32 1.0, %v215
    %v221 = vsub.f32 1.0, %v216
    %v222 = vsub.f32 1.0, %v217
    %v223 = vmul.f32 %v198, %v218
    %v224 = vmul.f32 %v199, %v219
    %v225 = vmul.f32 %v200, %v220
    %v226 = vmul.f32 %v201, %v221
    %v227 = vmul.f32 %v202, %v222
    %v228 = vpack.c.bf16 %v213, %v213
    %v229 = vpack.c.bf16 %v214, %v214
    %v230 = vpack.c.bf16 %v215, %v215
    %v231 = vpack.c.bf16 %v216, %v216
    %v232 = vpack.c.bf16 %v217, %v217
    %v233 = vld [vmem:[%s2] sm:$0xff]
    %v234 = vld [vmem:[%s2 + $0x8] sm:$0xff]
    %v235 = vld [vmem:[%s2 + $0x10] sm:$0xff]
    %v236 = vld [vmem:[%s2 + $0x18] sm:$0xff]
    %v237 = vld [vmem:[%s2 + $0x20] sm:$0xff]
    %v238 = vld [vmem:[%s2 + $0x28] sm:$0xff]
    %v239 = vld [vmem:[%s2 + $0x30] sm:$0xff]
    %v240 = vld [vmem:[%s2 + $0x38] sm:$0xff]
    %v241 = vld [vmem:[%s2 + $0x40] sm:$0xff]
    %v242 = vld [vmem:[%s2 + $0x48] sm:$0xff]
    %v243 = vld [vmem:[%s2 + $0x50] sm:$0xff]
    %v244 = vld [vmem:[%s2 + $0x58] sm:$0xff]
    %v245 = vld [vmem:[%s2 + $0x60] sm:$0xff]
    %v246 = vld [vmem:[%s2 + $0x68] sm:$0xff]
    %v247 = vld [vmem:[%s2 + $0x70] sm:$0xff]
    %v248 = vld [vmem:[%s2 + $0x78] sm:$0xff]
    %v249 = vld [vmem:[%s2 + $0x80] sm:$0xff]
    %v250 = vld [vmem:[%s2 + $0x88] sm:$0xff]
    %v251 = vld [vmem:[%s2 + $0x90] sm:$0xff]
    %v252 = vld [vmem:[%s2 + $0x98] sm:$0xff]
    %v253 = vld [vmem:[%s2 + $0xa0] sm:$0xff]
    %v254 = vld [vmem:[%s2 + $0xa8] sm:$0xff]
    %v255 = vld [vmem:[%s2 + $0xb0] sm:$0xff]
    %v256 = vld [vmem:[%s2 + $0xb8] sm:$0xff]
    %v257 = vld [vmem:[%s2 + $0xc0] sm:$0xff]
    %v258 = vld [vmem:[%s2 + $0xc8] sm:$0xff]
    %v259 = vld [vmem:[%s2 + $0xd0] sm:$0xff]
    %v260 = vld [vmem:[%s2 + $0xd8] sm:$0xff]
    %v261 = vld [vmem:[%s2 + $0xe0] sm:$0xff]
    %v262 = vld [vmem:[%s2 + $0xe8] sm:$0xff]
    %v263 = vld [vmem:[%s2 + $0xf0] sm:$0xff]
    %v264 = vld [vmem:[%s2 + $0xf8] sm:$0xff]
    %v265 = vld [vmem:[%s2 + $0x100] sm:$0xff]
    %v266 = vld [vmem:[%s2 + $0x108] sm:$0xff]
    %v267 = vld [vmem:[%s2 + $0x110] sm:$0xff]
    %v268 = vld [vmem:[%s2 + $0x118] sm:$0xff]
    %v269 = vld [vmem:[%s2 + $0x120] sm:$0xff]
    %v270 = vld [vmem:[%s2 + $0x128] sm:$0xff]
    %v271 = vld [vmem:[%s2 + $0x130] sm:$0xff]
    %v272 = vld [vmem:[%s2 + $0x138] sm:$0xff]
    %v273 = vld [vmem:[%s2 + $0x140] sm:$0xff]
    %v274 = vld [vmem:[%s2 + $0x148] sm:$0xff]
    %v275 = vld [vmem:[%s2 + $0x150] sm:$0xff]
    %v276 = vld [vmem:[%s2 + $0x158] sm:$0xff]
    %v277 = vld [vmem:[%s2 + $0x160] sm:$0xff]
    %v278 = vld [vmem:[%s2 + $0x168] sm:$0xff]
    %v279 = vld [vmem:[%s2 + $0x170] sm:$0xff]
    %v280 = vld [vmem:[%s2 + $0x178] sm:$0xff]
    %v281 = vld [vmem:[%s2 + $0x180] sm:$0xff]
    %v282 = vld [vmem:[%s2 + $0x188] sm:$0xff]
    %v283 = vld [vmem:[%s2 + $0x190] sm:$0xff]
    %v284 = vld [vmem:[%s2 + $0x198] sm:$0xff]
    %v285 = vld [vmem:[%s2 + $0x1a0] sm:$0xff]
    %v286 = vld [vmem:[%s2 + $0x1a8] sm:$0xff]
    %v287 = vld [vmem:[%s2 + $0x1b0] sm:$0xff]
    %v288 = vld [vmem:[%s2 + $0x1b8] sm:$0xff]
    %v289 = vld [vmem:[%s2 + $0x1c0] sm:$0xff]
    %v290 = vld [vmem:[%s2 + $0x1c8] sm:$0xff]
    %v291 = vld [vmem:[%s2 + $0x1d0] sm:$0xff]
    %v292 = vld [vmem:[%s2 + $0x1d8] sm:$0xff]
    %v293 = vld [vmem:[%s2 + $0x1e0] sm:$0xff]
    %v294 = vld [vmem:[%s2 + $0x1e8] sm:$0xff]
    %v295 = vld [vmem:[%s2 + $0x1f0] sm:$0xff]
    %v296 = vld [vmem:[%s2 + $0x1f8] sm:$0xff]
    %v297 = vld [vmem:[%s2 + $0x200] sm:$0xff]
    %v298 = vld [vmem:[%s2 + $0x208] sm:$0xff]
    %v299 = vld [vmem:[%s2 + $0x210] sm:$0xff]
    %v300 = vld [vmem:[%s2 + $0x218] sm:$0xff]
    %v301 = vld [vmem:[%s2 + $0x220] sm:$0xff]
    %v302 = vld [vmem:[%s2 + $0x228] sm:$0xff]
    %v303 = vld [vmem:[%s2 + $0x230] sm:$0xff]
    %v304 = vld [vmem:[%s2 + $0x238] sm:$0xff]
    %v377 = vunpack.c.l.b16 %v233
    %v378 = vunpack.c.h.b16 %v233
    %v379 = vunpack.c.l.b16 %v234
    %v380 = vunpack.c.h.b16 %v234
    %v381 = vunpack.c.l.b16 %v235
    %v382 = vunpack.c.h.b16 %v235
    %v383 = vunpack.c.l.b16 %v236
    %v384 = vunpack.c.h.b16 %v236
    %v385 = vunpack.c.l.b16 %v237
    %v386 = vunpack.c.h.b16 %v237
    %v387 = vunpack.c.l.b16 %v238
    %v388 = vunpack.c.h.b16 %v238
    %v389 = vunpack.c.l.b16 %v239
    %v390 = vunpack.c.h.b16 %v239
    %v391 = vunpack.c.l.b16 %v240
    %v392 = vunpack.c.h.b16 %v240
    %v393 = vunpack.c.l.b16 %v241
    %v394 = vunpack.c.h.b16 %v241
    %v395 = vunpack.c.l.b16 %v242
    %v396 = vunpack.c.h.b16 %v242
    %v397 = vunpack.c.l.b16 %v243
    %v398 = vunpack.c.h.b16 %v243
    %v399 = vunpack.c.l.b16 %v244
    %v400 = vunpack.c.h.b16 %v244
    %v401 = vunpack.c.l.b16 %v245
    %v402 = vunpack.c.h.b16 %v245
    %v403 = vunpack.c.l.b16 %v246
    %v404 = vunpack.c.h.b16 %v246
    %v405 = vunpack.c.l.b16 %v247
    %v406 = vunpack.c.h.b16 %v247
    %v407 = vunpack.c.l.b16 %v248
    %v408 = vunpack.c.h.b16 %v248
    %v409 = vunpack.c.l.b16 %v249
    %v410 = vunpack.c.h.b16 %v249
    %v411 = vunpack.c.l.b16 %v250
    %v412 = vunpack.c.h.b16 %v250
    %v413 = vunpack.c.l.b16 %v251
    %v414 = vunpack.c.h.b16 %v251
    %v415 = vunpack.c.l.b16 %v252
    %v416 = vunpack.c.h.b16 %v252
    %v417 = vunpack.c.l.b16 %v253
    %v418 = vunpack.c.h.b16 %v253
    %v419 = vunpack.c.l.b16 %v254
    %v420 = vunpack.c.h.b16 %v254
    %v421 = vunpack.c.l.b16 %v255
    %v422 = vunpack.c.h.b16 %v255
    %v423 = vunpack.c.l.b16 %v256
    %v424 = vunpack.c.h.b16 %v256
    %v425 = vunpack.c.l.b16 %v257
    %v426 = vunpack.c.h.b16 %v257
    %v427 = vunpack.c.l.b16 %v258
    %v428 = vunpack.c.h.b16 %v258
    %v429 = vunpack.c.l.b16 %v259
    %v430 = vunpack.c.h.b16 %v259
    %v431 = vunpack.c.l.b16 %v260
    %v432 = vunpack.c.h.b16 %v260
    %v433 = vunpack.c.l.b16 %v261
    %v434 = vunpack.c.h.b16 %v261
    %v435 = vunpack.c.l.b16 %v262
    %v436 = vunpack.c.h.b16 %v262
    %v437 = vunpack.c.l.b16 %v263
    %v438 = vunpack.c.h.b16 %v263
    %v439 = vunpack.c.l.b16 %v264
    %v440 = vunpack.c.h.b16 %v264
    %v441 = vunpack.c.l.b16 %v265
    %v442 = vunpack.c.h.b16 %v265
    %v443 = vunpack.c.l.b16 %v266
    %v444 = vunpack.c.h.b16 %v266
    %v445 = vunpack.c.l.b16 %v267
    %v446 = vunpack.c.h.b16 %v267
    %v447 = vunpack.c.l.b16 %v268
    %v448 = vunpack.c.h.b16 %v268
    %v449 = vunpack.c.l.b16 %v269
    %v450 = vunpack.c.h.b16 %v269
    %v451 = vunpack.c.l.b16 %v270
    %v452 = vunpack.c.h.b16 %v270
    %v453 = vunpack.c.l.b16 %v271
    %v454 = vunpack.c.h.b16 %v271
    %v455 = vunpack.c.l.b16 %v272
    %v456 = vunpack.c.h.b16 %v272
    %v457 = vunpack.c.l.b16 %v273
    %v458 = vunpack.c.h.b16 %v273
    %v459 = vunpack.c.l.b16 %v274
    %v460 = vunpack.c.h.b16 %v274
    %v461 = vunpack.c.l.b16 %v275
    %v462 = vunpack.c.h.b16 %v275
    %v463 = vunpack.c.l.b16 %v276
    %v464 = vunpack.c.h.b16 %v276
    %v465 = vunpack.c.l.b16 %v277
    %v466 = vunpack.c.h.b16 %v277
    %v467 = vunpack.c.l.b16 %v278
    %v468 = vunpack.c.h.b16 %v278
    %v469 = vunpack.c.l.b16 %v279
    %v470 = vunpack.c.h.b16 %v279
    %v471 = vunpack.c.l.b16 %v280
    %v472 = vunpack.c.h.b16 %v280
    %v473 = vunpack.c.l.b16 %v281
    %v474 = vunpack.c.h.b16 %v281
    %v475 = vunpack.c.l.b16 %v282
    %v476 = vunpack.c.h.b16 %v282
    %v477 = vunpack.c.l.b16 %v283
    %v478 = vunpack.c.h.b16 %v283
    %v479 = vunpack.c.l.b16 %v284
    %v480 = vunpack.c.h.b16 %v284
    %v481 = vunpack.c.l.b16 %v285
    %v482 = vunpack.c.h.b16 %v285
    %v483 = vunpack.c.l.b16 %v286
    %v484 = vunpack.c.h.b16 %v286
    %v485 = vunpack.c.l.b16 %v287
    %v486 = vunpack.c.h.b16 %v287
    %v487 = vunpack.c.l.b16 %v288
    %v488 = vunpack.c.h.b16 %v288
    %v489 = vunpack.c.l.b16 %v289
    %v490 = vunpack.c.h.b16 %v289
    %v491 = vunpack.c.l.b16 %v290
    %v492 = vunpack.c.h.b16 %v290
    %v493 = vunpack.c.l.b16 %v291
    %v494 = vunpack.c.h.b16 %v291
    %v495 = vunpack.c.l.b16 %v292
    %v496 = vunpack.c.h.b16 %v292
    %v497 = vunpack.c.l.b16 %v293
    %v498 = vunpack.c.h.b16 %v293
    %v499 = vunpack.c.l.b16 %v294
    %v500 = vunpack.c.h.b16 %v294
    %v501 = vunpack.c.l.b16 %v295
    %v502 = vunpack.c.h.b16 %v295
    %v503 = vunpack.c.l.b16 %v296
    %v504 = vunpack.c.h.b16 %v296
    %v505 = vunpack.c.l.b16 %v297
    %v506 = vunpack.c.h.b16 %v297
    %v507 = vunpack.c.l.b16 %v298
    %v508 = vunpack.c.h.b16 %v298
    %v509 = vunpack.c.l.b16 %v299
    %v510 = vunpack.c.h.b16 %v299
    %v511 = vunpack.c.l.b16 %v300
    %v512 = vunpack.c.h.b16 %v300
    %v513 = vunpack.c.l.b16 %v301
    %v514 = vunpack.c.h.b16 %v301
    %v515 = vunpack.c.l.b16 %v302
    %v516 = vunpack.c.h.b16 %v302
    %v517 = vunpack.c.l.b16 %v303
    %v518 = vunpack.c.h.b16 %v303
    %v519 = vunpack.c.l.b16 %v304
    %v520 = vunpack.c.h.b16 %v304
    %v521 = vpack.c.b16 %v379, %v377
    %v522 = vpack.c.b16 %v380, %v378
    %v523 = vpack.c.b16 %v383, %v381
    %v524 = vpack.c.b16 %v384, %v382
    %v525 = vpack.c.b16 %v387, %v385
    %v526 = vpack.c.b16 %v388, %v386
    %v527 = vpack.c.b16 %v391, %v389
    %v528 = vpack.c.b16 %v392, %v390
    %v529 = vpack.c.b16 %v395, %v393
    %v530 = vpack.c.b16 %v396, %v394
    %v531 = vpack.c.b16 %v399, %v397
    %v532 = vpack.c.b16 %v400, %v398
    %v533 = vpack.c.b16 %v403, %v401
    %v534 = vpack.c.b16 %v404, %v402
    %v535 = vpack.c.b16 %v407, %v405
    %v536 = vpack.c.b16 %v408, %v406
    %v537 = vpack.c.b16 %v411, %v409
    %v538 = vpack.c.b16 %v412, %v410
    %v539 = vpack.c.b16 %v415, %v413
    %v540 = vpack.c.b16 %v416, %v414
    %v541 = vpack.c.b16 %v419, %v417
    %v542 = vpack.c.b16 %v420, %v418
    %v543 = vpack.c.b16 %v423, %v421
    %v544 = vpack.c.b16 %v424, %v422
    %v545 = vpack.c.b16 %v427, %v425
    %v546 = vpack.c.b16 %v428, %v426
    %v547 = vpack.c.b16 %v431, %v429
    %v548 = vpack.c.b16 %v432, %v430
    %v549 = vpack.c.b16 %v435, %v433
    %v550 = vpack.c.b16 %v436, %v434
    %v551 = vpack.c.b16 %v439, %v437
    %v552 = vpack.c.b16 %v440, %v438
    %v553 = vpack.c.b16 %v443, %v441
    %v554 = vpack.c.b16 %v444, %v442
    %v555 = vpack.c.b16 %v447, %v445
    %v556 = vpack.c.b16 %v448, %v446
    %v557 = vpack.c.b16 %v451, %v449
    %v558 = vpack.c.b16 %v452, %v450
    %v559 = vpack.c.b16 %v455, %v453
    %v560 = vpack.c.b16 %v456, %v454
    %v561 = vpack.c.b16 %v459, %v457
    %v562 = vpack.c.b16 %v460, %v458
    %v563 = vpack.c.b16 %v463, %v461
    %v564 = vpack.c.b16 %v464, %v462
    %v565 = vpack.c.b16 %v467, %v465
    %v566 = vpack.c.b16 %v468, %v466
    %v567 = vpack.c.b16 %v471, %v469
    %v568 = vpack.c.b16 %v472, %v470
    %v569 = vpack.c.b16 %v475, %v473
    %v570 = vpack.c.b16 %v476, %v474
    %v571 = vpack.c.b16 %v479, %v477
    %v572 = vpack.c.b16 %v480, %v478
    %v573 = vpack.c.b16 %v483, %v481
    %v574 = vpack.c.b16 %v484, %v482
    %v575 = vpack.c.b16 %v487, %v485
    %v576 = vpack.c.b16 %v488, %v486
    %v577 = vpack.c.b16 %v491, %v489
    %v578 = vpack.c.b16 %v492, %v490
    %v579 = vpack.c.b16 %v495, %v493
    %v580 = vpack.c.b16 %v496, %v494
    %v581 = vpack.c.b16 %v499, %v497
    %v582 = vpack.c.b16 %v500, %v498
    %v583 = vpack.c.b16 %v503, %v501
    %v584 = vpack.c.b16 %v504, %v502
    %v585 = vpack.c.b16 %v507, %v505
    %v586 = vpack.c.b16 %v508, %v506
    %v587 = vpack.c.b16 %v511, %v509
    %v588 = vpack.c.b16 %v512, %v510
    %v589 = vpack.c.b16 %v515, %v513
    %v590 = vpack.c.b16 %v516, %v514
    %v591 = vpack.c.b16 %v519, %v517
    %v592 = vpack.c.b16 %v520, %v518
    %vm665 = vcmask 523264
    %v667 = vsel %vm665, %v232, 0
    %669 = vmatpush.bf16.msra.mxu0 %v535
    %670 = vmatpush.bf16.msra.mxu0 %v533
    %671 = vmatpush.bf16.msra.mxu0 %v531
    %672 = vmatpush.bf16.msra.mxu0 %v529
    %673 = vmatpush.bf16.msra.mxu0 %v527
    %674 = vmatpush.bf16.msra.mxu0 %v525
    %675 = vmatpush.bf16.msra.mxu0 %v523
    %676 = vmatpush.bf16.msra.mxu0 %v521
    %677 = vmatmul.bf16.gmra.mxu0 %v228
    %v678 = vpop.f32.mrf.mxu0
    %v679 = vadd.f32 0.0, %v678
    %v680 = vpop.f32.mrf.mxu0
    %681 = vdwg.mxu0
    %682 = vmatpush.bf16.msra.mxu0 %v551
    %683 = vmatpush.bf16.msra.mxu0 %v549
    %684 = vmatpush.bf16.msra.mxu0 %v547
    %685 = vmatpush.bf16.msra.mxu0 %v545
    %686 = vmatpush.bf16.msra.mxu0 %v543
    %687 = vmatpush.bf16.msra.mxu0 %v541
    %688 = vmatpush.bf16.msra.mxu0 %v539
    %689 = vmatpush.bf16.msra.mxu0 %v537
    %690 = vmatmul.bf16.gmra.mxu0 %v229
    %v691 = vpop.f32.mrf.mxu0
    %v692 = vadd.f32 %v679, %v691
    %v693 = vpop.f32.mrf.mxu0
    %694 = vdwg.mxu0
    %695 = vmatpush.bf16.msra.mxu0 %v567
    %696 = vmatpush.bf16.msra.mxu0 %v565
    %697 = vmatpush.bf16.msra.mxu0 %v563
    %698 = vmatpush.bf16.msra.mxu0 %v561
    %699 = vmatpush.bf16.msra.mxu0 %v559
    %700 = vmatpush.bf16.msra.mxu0 %v557
    %701 = vmatpush.bf16.msra.mxu0 %v555
    %702 = vmatpush.bf16.msra.mxu0 %v553
    %703 = vmatmul.bf16.gmra.mxu0 %v230
    %v704 = vpop.f32.mrf.mxu0
    %v705 = vadd.f32 %v692, %v704
    %v706 = vpop.f32.mrf.mxu0
    %707 = vdwg.mxu0
    %708 = vmatpush.bf16.msra.mxu0 %v583
    %709 = vmatpush.bf16.msra.mxu0 %v581
    %710 = vmatpush.bf16.msra.mxu0 %v579
    %711 = vmatpush.bf16.msra.mxu0 %v577
    %712 = vmatpush.bf16.msra.mxu0 %v575
    %713 = vmatpush.bf16.msra.mxu0 %v573
    %714 = vmatpush.bf16.msra.mxu0 %v571
    %715 = vmatpush.bf16.msra.mxu0 %v569
    %716 = vmatmul.bf16.gmra.mxu0 %v231
    %v717 = vpop.f32.mrf.mxu0
    %v718 = vadd.f32 %v705, %v717
    %v719 = vpop.f32.mrf.mxu0
    %720 = vdwg.mxu0
    %721 = vmatpush.bf16.msra.mxu0 0
    %722 = vmatpush.bf16.msra.mxu0 0
    %723 = vmatpush.bf16.msra.mxu0 0
    %724 = vmatpush.bf16.msra.mxu0 0
    %725 = vmatpush.bf16.msra.mxu0 %v591
    %726 = vmatpush.bf16.msra.mxu0 %v589
    %727 = vmatpush.bf16.msra.mxu0 %v587
    %728 = vmatpush.bf16.msra.mxu0 %v585
    %729 = vmatmul.bf16.gmra.mxu0 %v667
    %v730 = vpop.f32.mrf.mxu0
    %v731 = vadd.f32 %v718, %v730
    %v732 = vpop.f32.mrf.mxu0
    %733 = vdwg.mxu0
    %734 = vmatpush.bf16.msra.mxu0 %v536
    %735 = vmatpush.bf16.msra.mxu0 %v534
    %736 = vmatpush.bf16.msra.mxu0 %v532
    %737 = vmatpush.bf16.msra.mxu0 %v530
    %738 = vmatpush.bf16.msra.mxu0 %v528
    %739 = vmatpush.bf16.msra.mxu0 %v526
    %740 = vmatpush.bf16.msra.mxu0 %v524
    %741 = vmatpush.bf16.msra.mxu0 %v522
    %742 = vmatmul.bf16.gmra.mxu0 %v228
    %v743 = vpop.f32.mrf.mxu0
    %v744 = vadd.f32 0.0, %v743
    %v745 = vpop.f32.mrf.mxu0
    %746 = vdwg.mxu0
    %747 = vmatpush.bf16.msra.mxu0 %v552
    %748 = vmatpush.bf16.msra.mxu0 %v550
    %749 = vmatpush.bf16.msra.mxu0 %v548
    %750 = vmatpush.bf16.msra.mxu0 %v546
    %751 = vmatpush.bf16.msra.mxu0 %v544
    %752 = vmatpush.bf16.msra.mxu0 %v542
    %753 = vmatpush.bf16.msra.mxu0 %v540
    %754 = vmatpush.bf16.msra.mxu0 %v538
    %755 = vmatmul.bf16.gmra.mxu0 %v229
    %v756 = vpop.f32.mrf.mxu0
    %v757 = vadd.f32 %v744, %v756
    %v758 = vpop.f32.mrf.mxu0
    %759 = vdwg.mxu0
    %760 = vmatpush.bf16.msra.mxu0 %v568
    %761 = vmatpush.bf16.msra.mxu0 %v566
    %762 = vmatpush.bf16.msra.mxu0 %v564
    %763 = vmatpush.bf16.msra.mxu0 %v562
    %764 = vmatpush.bf16.msra.mxu0 %v560
    %765 = vmatpush.bf16.msra.mxu0 %v558
    %766 = vmatpush.bf16.msra.mxu0 %v556
    %767 = vmatpush.bf16.msra.mxu0 %v554
    %768 = vmatmul.bf16.gmra.mxu0 %v230
    %v769 = vpop.f32.mrf.mxu0
    %v770 = vadd.f32 %v757, %v769
    %v771 = vpop.f32.mrf.mxu0
    %772 = vdwg.mxu0
    %773 = vmatpush.bf16.msra.mxu0 %v584
    %774 = vmatpush.bf16.msra.mxu0 %v582
    %775 = vmatpush.bf16.msra.mxu0 %v580
    %776 = vmatpush.bf16.msra.mxu0 %v578
    %777 = vmatpush.bf16.msra.mxu0 %v576
    %778 = vmatpush.bf16.msra.mxu0 %v574
    %779 = vmatpush.bf16.msra.mxu0 %v572
    %780 = vmatpush.bf16.msra.mxu0 %v570
    %781 = vmatmul.bf16.gmra.mxu0 %v231
    %v782 = vpop.f32.mrf.mxu0
    %v783 = vadd.f32 %v770, %v782
    %v784 = vpop.f32.mrf.mxu0
    %785 = vdwg.mxu0
    %786 = vmatpush.bf16.msra.mxu0 0
    %787 = vmatpush.bf16.msra.mxu0 0
    %788 = vmatpush.bf16.msra.mxu0 0
    %789 = vmatpush.bf16.msra.mxu0 0
    %790 = vmatpush.bf16.msra.mxu0 %v592
    %791 = vmatpush.bf16.msra.mxu0 %v590
    %792 = vmatpush.bf16.msra.mxu0 %v588
    %793 = vmatpush.bf16.msra.mxu0 %v586
    %794 = vmatmul.bf16.gmra.mxu0 %v667
    %v795 = vpop.f32.mrf.mxu0
    %v796 = vadd.f32 %v783, %v795
    %v797 = vpop.f32.mrf.mxu0
    %798 = vdwg.mxu0
    %vm799 = vcmp.gt.f32.partialorder %v731, 0.5
    %vm800 = vcmp.gt.f32.partialorder %v796, 0.5
    %v801 = vsel %vm799, 1, 0
    %v802 = vsel %vm800, 1, 0
    %v803 = vcvt.s32.f32 %v801
    %v804 = vcvt.s32.f32 %v802
    %v805 = vld [vmem:[%s4] sm:$0xf]
    %v806 = vld [vmem:[%s3] sm:$0xff]
    %v807 = vld [vmem:[%s3 + $0x8] sm:$0xff]
    %v808 = vld [vmem:[%s3 + $0x10] sm:$0xff]
    %v809 = vld [vmem:[%s3 + $0x18] sm:$0xff]
    %v810 = vld [vmem:[%s3 + $0x20] sm:$0xff]
    %v811 = vld [vmem:[%s3 + $0x28] sm:$0xff]
    %v812 = vld [vmem:[%s3 + $0x30] sm:$0xff]
    %v813 = vld [vmem:[%s3 + $0x38] sm:$0xff]
    %v814 = vld [vmem:[%s3 + $0x40] sm:$0xff]
    %v815 = vld [vmem:[%s3 + $0x48] sm:$0xff]
    %v816 = vld [vmem:[%s3 + $0x50] sm:$0xff]
    %v817 = vld [vmem:[%s3 + $0x58] sm:$0xff]
    %v818 = vld [vmem:[%s3 + $0x60] sm:$0xff]
    %v819 = vld [vmem:[%s3 + $0x68] sm:$0xff]
    %v820 = vld [vmem:[%s3 + $0x70] sm:$0xff]
    %v821 = vld [vmem:[%s3 + $0x78] sm:$0xff]
    %v822 = vld [vmem:[%s3 + $0x80] sm:$0xff]
    %v823 = vld [vmem:[%s3 + $0x88] sm:$0xff]
    %v824 = vld [vmem:[%s3 + $0x90] sm:$0xff]
    %v825 = vld [vmem:[%s3 + $0x98] sm:$0xff]
    %v826 = vld [vmem:[%s3 + $0xa0] sm:$0xff]
    %v827 = vld [vmem:[%s3 + $0xa8] sm:$0xff]
    %v828 = vld [vmem:[%s3 + $0xb0] sm:$0xff]
    %v829 = vld [vmem:[%s3 + $0xb8] sm:$0xff]
    %v830 = vld [vmem:[%s3 + $0xc0] sm:$0xff]
    %v831 = vld [vmem:[%s3 + $0xc8] sm:$0xff]
    %v832 = vld [vmem:[%s3 + $0xd0] sm:$0xff]
    %v833 = vld [vmem:[%s3 + $0xd8] sm:$0xff]
    %v834 = vld [vmem:[%s3 + $0xe0] sm:$0xff]
    %v835 = vld [vmem:[%s3 + $0xe8] sm:$0xff]
    %v836 = vld [vmem:[%s3 + $0xf0] sm:$0xff]
    %v837 = vld [vmem:[%s3 + $0xf8] sm:$0xff]
    %v838 = vld [vmem:[%s3 + $0x100] sm:$0xff]
    %v839 = vld [vmem:[%s3 + $0x108] sm:$0xff]
    %v840 = vld [vmem:[%s3 + $0x110] sm:$0xff]
    %v841 = vld [vmem:[%s3 + $0x118] sm:$0xff]
    %v842 = vld [vmem:[%s3 + $0x120] sm:$0xff]
    %v843 = vld [vmem:[%s3 + $0x128] sm:$0xff]
    %v844 = vld [vmem:[%s3 + $0x130] sm:$0xff]
    %v845 = vld [vmem:[%s3 + $0x138] sm:$0xff]
    %v846 = vld [vmem:[%s3 + $0x140] sm:$0xff]
    %v847 = vld [vmem:[%s3 + $0x148] sm:$0xff]
    %v848 = vld [vmem:[%s3 + $0x150] sm:$0xff]
    %v849 = vld [vmem:[%s3 + $0x158] sm:$0xff]
    %v850 = vld [vmem:[%s3 + $0x160] sm:$0xff]
    %v851 = vld [vmem:[%s3 + $0x168] sm:$0xff]
    %v852 = vld [vmem:[%s3 + $0x170] sm:$0xff]
    %v853 = vld [vmem:[%s3 + $0x178] sm:$0xff]
    %v854 = vld [vmem:[%s3 + $0x180] sm:$0xff]
    %v855 = vld [vmem:[%s3 + $0x188] sm:$0xff]
    %v856 = vld [vmem:[%s3 + $0x190] sm:$0xff]
    %v857 = vld [vmem:[%s3 + $0x198] sm:$0xff]
    %v858 = vld [vmem:[%s3 + $0x1a0] sm:$0xff]
    %v859 = vld [vmem:[%s3 + $0x1a8] sm:$0xff]
    %v860 = vld [vmem:[%s3 + $0x1b0] sm:$0xff]
    %v861 = vld [vmem:[%s3 + $0x1b8] sm:$0xff]
    %v862 = vld [vmem:[%s3 + $0x1c0] sm:$0xff]
    %v863 = vld [vmem:[%s3 + $0x1c8] sm:$0xff]
    %v864 = vld [vmem:[%s3 + $0x1d0] sm:$0xff]
    %v865 = vld [vmem:[%s3 + $0x1d8] sm:$0xff]
    %v866 = vld [vmem:[%s3 + $0x1e0] sm:$0xff]
    %v867 = vld [vmem:[%s3 + $0x1e8] sm:$0xff]
    %v868 = vld [vmem:[%s3 + $0x1f0] sm:$0xff]
    %v869 = vld [vmem:[%s3 + $0x1f8] sm:$0xff]
    %v870 = vld [vmem:[%s3 + $0x200] sm:$0xff]
    %v871 = vld [vmem:[%s3 + $0x208] sm:$0xff]
    %v872 = vld [vmem:[%s3 + $0x210] sm:$0xff]
    %v873 = vld [vmem:[%s3 + $0x218] sm:$0xff]
    %v874 = vld [vmem:[%s3 + $0x220] sm:$0xff]
    %v875 = vld [vmem:[%s3 + $0x228] sm:$0xff]
    %v876 = vld [vmem:[%s3 + $0x230] sm:$0xff]
    %v877 = vld [vmem:[%s3 + $0x238] sm:$0xff]
    %vm878 = vcmask 130048
    %v880 = vsel %vm878, %v804, 0
    %882 = vmatpush.msra.mxu0 %v866
    %883 = vmatpush.msra.mxu0 %v862
    %884 = vmatpush.msra.mxu0 %v858
    %885 = vmatpush.msra.mxu0 %v854
    %886 = vmatpush.msra.mxu0 %v850
    %887 = vmatpush.msra.mxu0 %v846
    %888 = vmatpush.msra.mxu0 %v842
    %889 = vmatpush.msra.mxu0 %v838
    %890 = vmatpush.msra.mxu0 %v834
    %891 = vmatpush.msra.mxu0 %v830
    %892 = vmatpush.msra.mxu0 %v826
    %893 = vmatpush.msra.mxu0 %v822
    %894 = vmatpush.msra.mxu0 %v818
    %895 = vmatpush.msra.mxu0 %v814
    %896 = vmatpush.msra.mxu0 %v810
    %897 = vmatpush.msra.mxu0 %v806
    %898 = vmatmul.f32.gmra.mxu0 %v803
    %v899 = vpop.f32.mrf.mxu0
    %v900 = vadd.f32 0.0, %v899
    %901 = vdwg.mxu0
    %902 = vmatpush.msra.mxu0 0.0
    %903 = vmatpush.msra.mxu0 0.0
    %904 = vmatpush.msra.mxu0 0.0
    %905 = vmatpush.msra.mxu0 0.0
    %906 = vmatpush.msra.mxu0 0.0
    %907 = vmatpush.msra.mxu0 0.0
    %908 = vmatpush.msra.mxu0 0.0
    %909 = vmatpush.msra.mxu0 0.0
    %910 = vmatpush.msra.mxu0 0.0
    %911 = vmatpush.msra.mxu0 0.0
    %912 = vmatpush.msra.mxu0 0.0
    %913 = vmatpush.msra.mxu0 0.0
    %914 = vmatpush.msra.mxu0 0.0
    %915 = vmatpush.msra.mxu0 0.0
    %916 = vmatpush.msra.mxu0 %v874
    %917 = vmatpush.msra.mxu0 %v870
    %918 = vmatmul.f32.gmra.mxu0 %v880
    %v919 = vpop.f32.mrf.mxu0
    %v920 = vadd.f32 %v900, %v919
    %921 = vdwg.mxu0
    %922 = vmatpush.msra.mxu0 %v867
    %923 = vmatpush.msra.mxu0 %v863
    %924 = vmatpush.msra.mxu0 %v859
    %925 = vmatpush.msra.mxu0 %v855
    %926 = vmatpush.msra.mxu0 %v851
    %927 = vmatpush.msra.mxu0 %v847
    %928 = vmatpush.msra.mxu0 %v843
    %929 = vmatpush.msra.mxu0 %v839
    %930 = vmatpush.msra.mxu0 %v835
    %931 = vmatpush.msra.mxu0 %v831
    %932 = vmatpush.msra.mxu0 %v827
    %933 = vmatpush.msra.mxu0 %v823
    %934 = vmatpush.msra.mxu0 %v819
    %935 = vmatpush.msra.mxu0 %v815
    %936 = vmatpush.msra.mxu0 %v811
    %937 = vmatpush.msra.mxu0 %v807
    %938 = vmatmul.f32.gmra.mxu0 %v803
    %v939 = vpop.f32.mrf.mxu0
    %v940 = vadd.f32 0.0, %v939
    %941 = vdwg.mxu0
    %942 = vmatpush.msra.mxu0 0.0
    %943 = vmatpush.msra.mxu0 0.0
    %944 = vmatpush.msra.mxu0 0.0
    %945 = vmatpush.msra.mxu0 0.0
    %946 = vmatpush.msra.mxu0 0.0
    %947 = vmatpush.msra.mxu0 0.0
    %948 = vmatpush.msra.mxu0 0.0
    %949 = vmatpush.msra.mxu0 0.0
    %950 = vmatpush.msra.mxu0 0.0
    %951 = vmatpush.msra.mxu0 0.0
    %952 = vmatpush.msra.mxu0 0.0
    %953 = vmatpush.msra.mxu0 0.0
    %954 = vmatpush.msra.mxu0 0.0
    %955 = vmatpush.msra.mxu0 0.0
    %956 = vmatpush.msra.mxu0 %v875
    %957 = vmatpush.msra.mxu0 %v871
    %958 = vmatmul.f32.gmra.mxu0 %v880
    %v959 = vpop.f32.mrf.mxu0
    %v960 = vadd.f32 %v940, %v959
    %961 = vdwg.mxu0
    %962 = vmatpush.msra.mxu0 %v868
    %963 = vmatpush.msra.mxu0 %v864
    %964 = vmatpush.msra.mxu0 %v860
    %965 = vmatpush.msra.mxu0 %v856
    %966 = vmatpush.msra.mxu0 %v852
    %967 = vmatpush.msra.mxu0 %v848
    %968 = vmatpush.msra.mxu0 %v844
    %969 = vmatpush.msra.mxu0 %v840
    %970 = vmatpush.msra.mxu0 %v836
    %971 = vmatpush.msra.mxu0 %v832
    %972 = vmatpush.msra.mxu0 %v828
    %973 = vmatpush.msra.mxu0 %v824
    %974 = vmatpush.msra.mxu0 %v820
    %975 = vmatpush.msra.mxu0 %v816
    %976 = vmatpush.msra.mxu0 %v812
    %977 = vmatpush.msra.mxu0 %v808
    %978 = vmatmul.f32.gmra.mxu0 %v803
    %v979 = vpop.f32.mrf.mxu0
    %v980 = vadd.f32 0.0, %v979
    %981 = vdwg.mxu0
    %982 = vmatpush.msra.mxu0 0.0
    %983 = vmatpush.msra.mxu0 0.0
    %984 = vmatpush.msra.mxu0 0.0
    %985 = vmatpush.msra.mxu0 0.0
    %986 = vmatpush.msra.mxu0 0.0
    %987 = vmatpush.msra.mxu0 0.0
    %988 = vmatpush.msra.mxu0 0.0
    %989 = vmatpush.msra.mxu0 0.0
    %990 = vmatpush.msra.mxu0 0.0
    %991 = vmatpush.msra.mxu0 0.0
    %992 = vmatpush.msra.mxu0 0.0
    %993 = vmatpush.msra.mxu0 0.0
    %994 = vmatpush.msra.mxu0 0.0
    %995 = vmatpush.msra.mxu0 0.0
    %996 = vmatpush.msra.mxu0 %v876
    %997 = vmatpush.msra.mxu0 %v872
    %998 = vmatmul.f32.gmra.mxu0 %v880
    %v999 = vpop.f32.mrf.mxu0
    %v1000 = vadd.f32 %v980, %v999
    %1001 = vdwg.mxu0
    %1002 = vmatpush.msra.mxu0 %v869
    %1003 = vmatpush.msra.mxu0 %v865
    %1004 = vmatpush.msra.mxu0 %v861
    %1005 = vmatpush.msra.mxu0 %v857
    %1006 = vmatpush.msra.mxu0 %v853
    %1007 = vmatpush.msra.mxu0 %v849
    %1008 = vmatpush.msra.mxu0 %v845
    %1009 = vmatpush.msra.mxu0 %v841
    %1010 = vmatpush.msra.mxu0 %v837
    %1011 = vmatpush.msra.mxu0 %v833
    %1012 = vmatpush.msra.mxu0 %v829
    %1013 = vmatpush.msra.mxu0 %v825
    %1014 = vmatpush.msra.mxu0 %v821
    %1015 = vmatpush.msra.mxu0 %v817
    %1016 = vmatpush.msra.mxu0 %v813
    %1017 = vmatpush.msra.mxu0 %v809
    %1018 = vmatmul.f32.gmra.mxu0 %v803
    %v1019 = vpop.f32.mrf.mxu0
    %v1020 = vadd.f32 0.0, %v1019
    %1021 = vdwg.mxu0
    %1022 = vmatpush.msra.mxu0 0.0
    %1023 = vmatpush.msra.mxu0 0.0
    %1024 = vmatpush.msra.mxu0 0.0
    %1025 = vmatpush.msra.mxu0 0.0
    %1026 = vmatpush.msra.mxu0 0.0
    %1027 = vmatpush.msra.mxu0 0.0
    %1028 = vmatpush.msra.mxu0 0.0
    %1029 = vmatpush.msra.mxu0 0.0
    %1030 = vmatpush.msra.mxu0 0.0
    %1031 = vmatpush.msra.mxu0 0.0
    %1032 = vmatpush.msra.mxu0 0.0
    %1033 = vmatpush.msra.mxu0 0.0
    %1034 = vmatpush.msra.mxu0 0.0
    %1035 = vmatpush.msra.mxu0 0.0
    %1036 = vmatpush.msra.mxu0 %v877
    %1037 = vmatpush.msra.mxu0 %v873
    %1038 = vmatmul.f32.gmra.mxu0 %v880
    %v1039 = vpop.f32.mrf.mxu0
    %v1040 = vadd.f32 %v1020, %v1039
    %1041 = vdwg.mxu0
    %v1043 = vperm.slane %v805, 0
    %v1044 = vperm.slane %v805, 1
    %v1045 = vperm.slane %v805, 2
    %v1046 = vperm.slane %v805, 3
    %v1051 = vadd.f32 %v1043, %v920
    %v1052 = vadd.f32 %v1044, %v960
    %v1053 = vadd.f32 %v1045, %v1000
    %v1054 = vadd.f32 %v1046, %v1040
    %s1055 = scalar_lea.vmem %s3, 576
    %v1056 = vld [vmem:[%s1055] sm:$0xff]
    %v1057 = vld [vmem:[%s1055 + $0x8] sm:$0xff]
    %v1058 = vld [vmem:[%s1055 + $0x10] sm:$0xff]
    %v1059 = vld [vmem:[%s1055 + $0x18] sm:$0xff]
    %v1060 = vld [vmem:[%s1055 + $0x20] sm:$0xff]
    %v1061 = vld [vmem:[%s1055 + $0x28] sm:$0xff]
    %v1062 = vld [vmem:[%s1055 + $0x30] sm:$0xff]
    %v1063 = vld [vmem:[%s1055 + $0x38] sm:$0xff]
    %v1064 = vld [vmem:[%s1055 + $0x40] sm:$0xff]
    %v1065 = vld [vmem:[%s1055 + $0x48] sm:$0xff]
    %v1066 = vld [vmem:[%s1055 + $0x50] sm:$0xff]
    %v1067 = vld [vmem:[%s1055 + $0x58] sm:$0xff]
    %v1068 = vld [vmem:[%s1055 + $0x60] sm:$0xff]
    %v1069 = vld [vmem:[%s1055 + $0x68] sm:$0xff]
    %v1070 = vld [vmem:[%s1055 + $0x70] sm:$0xff]
    %v1071 = vld [vmem:[%s1055 + $0x78] sm:$0xff]
    %v1072 = vld [vmem:[%s1055 + $0x80] sm:$0xff]
    %v1073 = vld [vmem:[%s1055 + $0x88] sm:$0xff]
    %v1074 = vld [vmem:[%s1055 + $0x90] sm:$0xff]
    %v1075 = vld [vmem:[%s1055 + $0x98] sm:$0xff]
    %v1076 = vld [vmem:[%s1055 + $0xa0] sm:$0xff]
    %v1077 = vld [vmem:[%s1055 + $0xa8] sm:$0xff]
    %v1078 = vld [vmem:[%s1055 + $0xb0] sm:$0xff]
    %v1079 = vld [vmem:[%s1055 + $0xb8] sm:$0xff]
    %v1080 = vld [vmem:[%s1055 + $0xc0] sm:$0xff]
    %v1081 = vld [vmem:[%s1055 + $0xc8] sm:$0xff]
    %v1082 = vld [vmem:[%s1055 + $0xd0] sm:$0xff]
    %v1083 = vld [vmem:[%s1055 + $0xd8] sm:$0xff]
    %v1084 = vld [vmem:[%s1055 + $0xe0] sm:$0xff]
    %v1085 = vld [vmem:[%s1055 + $0xe8] sm:$0xff]
    %v1086 = vld [vmem:[%s1055 + $0xf0] sm:$0xff]
    %v1087 = vld [vmem:[%s1055 + $0xf8] sm:$0xff]
    %v1088 = vld [vmem:[%s1055 + $0x100] sm:$0xff]
    %v1089 = vld [vmem:[%s1055 + $0x108] sm:$0xff]
    %v1090 = vld [vmem:[%s1055 + $0x110] sm:$0xff]
    %v1091 = vld [vmem:[%s1055 + $0x118] sm:$0xff]
    %v1092 = vld [vmem:[%s1055 + $0x120] sm:$0xff]
    %v1093 = vld [vmem:[%s1055 + $0x128] sm:$0xff]
    %v1094 = vld [vmem:[%s1055 + $0x130] sm:$0xff]
    %v1095 = vld [vmem:[%s1055 + $0x138] sm:$0xff]
    %v1096 = vld [vmem:[%s1055 + $0x140] sm:$0xff]
    %v1097 = vld [vmem:[%s1055 + $0x148] sm:$0xff]
    %v1098 = vld [vmem:[%s1055 + $0x150] sm:$0xff]
    %v1099 = vld [vmem:[%s1055 + $0x158] sm:$0xff]
    %v1100 = vld [vmem:[%s1055 + $0x160] sm:$0xff]
    %v1101 = vld [vmem:[%s1055 + $0x168] sm:$0xff]
    %v1102 = vld [vmem:[%s1055 + $0x170] sm:$0xff]
    %v1103 = vld [vmem:[%s1055 + $0x178] sm:$0xff]
    %v1104 = vld [vmem:[%s1055 + $0x180] sm:$0xff]
    %v1105 = vld [vmem:[%s1055 + $0x188] sm:$0xff]
    %v1106 = vld [vmem:[%s1055 + $0x190] sm:$0xff]
    %v1107 = vld [vmem:[%s1055 + $0x198] sm:$0xff]
    %v1108 = vld [vmem:[%s1055 + $0x1a0] sm:$0xff]
    %v1109 = vld [vmem:[%s1055 + $0x1a8] sm:$0xff]
    %v1110 = vld [vmem:[%s1055 + $0x1b0] sm:$0xff]
    %v1111 = vld [vmem:[%s1055 + $0x1b8] sm:$0xff]
    %v1112 = vld [vmem:[%s1055 + $0x1c0] sm:$0xff]
    %v1113 = vld [vmem:[%s1055 + $0x1c8] sm:$0xff]
    %v1114 = vld [vmem:[%s1055 + $0x1d0] sm:$0xff]
    %v1115 = vld [vmem:[%s1055 + $0x1d8] sm:$0xff]
    %v1116 = vld [vmem:[%s1055 + $0x1e0] sm:$0xff]
    %v1117 = vld [vmem:[%s1055 + $0x1e8] sm:$0xff]
    %v1118 = vld [vmem:[%s1055 + $0x1f0] sm:$0xff]
    %v1119 = vld [vmem:[%s1055 + $0x1f8] sm:$0xff]
    %v1120 = vld [vmem:[%s1055 + $0x200] sm:$0xff]
    %v1121 = vld [vmem:[%s1055 + $0x208] sm:$0xff]
    %v1122 = vld [vmem:[%s1055 + $0x210] sm:$0xff]
    %v1123 = vld [vmem:[%s1055 + $0x218] sm:$0xff]
    %v1124 = vld [vmem:[%s1055 + $0x220] sm:$0xff]
    %v1125 = vld [vmem:[%s1055 + $0x228] sm:$0xff]
    %v1126 = vld [vmem:[%s1055 + $0x230] sm:$0xff]
    %v1127 = vld [vmem:[%s1055 + $0x238] sm:$0xff]
    %v1129 = vrot.slane %v803, 2
    %v1130 = vrot.slane %v804, 2
    %v1132 = vsel %vm878, %v1130, 0
    %1134 = vmatpush.msra.mxu0 %v1116
    %1135 = vmatpush.msra.mxu0 %v1112
    %1136 = vmatpush.msra.mxu0 %v1108
    %1137 = vmatpush.msra.mxu0 %v1104
    %1138 = vmatpush.msra.mxu0 %v1100
    %1139 = vmatpush.msra.mxu0 %v1096
    %1140 = vmatpush.msra.mxu0 %v1092
    %1141 = vmatpush.msra.mxu0 %v1088
    %1142 = vmatpush.msra.mxu0 %v1084
    %1143 = vmatpush.msra.mxu0 %v1080
    %1144 = vmatpush.msra.mxu0 %v1076
    %1145 = vmatpush.msra.mxu0 %v1072
    %1146 = vmatpush.msra.mxu0 %v1068
    %1147 = vmatpush.msra.mxu0 %v1064
    %1148 = vmatpush.msra.mxu0 %v1060
    %1149 = vmatpush.msra.mxu0 %v1056
    %1150 = vmatmul.f32.gmra.mxu0 %v1129
    %v1151 = vpop.f32.mrf.mxu0
    %v1152 = vadd.f32 0.0, %v1151
    %1153 = vdwg.mxu0
    %1154 = vmatpush.msra.mxu0 0.0
    %1155 = vmatpush.msra.mxu0 0.0
    %1156 = vmatpush.msra.mxu0 0.0
    %1157 = vmatpush.msra.mxu0 0.0
    %1158 = vmatpush.msra.mxu0 0.0
    %1159 = vmatpush.msra.mxu0 0.0
    %1160 = vmatpush.msra.mxu0 0.0
    %1161 = vmatpush.msra.mxu0 0.0
    %1162 = vmatpush.msra.mxu0 0.0
    %1163 = vmatpush.msra.mxu0 0.0
    %1164 = vmatpush.msra.mxu0 0.0
    %1165 = vmatpush.msra.mxu0 0.0
    %1166 = vmatpush.msra.mxu0 0.0
    %1167 = vmatpush.msra.mxu0 0.0
    %1168 = vmatpush.msra.mxu0 %v1124
    %1169 = vmatpush.msra.mxu0 %v1120
    %1170 = vmatmul.f32.gmra.mxu0 %v1132
    %v1171 = vpop.f32.mrf.mxu0
    %v1172 = vadd.f32 %v1152, %v1171
    %1173 = vdwg.mxu0
    %1174 = vmatpush.msra.mxu0 %v1117
    %1175 = vmatpush.msra.mxu0 %v1113
    %1176 = vmatpush.msra.mxu0 %v1109
    %1177 = vmatpush.msra.mxu0 %v1105
    %1178 = vmatpush.msra.mxu0 %v1101
    %1179 = vmatpush.msra.mxu0 %v1097
    %1180 = vmatpush.msra.mxu0 %v1093
    %1181 = vmatpush.msra.mxu0 %v1089
    %1182 = vmatpush.msra.mxu0 %v1085
    %1183 = vmatpush.msra.mxu0 %v1081
    %1184 = vmatpush.msra.mxu0 %v1077
    %1185 = vmatpush.msra.mxu0 %v1073
    %1186 = vmatpush.msra.mxu0 %v1069
    %1187 = vmatpush.msra.mxu0 %v1065
    %1188 = vmatpush.msra.mxu0 %v1061
    %1189 = vmatpush.msra.mxu0 %v1057
    %1190 = vmatmul.f32.gmra.mxu0 %v1129
    %v1191 = vpop.f32.mrf.mxu0
    %v1192 = vadd.f32 0.0, %v1191
    %1193 = vdwg.mxu0
    %1194 = vmatpush.msra.mxu0 0.0
    %1195 = vmatpush.msra.mxu0 0.0
    %1196 = vmatpush.msra.mxu0 0.0
    %1197 = vmatpush.msra.mxu0 0.0
    %1198 = vmatpush.msra.mxu0 0.0
    %1199 = vmatpush.msra.mxu0 0.0
    %1200 = vmatpush.msra.mxu0 0.0
    %1201 = vmatpush.msra.mxu0 0.0
    %1202 = vmatpush.msra.mxu0 0.0
    %1203 = vmatpush.msra.mxu0 0.0
    %1204 = vmatpush.msra.mxu0 0.0
    %1205 = vmatpush.msra.mxu0 0.0
    %1206 = vmatpush.msra.mxu0 0.0
    %1207 = vmatpush.msra.mxu0 0.0
    %1208 = vmatpush.msra.mxu0 %v1125
    %1209 = vmatpush.msra.mxu0 %v1121
    %1210 = vmatmul.f32.gmra.mxu0 %v1132
    %v1211 = vpop.f32.mrf.mxu0
    %v1212 = vadd.f32 %v1192, %v1211
    %1213 = vdwg.mxu0
    %1214 = vmatpush.msra.mxu0 %v1118
    %1215 = vmatpush.msra.mxu0 %v1114
    %1216 = vmatpush.msra.mxu0 %v1110
    %1217 = vmatpush.msra.mxu0 %v1106
    %1218 = vmatpush.msra.mxu0 %v1102
    %1219 = vmatpush.msra.mxu0 %v1098
    %1220 = vmatpush.msra.mxu0 %v1094
    %1221 = vmatpush.msra.mxu0 %v1090
    %1222 = vmatpush.msra.mxu0 %v1086
    %1223 = vmatpush.msra.mxu0 %v1082
    %1224 = vmatpush.msra.mxu0 %v1078
    %1225 = vmatpush.msra.mxu0 %v1074
    %1226 = vmatpush.msra.mxu0 %v1070
    %1227 = vmatpush.msra.mxu0 %v1066
    %1228 = vmatpush.msra.mxu0 %v1062
    %1229 = vmatpush.msra.mxu0 %v1058
    %1230 = vmatmul.f32.gmra.mxu0 %v1129
    %v1231 = vpop.f32.mrf.mxu0
    %v1232 = vadd.f32 0.0, %v1231
    %1233 = vdwg.mxu0
    %1234 = vmatpush.msra.mxu0 0.0
    %1235 = vmatpush.msra.mxu0 0.0
    %1236 = vmatpush.msra.mxu0 0.0
    %1237 = vmatpush.msra.mxu0 0.0
    %1238 = vmatpush.msra.mxu0 0.0
    %1239 = vmatpush.msra.mxu0 0.0
    %1240 = vmatpush.msra.mxu0 0.0
    %1241 = vmatpush.msra.mxu0 0.0
    %1242 = vmatpush.msra.mxu0 0.0
    %1243 = vmatpush.msra.mxu0 0.0
    %1244 = vmatpush.msra.mxu0 0.0
    %1245 = vmatpush.msra.mxu0 0.0
    %1246 = vmatpush.msra.mxu0 0.0
    %1247 = vmatpush.msra.mxu0 0.0
    %1248 = vmatpush.msra.mxu0 %v1126
    %1249 = vmatpush.msra.mxu0 %v1122
    %1250 = vmatmul.f32.gmra.mxu0 %v1132
    %v1251 = vpop.f32.mrf.mxu0
    %v1252 = vadd.f32 %v1232, %v1251
    %1253 = vdwg.mxu0
    %1254 = vmatpush.msra.mxu0 %v1119
    %1255 = vmatpush.msra.mxu0 %v1115
    %1256 = vmatpush.msra.mxu0 %v1111
    %1257 = vmatpush.msra.mxu0 %v1107
    %1258 = vmatpush.msra.mxu0 %v1103
    %1259 = vmatpush.msra.mxu0 %v1099
    %1260 = vmatpush.msra.mxu0 %v1095
    %1261 = vmatpush.msra.mxu0 %v1091
    %1262 = vmatpush.msra.mxu0 %v1087
    %1263 = vmatpush.msra.mxu0 %v1083
    %1264 = vmatpush.msra.mxu0 %v1079
    %1265 = vmatpush.msra.mxu0 %v1075
    %1266 = vmatpush.msra.mxu0 %v1071
    %1267 = vmatpush.msra.mxu0 %v1067
    %1268 = vmatpush.msra.mxu0 %v1063
    %1269 = vmatpush.msra.mxu0 %v1059
    %1270 = vmatmul.f32.gmra.mxu0 %v1129
    %v1271 = vpop.f32.mrf.mxu0
    %v1272 = vadd.f32 0.0, %v1271
    %1273 = vdwg.mxu0
    %1274 = vmatpush.msra.mxu0 0.0
    %1275 = vmatpush.msra.mxu0 0.0
    %1276 = vmatpush.msra.mxu0 0.0
    %1277 = vmatpush.msra.mxu0 0.0
    %1278 = vmatpush.msra.mxu0 0.0
    %1279 = vmatpush.msra.mxu0 0.0
    %1280 = vmatpush.msra.mxu0 0.0
    %1281 = vmatpush.msra.mxu0 0.0
    %1282 = vmatpush.msra.mxu0 0.0
    %1283 = vmatpush.msra.mxu0 0.0
    %1284 = vmatpush.msra.mxu0 0.0
    %1285 = vmatpush.msra.mxu0 0.0
    %1286 = vmatpush.msra.mxu0 0.0
    %1287 = vmatpush.msra.mxu0 0.0
    %1288 = vmatpush.msra.mxu0 %v1127
    %1289 = vmatpush.msra.mxu0 %v1123
    %1290 = vmatmul.f32.gmra.mxu0 %v1132
    %v1291 = vpop.f32.mrf.mxu0
    %v1292 = vadd.f32 %v1272, %v1291
    %1293 = vdwg.mxu0
    %v1294 = vadd.f32 %v1051, %v1172
    %v1295 = vadd.f32 %v1052, %v1212
    %v1296 = vadd.f32 %v1053, %v1252
    %v1297 = vadd.f32 %v1054, %v1292
    %s1298 = scalar_lea.vmem %s3, 1152
    %v1299 = vld [vmem:[%s1298] sm:$0xff]
    %v1300 = vld [vmem:[%s1298 + $0x8] sm:$0xff]
    %v1301 = vld [vmem:[%s1298 + $0x10] sm:$0xff]
    %v1302 = vld [vmem:[%s1298 + $0x18] sm:$0xff]
    %v1303 = vld [vmem:[%s1298 + $0x20] sm:$0xff]
    %v1304 = vld [vmem:[%s1298 + $0x28] sm:$0xff]
    %v1305 = vld [vmem:[%s1298 + $0x30] sm:$0xff]
    %v1306 = vld [vmem:[%s1298 + $0x38] sm:$0xff]
    %v1307 = vld [vmem:[%s1298 + $0x40] sm:$0xff]
    %v1308 = vld [vmem:[%s1298 + $0x48] sm:$0xff]
    %v1309 = vld [vmem:[%s1298 + $0x50] sm:$0xff]
    %v1310 = vld [vmem:[%s1298 + $0x58] sm:$0xff]
    %v1311 = vld [vmem:[%s1298 + $0x60] sm:$0xff]
    %v1312 = vld [vmem:[%s1298 + $0x68] sm:$0xff]
    %v1313 = vld [vmem:[%s1298 + $0x70] sm:$0xff]
    %v1314 = vld [vmem:[%s1298 + $0x78] sm:$0xff]
    %v1315 = vld [vmem:[%s1298 + $0x80] sm:$0xff]
    %v1316 = vld [vmem:[%s1298 + $0x88] sm:$0xff]
    %v1317 = vld [vmem:[%s1298 + $0x90] sm:$0xff]
    %v1318 = vld [vmem:[%s1298 + $0x98] sm:$0xff]
    %v1319 = vld [vmem:[%s1298 + $0xa0] sm:$0xff]
    %v1320 = vld [vmem:[%s1298 + $0xa8] sm:$0xff]
    %v1321 = vld [vmem:[%s1298 + $0xb0] sm:$0xff]
    %v1322 = vld [vmem:[%s1298 + $0xb8] sm:$0xff]
    %v1323 = vld [vmem:[%s1298 + $0xc0] sm:$0xff]
    %v1324 = vld [vmem:[%s1298 + $0xc8] sm:$0xff]
    %v1325 = vld [vmem:[%s1298 + $0xd0] sm:$0xff]
    %v1326 = vld [vmem:[%s1298 + $0xd8] sm:$0xff]
    %v1327 = vld [vmem:[%s1298 + $0xe0] sm:$0xff]
    %v1328 = vld [vmem:[%s1298 + $0xe8] sm:$0xff]
    %v1329 = vld [vmem:[%s1298 + $0xf0] sm:$0xff]
    %v1330 = vld [vmem:[%s1298 + $0xf8] sm:$0xff]
    %v1331 = vld [vmem:[%s1298 + $0x100] sm:$0xff]
    %v1332 = vld [vmem:[%s1298 + $0x108] sm:$0xff]
    %v1333 = vld [vmem:[%s1298 + $0x110] sm:$0xff]
    %v1334 = vld [vmem:[%s1298 + $0x118] sm:$0xff]
    %v1335 = vld [vmem:[%s1298 + $0x120] sm:$0xff]
    %v1336 = vld [vmem:[%s1298 + $0x128] sm:$0xff]
    %v1337 = vld [vmem:[%s1298 + $0x130] sm:$0xff]
    %v1338 = vld [vmem:[%s1298 + $0x138] sm:$0xff]
    %v1339 = vld [vmem:[%s1298 + $0x140] sm:$0xff]
    %v1340 = vld [vmem:[%s1298 + $0x148] sm:$0xff]
    %v1341 = vld [vmem:[%s1298 + $0x150] sm:$0xff]
    %v1342 = vld [vmem:[%s1298 + $0x158] sm:$0xff]
    %v1343 = vld [vmem:[%s1298 + $0x160] sm:$0xff]
    %v1344 = vld [vmem:[%s1298 + $0x168] sm:$0xff]
    %v1345 = vld [vmem:[%s1298 + $0x170] sm:$0xff]
    %v1346 = vld [vmem:[%s1298 + $0x178] sm:$0xff]
    %v1347 = vld [vmem:[%s1298 + $0x180] sm:$0xff]
    %v1348 = vld [vmem:[%s1298 + $0x188] sm:$0xff]
    %v1349 = vld [vmem:[%s1298 + $0x190] sm:$0xff]
    %v1350 = vld [vmem:[%s1298 + $0x198] sm:$0xff]
    %v1351 = vld [vmem:[%s1298 + $0x1a0] sm:$0xff]
    %v1352 = vld [vmem:[%s1298 + $0x1a8] sm:$0xff]
    %v1353 = vld [vmem:[%s1298 + $0x1b0] sm:$0xff]
    %v1354 = vld [vmem:[%s1298 + $0x1b8] sm:$0xff]
    %v1355 = vld [vmem:[%s1298 + $0x1c0] sm:$0xff]
    %v1356 = vld [vmem:[%s1298 + $0x1c8] sm:$0xff]
    %v1357 = vld [vmem:[%s1298 + $0x1d0] sm:$0xff]
    %v1358 = vld [vmem:[%s1298 + $0x1d8] sm:$0xff]
    %v1359 = vld [vmem:[%s1298 + $0x1e0] sm:$0xff]
    %v1360 = vld [vmem:[%s1298 + $0x1e8] sm:$0xff]
    %v1361 = vld [vmem:[%s1298 + $0x1f0] sm:$0xff]
    %v1362 = vld [vmem:[%s1298 + $0x1f8] sm:$0xff]
    %v1363 = vld [vmem:[%s1298 + $0x200] sm:$0xff]
    %v1364 = vld [vmem:[%s1298 + $0x208] sm:$0xff]
    %v1365 = vld [vmem:[%s1298 + $0x210] sm:$0xff]
    %v1366 = vld [vmem:[%s1298 + $0x218] sm:$0xff]
    %v1367 = vld [vmem:[%s1298 + $0x220] sm:$0xff]
    %v1368 = vld [vmem:[%s1298 + $0x228] sm:$0xff]
    %v1369 = vld [vmem:[%s1298 + $0x230] sm:$0xff]
    %v1370 = vld [vmem:[%s1298 + $0x238] sm:$0xff]
    %v1371 = vrot.slane %v803, 4
    %v1372 = vrot.slane %v804, 4
    %v1374 = vsel %vm878, %v1372, 0
    %1376 = vmatpush.msra.mxu0 %v1359
    %1377 = vmatpush.msra.mxu0 %v1355
    %1378 = vmatpush.msra.mxu0 %v1351
    %1379 = vmatpush.msra.mxu0 %v1347
    %1380 = vmatpush.msra.mxu0 %v1343
    %1381 = vmatpush.msra.mxu0 %v1339
    %1382 = vmatpush.msra.mxu0 %v1335
    %1383 = vmatpush.msra.mxu0 %v1331
    %1384 = vmatpush.msra.mxu0 %v1327
    %1385 = vmatpush.msra.mxu0 %v1323
    %1386 = vmatpush.msra.mxu0 %v1319
    %1387 = vmatpush.msra.mxu0 %v1315
    %1388 = vmatpush.msra.mxu0 %v1311
    %1389 = vmatpush.msra.mxu0 %v1307
    %1390 = vmatpush.msra.mxu0 %v1303
    %1391 = vmatpush.msra.mxu0 %v1299
    %1392 = vmatmul.f32.gmra.mxu0 %v1371
    %v1393 = vpop.f32.mrf.mxu0
    %v1394 = vadd.f32 0.0, %v1393
    %1395 = vdwg.mxu0
    %1396 = vmatpush.msra.mxu0 0.0
    %1397 = vmatpush.msra.mxu0 0.0
    %1398 = vmatpush.msra.mxu0 0.0
    %1399 = vmatpush.msra.mxu0 0.0
    %1400 = vmatpush.msra.mxu0 0.0
    %1401 = vmatpush.msra.mxu0 0.0
    %1402 = vmatpush.msra.mxu0 0.0
    %1403 = vmatpush.msra.mxu0 0.0
    %1404 = vmatpush.msra.mxu0 0.0
    %1405 = vmatpush.msra.mxu0 0.0
    %1406 = vmatpush.msra.mxu0 0.0
    %1407 = vmatpush.msra.mxu0 0.0
    %1408 = vmatpush.msra.mxu0 0.0
    %1409 = vmatpush.msra.mxu0 0.0
    %1410 = vmatpush.msra.mxu0 %v1367
    %1411 = vmatpush.msra.mxu0 %v1363
    %1412 = vmatmul.f32.gmra.mxu0 %v1374
    %v1413 = vpop.f32.mrf.mxu0
    %v1414 = vadd.f32 %v1394, %v1413
    %1415 = vdwg.mxu0
    %1416 = vmatpush.msra.mxu0 %v1360
    %1417 = vmatpush.msra.mxu0 %v1356
    %1418 = vmatpush.msra.mxu0 %v1352
    %1419 = vmatpush.msra.mxu0 %v1348
    %1420 = vmatpush.msra.mxu0 %v1344
    %1421 = vmatpush.msra.mxu0 %v1340
    %1422 = vmatpush.msra.mxu0 %v1336
    %1423 = vmatpush.msra.mxu0 %v1332
    %1424 = vmatpush.msra.mxu0 %v1328
    %1425 = vmatpush.msra.mxu0 %v1324
    %1426 = vmatpush.msra.mxu0 %v1320
    %1427 = vmatpush.msra.mxu0 %v1316
    %1428 = vmatpush.msra.mxu0 %v1312
    %1429 = vmatpush.msra.mxu0 %v1308
    %1430 = vmatpush.msra.mxu0 %v1304
    %1431 = vmatpush.msra.mxu0 %v1300
    %1432 = vmatmul.f32.gmra.mxu0 %v1371
    %v1433 = vpop.f32.mrf.mxu0
    %v1434 = vadd.f32 0.0, %v1433
    %1435 = vdwg.mxu0
    %1436 = vmatpush.msra.mxu0 0.0
    %1437 = vmatpush.msra.mxu0 0.0
    %1438 = vmatpush.msra.mxu0 0.0
    %1439 = vmatpush.msra.mxu0 0.0
    %1440 = vmatpush.msra.mxu0 0.0
    %1441 = vmatpush.msra.mxu0 0.0
    %1442 = vmatpush.msra.mxu0 0.0
    %1443 = vmatpush.msra.mxu0 0.0
    %1444 = vmatpush.msra.mxu0 0.0
    %1445 = vmatpush.msra.mxu0 0.0
    %1446 = vmatpush.msra.mxu0 0.0
    %1447 = vmatpush.msra.mxu0 0.0
    %1448 = vmatpush.msra.mxu0 0.0
    %1449 = vmatpush.msra.mxu0 0.0
    %1450 = vmatpush.msra.mxu0 %v1368
    %1451 = vmatpush.msra.mxu0 %v1364
    %1452 = vmatmul.f32.gmra.mxu0 %v1374
    %v1453 = vpop.f32.mrf.mxu0
    %v1454 = vadd.f32 %v1434, %v1453
    %1455 = vdwg.mxu0
    %1456 = vmatpush.msra.mxu0 %v1361
    %1457 = vmatpush.msra.mxu0 %v1357
    %1458 = vmatpush.msra.mxu0 %v1353
    %1459 = vmatpush.msra.mxu0 %v1349
    %1460 = vmatpush.msra.mxu0 %v1345
    %1461 = vmatpush.msra.mxu0 %v1341
    %1462 = vmatpush.msra.mxu0 %v1337
    %1463 = vmatpush.msra.mxu0 %v1333
    %1464 = vmatpush.msra.mxu0 %v1329
    %1465 = vmatpush.msra.mxu0 %v1325
    %1466 = vmatpush.msra.mxu0 %v1321
    %1467 = vmatpush.msra.mxu0 %v1317
    %1468 = vmatpush.msra.mxu0 %v1313
    %1469 = vmatpush.msra.mxu0 %v1309
    %1470 = vmatpush.msra.mxu0 %v1305
    %1471 = vmatpush.msra.mxu0 %v1301
    %1472 = vmatmul.f32.gmra.mxu0 %v1371
    %v1473 = vpop.f32.mrf.mxu0
    %v1474 = vadd.f32 0.0, %v1473
    %1475 = vdwg.mxu0
    %1476 = vmatpush.msra.mxu0 0.0
    %1477 = vmatpush.msra.mxu0 0.0
    %1478 = vmatpush.msra.mxu0 0.0
    %1479 = vmatpush.msra.mxu0 0.0
    %1480 = vmatpush.msra.mxu0 0.0
    %1481 = vmatpush.msra.mxu0 0.0
    %1482 = vmatpush.msra.mxu0 0.0
    %1483 = vmatpush.msra.mxu0 0.0
    %1484 = vmatpush.msra.mxu0 0.0
    %1485 = vmatpush.msra.mxu0 0.0
    %1486 = vmatpush.msra.mxu0 0.0
    %1487 = vmatpush.msra.mxu0 0.0
    %1488 = vmatpush.msra.mxu0 0.0
    %1489 = vmatpush.msra.mxu0 0.0
    %1490 = vmatpush.msra.mxu0 %v1369
    %1491 = vmatpush.msra.mxu0 %v1365
    %1492 = vmatmul.f32.gmra.mxu0 %v1374
    %v1493 = vpop.f32.mrf.mxu0
    %v1494 = vadd.f32 %v1474, %v1493
    %1495 = vdwg.mxu0
    %1496 = vmatpush.msra.mxu0 %v1362
    %1497 = vmatpush.msra.mxu0 %v1358
    %1498 = vmatpush.msra.mxu0 %v1354
    %1499 = vmatpush.msra.mxu0 %v1350
    %1500 = vmatpush.msra.mxu0 %v1346
    %1501 = vmatpush.msra.mxu0 %v1342
    %1502 = vmatpush.msra.mxu0 %v1338
    %1503 = vmatpush.msra.mxu0 %v1334
    %1504 = vmatpush.msra.mxu0 %v1330
    %1505 = vmatpush.msra.mxu0 %v1326
    %1506 = vmatpush.msra.mxu0 %v1322
    %1507 = vmatpush.msra.mxu0 %v1318
    %1508 = vmatpush.msra.mxu0 %v1314
    %1509 = vmatpush.msra.mxu0 %v1310
    %1510 = vmatpush.msra.mxu0 %v1306
    %1511 = vmatpush.msra.mxu0 %v1302
    %1512 = vmatmul.f32.gmra.mxu0 %v1371
    %v1513 = vpop.f32.mrf.mxu0
    %v1514 = vadd.f32 0.0, %v1513
    %1515 = vdwg.mxu0
    %1516 = vmatpush.msra.mxu0 0.0
    %1517 = vmatpush.msra.mxu0 0.0
    %1518 = vmatpush.msra.mxu0 0.0
    %1519 = vmatpush.msra.mxu0 0.0
    %1520 = vmatpush.msra.mxu0 0.0
    %1521 = vmatpush.msra.mxu0 0.0
    %1522 = vmatpush.msra.mxu0 0.0
    %1523 = vmatpush.msra.mxu0 0.0
    %1524 = vmatpush.msra.mxu0 0.0
    %1525 = vmatpush.msra.mxu0 0.0
    %1526 = vmatpush.msra.mxu0 0.0
    %1527 = vmatpush.msra.mxu0 0.0
    %1528 = vmatpush.msra.mxu0 0.0
    %1529 = vmatpush.msra.mxu0 0.0
    %1530 = vmatpush.msra.mxu0 %v1370
    %1531 = vmatpush.msra.mxu0 %v1366
    %1532 = vmatmul.f32.gmra.mxu0 %v1374
    %v1533 = vpop.f32.mrf.mxu0
    %v1534 = vadd.f32 %v1514, %v1533
    %1535 = vdwg.mxu0
    %v1536 = vadd.f32 %v1294, %v1414
    %v1537 = vadd.f32 %v1295, %v1454
    %v1538 = vadd.f32 %v1296, %v1494
    %v1539 = vadd.f32 %v1297, %v1534
    %s1540 = scalar_lea.vmem %s3, 1728
    %v1541 = vld [vmem:[%s1540] sm:$0xff]
    %v1542 = vld [vmem:[%s1540 + $0x8] sm:$0xff]
    %v1543 = vld [vmem:[%s1540 + $0x10] sm:$0xff]
    %v1544 = vld [vmem:[%s1540 + $0x18] sm:$0xff]
    %v1545 = vld [vmem:[%s1540 + $0x20] sm:$0xff]
    %v1546 = vld [vmem:[%s1540 + $0x28] sm:$0xff]
    %v1547 = vld [vmem:[%s1540 + $0x30] sm:$0xff]
    %v1548 = vld [vmem:[%s1540 + $0x38] sm:$0xff]
    %v1549 = vld [vmem:[%s1540 + $0x40] sm:$0xff]
    %v1550 = vld [vmem:[%s1540 + $0x48] sm:$0xff]
    %v1551 = vld [vmem:[%s1540 + $0x50] sm:$0xff]
    %v1552 = vld [vmem:[%s1540 + $0x58] sm:$0xff]
    %v1553 = vld [vmem:[%s1540 + $0x60] sm:$0xff]
    %v1554 = vld [vmem:[%s1540 + $0x68] sm:$0xff]
    %v1555 = vld [vmem:[%s1540 + $0x70] sm:$0xff]
    %v1556 = vld [vmem:[%s1540 + $0x78] sm:$0xff]
    %v1557 = vld [vmem:[%s1540 + $0x80] sm:$0xff]
    %v1558 = vld [vmem:[%s1540 + $0x88] sm:$0xff]
    %v1559 = vld [vmem:[%s1540 + $0x90] sm:$0xff]
    %v1560 = vld [vmem:[%s1540 + $0x98] sm:$0xff]
    %v1561 = vld [vmem:[%s1540 + $0xa0] sm:$0xff]
    %v1562 = vld [vmem:[%s1540 + $0xa8] sm:$0xff]
    %v1563 = vld [vmem:[%s1540 + $0xb0] sm:$0xff]
    %v1564 = vld [vmem:[%s1540 + $0xb8] sm:$0xff]
    %v1565 = vld [vmem:[%s1540 + $0xc0] sm:$0xff]
    %v1566 = vld [vmem:[%s1540 + $0xc8] sm:$0xff]
    %v1567 = vld [vmem:[%s1540 + $0xd0] sm:$0xff]
    %v1568 = vld [vmem:[%s1540 + $0xd8] sm:$0xff]
    %v1569 = vld [vmem:[%s1540 + $0xe0] sm:$0xff]
    %v1570 = vld [vmem:[%s1540 + $0xe8] sm:$0xff]
    %v1571 = vld [vmem:[%s1540 + $0xf0] sm:$0xff]
    %v1572 = vld [vmem:[%s1540 + $0xf8] sm:$0xff]
    %v1573 = vld [vmem:[%s1540 + $0x100] sm:$0xff]
    %v1574 = vld [vmem:[%s1540 + $0x108] sm:$0xff]
    %v1575 = vld [vmem:[%s1540 + $0x110] sm:$0xff]
    %v1576 = vld [vmem:[%s1540 + $0x118] sm:$0xff]
    %v1577 = vld [vmem:[%s1540 + $0x120] sm:$0xff]
    %v1578 = vld [vmem:[%s1540 + $0x128] sm:$0xff]
    %v1579 = vld [vmem:[%s1540 + $0x130] sm:$0xff]
    %v1580 = vld [vmem:[%s1540 + $0x138] sm:$0xff]
    %v1581 = vld [vmem:[%s1540 + $0x140] sm:$0xff]
    %v1582 = vld [vmem:[%s1540 + $0x148] sm:$0xff]
    %v1583 = vld [vmem:[%s1540 + $0x150] sm:$0xff]
    %v1584 = vld [vmem:[%s1540 + $0x158] sm:$0xff]
    %v1585 = vld [vmem:[%s1540 + $0x160] sm:$0xff]
    %v1586 = vld [vmem:[%s1540 + $0x168] sm:$0xff]
    %v1587 = vld [vmem:[%s1540 + $0x170] sm:$0xff]
    %v1588 = vld [vmem:[%s1540 + $0x178] sm:$0xff]
    %v1589 = vld [vmem:[%s1540 + $0x180] sm:$0xff]
    %v1590 = vld [vmem:[%s1540 + $0x188] sm:$0xff]
    %v1591 = vld [vmem:[%s1540 + $0x190] sm:$0xff]
    %v1592 = vld [vmem:[%s1540 + $0x198] sm:$0xff]
    %v1593 = vld [vmem:[%s1540 + $0x1a0] sm:$0xff]
    %v1594 = vld [vmem:[%s1540 + $0x1a8] sm:$0xff]
    %v1595 = vld [vmem:[%s1540 + $0x1b0] sm:$0xff]
    %v1596 = vld [vmem:[%s1540 + $0x1b8] sm:$0xff]
    %v1597 = vld [vmem:[%s1540 + $0x1c0] sm:$0xff]
    %v1598 = vld [vmem:[%s1540 + $0x1c8] sm:$0xff]
    %v1599 = vld [vmem:[%s1540 + $0x1d0] sm:$0xff]
    %v1600 = vld [vmem:[%s1540 + $0x1d8] sm:$0xff]
    %v1601 = vld [vmem:[%s1540 + $0x1e0] sm:$0xff]
    %v1602 = vld [vmem:[%s1540 + $0x1e8] sm:$0xff]
    %v1603 = vld [vmem:[%s1540 + $0x1f0] sm:$0xff]
    %v1604 = vld [vmem:[%s1540 + $0x1f8] sm:$0xff]
    %v1605 = vld [vmem:[%s1540 + $0x200] sm:$0xff]
    %v1606 = vld [vmem:[%s1540 + $0x208] sm:$0xff]
    %v1607 = vld [vmem:[%s1540 + $0x210] sm:$0xff]
    %v1608 = vld [vmem:[%s1540 + $0x218] sm:$0xff]
    %v1609 = vld [vmem:[%s1540 + $0x220] sm:$0xff]
    %v1610 = vld [vmem:[%s1540 + $0x228] sm:$0xff]
    %v1611 = vld [vmem:[%s1540 + $0x230] sm:$0xff]
    %v1612 = vld [vmem:[%s1540 + $0x238] sm:$0xff]
    %v1613 = vrot.slane %v803, 6
    %v1614 = vrot.slane %v804, 6
    %v1616 = vsel %vm878, %v1614, 0
    %1618 = vmatpush.msra.mxu0 %v1601
    %1619 = vmatpush.msra.mxu0 %v1597
    %1620 = vmatpush.msra.mxu0 %v1593
    %1621 = vmatpush.msra.mxu0 %v1589
    %1622 = vmatpush.msra.mxu0 %v1585
    %1623 = vmatpush.msra.mxu0 %v1581
    %1624 = vmatpush.msra.mxu0 %v1577
    %1625 = vmatpush.msra.mxu0 %v1573
    %1626 = vmatpush.msra.mxu0 %v1569
    %1627 = vmatpush.msra.mxu0 %v1565
    %1628 = vmatpush.msra.mxu0 %v1561
    %1629 = vmatpush.msra.mxu0 %v1557
    %1630 = vmatpush.msra.mxu0 %v1553
    %1631 = vmatpush.msra.mxu0 %v1549
    %1632 = vmatpush.msra.mxu0 %v1545
    %1633 = vmatpush.msra.mxu0 %v1541
    %1634 = vmatmul.f32.gmra.mxu0 %v1613
    %v1635 = vpop.f32.mrf.mxu0
    %v1636 = vadd.f32 0.0, %v1635
    %1637 = vdwg.mxu0
    %1638 = vmatpush.msra.mxu0 0.0
    %1639 = vmatpush.msra.mxu0 0.0
    %1640 = vmatpush.msra.mxu0 0.0
    %1641 = vmatpush.msra.mxu0 0.0
    %1642 = vmatpush.msra.mxu0 0.0
    %1643 = vmatpush.msra.mxu0 0.0
    %1644 = vmatpush.msra.mxu0 0.0
    %1645 = vmatpush.msra.mxu0 0.0
    %1646 = vmatpush.msra.mxu0 0.0
    %1647 = vmatpush.msra.mxu0 0.0
    %1648 = vmatpush.msra.mxu0 0.0
    %1649 = vmatpush.msra.mxu0 0.0
    %1650 = vmatpush.msra.mxu0 0.0
    %1651 = vmatpush.msra.mxu0 0.0
    %1652 = vmatpush.msra.mxu0 %v1609
    %1653 = vmatpush.msra.mxu0 %v1605
    %1654 = vmatmul.f32.gmra.mxu0 %v1616
    %v1655 = vpop.f32.mrf.mxu0
    %v1656 = vadd.f32 %v1636, %v1655
    %1657 = vdwg.mxu0
    %1658 = vmatpush.msra.mxu0 %v1602
    %1659 = vmatpush.msra.mxu0 %v1598
    %1660 = vmatpush.msra.mxu0 %v1594
    %1661 = vmatpush.msra.mxu0 %v1590
    %1662 = vmatpush.msra.mxu0 %v1586
    %1663 = vmatpush.msra.mxu0 %v1582
    %1664 = vmatpush.msra.mxu0 %v1578
    %1665 = vmatpush.msra.mxu0 %v1574
    %1666 = vmatpush.msra.mxu0 %v1570
    %1667 = vmatpush.msra.mxu0 %v1566
    %1668 = vmatpush.msra.mxu0 %v1562
    %1669 = vmatpush.msra.mxu0 %v1558
    %1670 = vmatpush.msra.mxu0 %v1554
    %1671 = vmatpush.msra.mxu0 %v1550
    %1672 = vmatpush.msra.mxu0 %v1546
    %1673 = vmatpush.msra.mxu0 %v1542
    %1674 = vmatmul.f32.gmra.mxu0 %v1613
    %v1675 = vpop.f32.mrf.mxu0
    %v1676 = vadd.f32 0.0, %v1675
    %1677 = vdwg.mxu0
    %1678 = vmatpush.msra.mxu0 0.0
    %1679 = vmatpush.msra.mxu0 0.0
    %1680 = vmatpush.msra.mxu0 0.0
    %1681 = vmatpush.msra.mxu0 0.0
    %1682 = vmatpush.msra.mxu0 0.0
    %1683 = vmatpush.msra.mxu0 0.0
    %1684 = vmatpush.msra.mxu0 0.0
    %1685 = vmatpush.msra.mxu0 0.0
    %1686 = vmatpush.msra.mxu0 0.0
    %1687 = vmatpush.msra.mxu0 0.0
    %1688 = vmatpush.msra.mxu0 0.0
    %1689 = vmatpush.msra.mxu0 0.0
    %1690 = vmatpush.msra.mxu0 0.0
    %1691 = vmatpush.msra.mxu0 0.0
    %1692 = vmatpush.msra.mxu0 %v1610
    %1693 = vmatpush.msra.mxu0 %v1606
    %1694 = vmatmul.f32.gmra.mxu0 %v1616
    %v1695 = vpop.f32.mrf.mxu0
    %v1696 = vadd.f32 %v1676, %v1695
    %1697 = vdwg.mxu0
    %1698 = vmatpush.msra.mxu0 %v1603
    %1699 = vmatpush.msra.mxu0 %v1599
    %1700 = vmatpush.msra.mxu0 %v1595
    %1701 = vmatpush.msra.mxu0 %v1591
    %1702 = vmatpush.msra.mxu0 %v1587
    %1703 = vmatpush.msra.mxu0 %v1583
    %1704 = vmatpush.msra.mxu0 %v1579
    %1705 = vmatpush.msra.mxu0 %v1575
    %1706 = vmatpush.msra.mxu0 %v1571
    %1707 = vmatpush.msra.mxu0 %v1567
    %1708 = vmatpush.msra.mxu0 %v1563
    %1709 = vmatpush.msra.mxu0 %v1559
    %1710 = vmatpush.msra.mxu0 %v1555
    %1711 = vmatpush.msra.mxu0 %v1551
    %1712 = vmatpush.msra.mxu0 %v1547
    %1713 = vmatpush.msra.mxu0 %v1543
    %1714 = vmatmul.f32.gmra.mxu0 %v1613
    %v1715 = vpop.f32.mrf.mxu0
    %v1716 = vadd.f32 0.0, %v1715
    %1717 = vdwg.mxu0
    %1718 = vmatpush.msra.mxu0 0.0
    %1719 = vmatpush.msra.mxu0 0.0
    %1720 = vmatpush.msra.mxu0 0.0
    %1721 = vmatpush.msra.mxu0 0.0
    %1722 = vmatpush.msra.mxu0 0.0
    %1723 = vmatpush.msra.mxu0 0.0
    %1724 = vmatpush.msra.mxu0 0.0
    %1725 = vmatpush.msra.mxu0 0.0
    %1726 = vmatpush.msra.mxu0 0.0
    %1727 = vmatpush.msra.mxu0 0.0
    %1728 = vmatpush.msra.mxu0 0.0
    %1729 = vmatpush.msra.mxu0 0.0
    %1730 = vmatpush.msra.mxu0 0.0
    %1731 = vmatpush.msra.mxu0 0.0
    %1732 = vmatpush.msra.mxu0 %v1611
    %1733 = vmatpush.msra.mxu0 %v1607
    %1734 = vmatmul.f32.gmra.mxu0 %v1616
    %v1735 = vpop.f32.mrf.mxu0
    %v1736 = vadd.f32 %v1716, %v1735
    %1737 = vdwg.mxu0
    %1738 = vmatpush.msra.mxu0 %v1604
    %1739 = vmatpush.msra.mxu0 %v1600
    %1740 = vmatpush.msra.mxu0 %v1596
    %1741 = vmatpush.msra.mxu0 %v1592
    %1742 = vmatpush.msra.mxu0 %v1588
    %1743 = vmatpush.msra.mxu0 %v1584
    %1744 = vmatpush.msra.mxu0 %v1580
    %1745 = vmatpush.msra.mxu0 %v1576
    %1746 = vmatpush.msra.mxu0 %v1572
    %1747 = vmatpush.msra.mxu0 %v1568
    %1748 = vmatpush.msra.mxu0 %v1564
    %1749 = vmatpush.msra.mxu0 %v1560
    %1750 = vmatpush.msra.mxu0 %v1556
    %1751 = vmatpush.msra.mxu0 %v1552
    %1752 = vmatpush.msra.mxu0 %v1548
    %1753 = vmatpush.msra.mxu0 %v1544
    %1754 = vmatmul.f32.gmra.mxu0 %v1613
    %v1755 = vpop.f32.mrf.mxu0
    %v1756 = vadd.f32 0.0, %v1755
    %1757 = vdwg.mxu0
    %1758 = vmatpush.msra.mxu0 0.0
    %1759 = vmatpush.msra.mxu0 0.0
    %1760 = vmatpush.msra.mxu0 0.0
    %1761 = vmatpush.msra.mxu0 0.0
    %1762 = vmatpush.msra.mxu0 0.0
    %1763 = vmatpush.msra.mxu0 0.0
    %1764 = vmatpush.msra.mxu0 0.0
    %1765 = vmatpush.msra.mxu0 0.0
    %1766 = vmatpush.msra.mxu0 0.0
    %1767 = vmatpush.msra.mxu0 0.0
    %1768 = vmatpush.msra.mxu0 0.0
    %1769 = vmatpush.msra.mxu0 0.0
    %1770 = vmatpush.msra.mxu0 0.0
    %1771 = vmatpush.msra.mxu0 0.0
    %1772 = vmatpush.msra.mxu0 %v1612
    %1773 = vmatpush.msra.mxu0 %v1608
    %1774 = vmatmul.f32.gmra.mxu0 %v1616
    %v1775 = vpop.f32.mrf.mxu0
    %v1776 = vadd.f32 %v1756, %v1775
    %1777 = vdwg.mxu0
    %v1778 = vadd.f32 %v1536, %v1656
    %v1779 = vadd.f32 %v1537, %v1696
    %v1780 = vadd.f32 %v1538, %v1736
    %v1781 = vadd.f32 %v1539, %v1776
    %v1782 = vmul.f32 %v1778, 0.5
    %v1783 = vmul.f32 %v1779, 0.5
    %v1784 = vmul.f32 %v1780, 0.5
    %v1785 = vmul.f32 %v1781, 0.5
    %v1786 = vadd.f32 %v1782, 0.0
    %v1787 = vadd.f32 %v1783, 0.0
    %v1788 = vadd.f32 %v1784, 0.0
    %v1789 = vadd.f32 %v1785, 0.0
    %vm1790 = vcmp.ge.f32.partialorder %v1786, 1.0
    %vm1791 = vcmp.ge.f32.partialorder %v1787, 1.0
    %vm1792 = vcmp.ge.f32.partialorder %v1788, 1.0
    %vm1793 = vcmp.ge.f32.partialorder %v1789, 1.0
    %v1794 = vsel %vm1790, 1, 0
    %v1795 = vsel %vm1791, 1, 0
    %v1796 = vsel %vm1792, 1, 0
    %v1797 = vsel %vm1793, 1, 0
    %v1798 = vcvt.s32.f32 %v1794
    %v1799 = vcvt.s32.f32 %v1795
    %v1800 = vcvt.s32.f32 %v1796
    %v1801 = vcvt.s32.f32 %v1797
    %v1802 = vsub.f32 1.0, %v1798
    %v1803 = vsub.f32 1.0, %v1799
    %v1804 = vsub.f32 1.0, %v1800
    %v1805 = vsub.f32 1.0, %v1801
    %v1806 = vmul.f32 %v1786, %v1802
    %v1807 = vmul.f32 %v1787, %v1803
    %v1808 = vmul.f32 %v1788, %v1804
    %v1809 = vmul.f32 %v1789, %v1805
    %v1810 = vpack.c.bf16 %v1798, %v1798
    %v1811 = vpack.c.bf16 %v1799, %v1799
    %v1812 = vpack.c.bf16 %v1800, %v1800
    %v1813 = vpack.c.bf16 %v1801, %v1801
    %v1814 = vld [vmem:[%s5] sm:$0xf]
    %v1815 = vld [vmem:[%s5 + $0x4] sm:$0xf]
    %v1816 = vld [vmem:[%s5 + $0x8] sm:$0xf]
    %v1817 = vld [vmem:[%s5 + $0xc] sm:$0xf]
    %v1818 = vld [vmem:[%s5 + $0x10] sm:$0xf]
    %v1819 = vld [vmem:[%s5 + $0x14] sm:$0xf]
    %v1820 = vld [vmem:[%s5 + $0x18] sm:$0xf]
    %v1821 = vld [vmem:[%s5 + $0x1c] sm:$0xf]
    %v1822 = vld [vmem:[%s5 + $0x20] sm:$0xf]
    %v1823 = vld [vmem:[%s5 + $0x24] sm:$0xf]
    %v1824 = vld [vmem:[%s5 + $0x28] sm:$0xf]
    %v1825 = vld [vmem:[%s5 + $0x2c] sm:$0xf]
    %v1826 = vld [vmem:[%s5 + $0x30] sm:$0xf]
    %v1827 = vld [vmem:[%s5 + $0x34] sm:$0xf]
    %v1828 = vld [vmem:[%s5 + $0x38] sm:$0xf]
    %v1829 = vld [vmem:[%s5 + $0x3c] sm:$0xf]
    %v1830 = vld [vmem:[%s5 + $0x40] sm:$0xf]
    %v1831 = vld [vmem:[%s5 + $0x44] sm:$0xf]
    %v1832 = vld [vmem:[%s5 + $0x48] sm:$0xf]
    %v1833 = vld [vmem:[%s5 + $0x4c] sm:$0xf]
    %v1834 = vld [vmem:[%s5 + $0x50] sm:$0xf]
    %v1835 = vld [vmem:[%s5 + $0x54] sm:$0xf]
    %v1836 = vld [vmem:[%s5 + $0x58] sm:$0xf]
    %v1837 = vld [vmem:[%s5 + $0x5c] sm:$0xf]
    %v1838 = vld [vmem:[%s5 + $0x60] sm:$0xf]
    %v1839 = vld [vmem:[%s5 + $0x64] sm:$0xf]
    %v1840 = vld [vmem:[%s5 + $0x68] sm:$0xf]
    %v1841 = vld [vmem:[%s5 + $0x6c] sm:$0xf]
    %v1842 = vld [vmem:[%s5 + $0x70] sm:$0xf]
    %v1843 = vld [vmem:[%s5 + $0x74] sm:$0xf]
    %v1844 = vld [vmem:[%s5 + $0x78] sm:$0xf]
    %v1845 = vld [vmem:[%s5 + $0x7c] sm:$0xf]
    %v1846 = vld [vmem:[%s5 + $0x80] sm:$0xf]
    %v1847 = vld [vmem:[%s5 + $0x84] sm:$0xf]
    %v1848 = vld [vmem:[%s5 + $0x88] sm:$0xf]
    %v1849 = vld [vmem:[%s5 + $0x8c] sm:$0xf]
    %v1850 = vld [vmem:[%s5 + $0x90] sm:$0xf]
    %v1851 = vld [vmem:[%s5 + $0x94] sm:$0xf]
    %v1852 = vld [vmem:[%s5 + $0x98] sm:$0xf]
    %v1853 = vld [vmem:[%s5 + $0x9c] sm:$0xf]
    %v1854 = vld [vmem:[%s5 + $0xa0] sm:$0xf]
    %v1855 = vld [vmem:[%s5 + $0xa4] sm:$0xf]
    %v1856 = vld [vmem:[%s5 + $0xa8] sm:$0xf]
    %v1857 = vld [vmem:[%s5 + $0xac] sm:$0xf]
    %v1858 = vld [vmem:[%s5 + $0xb0] sm:$0xf]
    %v1859 = vld [vmem:[%s5 + $0xb4] sm:$0xf]
    %v1860 = vld [vmem:[%s5 + $0xb8] sm:$0xf]
    %v1861 = vld [vmem:[%s5 + $0xbc] sm:$0xf]
    %v1862 = vld [vmem:[%s5 + $0xc0] sm:$0xf]
    %v1863 = vld [vmem:[%s5 + $0xc4] sm:$0xf]
    %v1864 = vld [vmem:[%s5 + $0xc8] sm:$0xf]
    %v1865 = vld [vmem:[%s5 + $0xcc] sm:$0xf]
    %v1866 = vld [vmem:[%s5 + $0xd0] sm:$0xf]
    %v1867 = vld [vmem:[%s5 + $0xd4] sm:$0xf]
    %v1868 = vld [vmem:[%s5 + $0xd8] sm:$0xf]
    %v1869 = vld [vmem:[%s5 + $0xdc] sm:$0xf]
    %v1870 = vld [vmem:[%s5 + $0xe0] sm:$0xf]
    %v1871 = vld [vmem:[%s5 + $0xe4] sm:$0xf]
    %v1872 = vld [vmem:[%s5 + $0xe8] sm:$0xf]
    %v1873 = vld [vmem:[%s5 + $0xec] sm:$0xf]
    %v1874 = vld [vmem:[%s5 + $0xf0] sm:$0xf]
    %v1875 = vld [vmem:[%s5 + $0xf4] sm:$0xf]
    %v1876 = vld [vmem:[%s5 + $0xf8] sm:$0xf]
    %v1877 = vld [vmem:[%s5 + $0xfc] sm:$0xf]
    %v1942 = vunpack.c.l.b16 %v1814
    %v1943 = vunpack.c.l.b16 %v1815
    %v1944 = vunpack.c.l.b16 %v1816
    %v1945 = vunpack.c.l.b16 %v1817
    %v1946 = vunpack.c.l.b16 %v1818
    %v1947 = vunpack.c.l.b16 %v1819
    %v1948 = vunpack.c.l.b16 %v1820
    %v1949 = vunpack.c.l.b16 %v1821
    %v1950 = vunpack.c.l.b16 %v1822
    %v1951 = vunpack.c.l.b16 %v1823
    %v1952 = vunpack.c.l.b16 %v1824
    %v1953 = vunpack.c.l.b16 %v1825
    %v1954 = vunpack.c.l.b16 %v1826
    %v1955 = vunpack.c.l.b16 %v1827
    %v1956 = vunpack.c.l.b16 %v1828
    %v1957 = vunpack.c.l.b16 %v1829
    %v1958 = vunpack.c.l.b16 %v1830
    %v1959 = vunpack.c.l.b16 %v1831
    %v1960 = vunpack.c.l.b16 %v1832
    %v1961 = vunpack.c.l.b16 %v1833
    %v1962 = vunpack.c.l.b16 %v1834
    %v1963 = vunpack.c.l.b16 %v1835
    %v1964 = vunpack.c.l.b16 %v1836
    %v1965 = vunpack.c.l.b16 %v1837
    %v1966 = vunpack.c.l.b16 %v1838
    %v1967 = vunpack.c.l.b16 %v1839
    %v1968 = vunpack.c.l.b16 %v1840
    %v1969 = vunpack.c.l.b16 %v1841
    %v1970 = vunpack.c.l.b16 %v1842
    %v1971 = vunpack.c.l.b16 %v1843
    %v1972 = vunpack.c.l.b16 %v1844
    %v1973 = vunpack.c.l.b16 %v1845
    %v1974 = vunpack.c.l.b16 %v1846
    %v1975 = vunpack.c.l.b16 %v1847
    %v1976 = vunpack.c.l.b16 %v1848
    %v1977 = vunpack.c.l.b16 %v1849
    %v1978 = vunpack.c.l.b16 %v1850
    %v1979 = vunpack.c.l.b16 %v1851
    %v1980 = vunpack.c.l.b16 %v1852
    %v1981 = vunpack.c.l.b16 %v1853
    %v1982 = vunpack.c.l.b16 %v1854
    %v1983 = vunpack.c.l.b16 %v1855
    %v1984 = vunpack.c.l.b16 %v1856
    %v1985 = vunpack.c.l.b16 %v1857
    %v1986 = vunpack.c.l.b16 %v1858
    %v1987 = vunpack.c.l.b16 %v1859
    %v1988 = vunpack.c.l.b16 %v1860
    %v1989 = vunpack.c.l.b16 %v1861
    %v1990 = vunpack.c.l.b16 %v1862
    %v1991 = vunpack.c.l.b16 %v1863
    %v1992 = vunpack.c.l.b16 %v1864
    %v1993 = vunpack.c.l.b16 %v1865
    %v1994 = vunpack.c.l.b16 %v1866
    %v1995 = vunpack.c.l.b16 %v1867
    %v1996 = vunpack.c.l.b16 %v1868
    %v1997 = vunpack.c.l.b16 %v1869
    %v1998 = vunpack.c.l.b16 %v1870
    %v1999 = vunpack.c.l.b16 %v1871
    %v2000 = vunpack.c.l.b16 %v1872
    %v2001 = vunpack.c.l.b16 %v1873
    %v2002 = vunpack.c.l.b16 %v1874
    %v2003 = vunpack.c.l.b16 %v1875
    %v2004 = vunpack.c.l.b16 %v1876
    %v2005 = vunpack.c.l.b16 %v1877
    %v2006 = vpack.c.b16 %v1943, %v1942
    %v2007 = vpack.c.b16 %v1945, %v1944
    %v2008 = vpack.c.b16 %v1947, %v1946
    %v2009 = vpack.c.b16 %v1949, %v1948
    %v2010 = vpack.c.b16 %v1951, %v1950
    %v2011 = vpack.c.b16 %v1953, %v1952
    %v2012 = vpack.c.b16 %v1955, %v1954
    %v2013 = vpack.c.b16 %v1957, %v1956
    %v2014 = vpack.c.b16 %v1959, %v1958
    %v2015 = vpack.c.b16 %v1961, %v1960
    %v2016 = vpack.c.b16 %v1963, %v1962
    %v2017 = vpack.c.b16 %v1965, %v1964
    %v2018 = vpack.c.b16 %v1967, %v1966
    %v2019 = vpack.c.b16 %v1969, %v1968
    %v2020 = vpack.c.b16 %v1971, %v1970
    %v2021 = vpack.c.b16 %v1973, %v1972
    %v2022 = vpack.c.b16 %v1975, %v1974
    %v2023 = vpack.c.b16 %v1977, %v1976
    %v2024 = vpack.c.b16 %v1979, %v1978
    %v2025 = vpack.c.b16 %v1981, %v1980
    %v2026 = vpack.c.b16 %v1983, %v1982
    %v2027 = vpack.c.b16 %v1985, %v1984
    %v2028 = vpack.c.b16 %v1987, %v1986
    %v2029 = vpack.c.b16 %v1989, %v1988
    %v2030 = vpack.c.b16 %v1991, %v1990
    %v2031 = vpack.c.b16 %v1993, %v1992
    %v2032 = vpack.c.b16 %v1995, %v1994
    %v2033 = vpack.c.b16 %v1997, %v1996
    %v2034 = vpack.c.b16 %v1999, %v1998
    %v2035 = vpack.c.b16 %v2001, %v2000
    %v2036 = vpack.c.b16 %v2003, %v2002
    %v2037 = vpack.c.b16 %v2005, %v2004
    %2070 = vmatpush.bf16.msra.mxu0 %v2013
    %2071 = vmatpush.bf16.msra.mxu0 %v2012
    %2072 = vmatpush.bf16.msra.mxu0 %v2011
    %2073 = vmatpush.bf16.msra.mxu0 %v2010
    %2074 = vmatpush.bf16.msra.mxu0 %v2009
    %2075 = vmatpush.bf16.msra.mxu0 %v2008
    %2076 = vmatpush.bf16.msra.mxu0 %v2007
    %2077 = vmatpush.bf16.msra.mxu0 %v2006
    %2078 = vmatmul.bf16.gmra.mxu0 %v1810
    %v2079 = vpop.f32.mrf.mxu0
    %v2080 = vadd.f32 0.0, %v2079
    %v2081 = vpop.f32.mrf.mxu0
    %2082 = vdwg.mxu0
    %2083 = vmatpush.bf16.msra.mxu0 %v2021
    %2084 = vmatpush.bf16.msra.mxu0 %v2020
    %2085 = vmatpush.bf16.msra.mxu0 %v2019
    %2086 = vmatpush.bf16.msra.mxu0 %v2018
    %2087 = vmatpush.bf16.msra.mxu0 %v2017
    %2088 = vmatpush.bf16.msra.mxu0 %v2016
    %2089 = vmatpush.bf16.msra.mxu0 %v2015
    %2090 = vmatpush.bf16.msra.mxu0 %v2014
    %2091 = vmatmul.bf16.gmra.mxu0 %v1811
    %v2092 = vpop.f32.mrf.mxu0
    %v2093 = vadd.f32 %v2080, %v2092
    %v2094 = vpop.f32.mrf.mxu0
    %2095 = vdwg.mxu0
    %2096 = vmatpush.bf16.msra.mxu0 %v2029
    %2097 = vmatpush.bf16.msra.mxu0 %v2028
    %2098 = vmatpush.bf16.msra.mxu0 %v2027
    %2099 = vmatpush.bf16.msra.mxu0 %v2026
    %2100 = vmatpush.bf16.msra.mxu0 %v2025
    %2101 = vmatpush.bf16.msra.mxu0 %v2024
    %2102 = vmatpush.bf16.msra.mxu0 %v2023
    %2103 = vmatpush.bf16.msra.mxu0 %v2022
    %2104 = vmatmul.bf16.gmra.mxu0 %v1812
    %v2105 = vpop.f32.mrf.mxu0
    %v2106 = vadd.f32 %v2093, %v2105
    %v2107 = vpop.f32.mrf.mxu0
    %2108 = vdwg.mxu0
    %2109 = vmatpush.bf16.msra.mxu0 %v2037
    %2110 = vmatpush.bf16.msra.mxu0 %v2036
    %2111 = vmatpush.bf16.msra.mxu0 %v2035
    %2112 = vmatpush.bf16.msra.mxu0 %v2034
    %2113 = vmatpush.bf16.msra.mxu0 %v2033
    %2114 = vmatpush.bf16.msra.mxu0 %v2032
    %2115 = vmatpush.bf16.msra.mxu0 %v2031
    %2116 = vmatpush.bf16.msra.mxu0 %v2030
    %2117 = vmatmul.bf16.gmra.mxu0 %v1813
    %v2118 = vpop.f32.mrf.mxu0
    %v2119 = vadd.f32 %v2106, %v2118
    %v2120 = vpop.f32.mrf.mxu0
    %2121 = vdwg.mxu0
    %vm2122 = vcmp.gt.f32.partialorder %v2119, 0.5
    %v2123 = vsel %vm2122, 1, 0
    %v2124 = vcvt.s32.f32 %v2123
    %v2125 = vld [vmem:[%s6] sm:$0xff]
    %v2126 = vld [vmem:[%s6 + $0x8] sm:$0xff]
    %v2127 = vld [vmem:[%s6 + $0x10] sm:$0xff]
    %v2128 = vld [vmem:[%s6 + $0x18] sm:$0xff]
    %v2129 = vld [vmem:[%s6 + $0x20] sm:$0xff]
    %v2130 = vld [vmem:[%s6 + $0x28] sm:$0xff]
    %v2131 = vld [vmem:[%s6 + $0x30] sm:$0xff]
    %v2132 = vld [vmem:[%s6 + $0x38] sm:$0xff]
    %v2133 = vld [vmem:[%s6 + $0x40] sm:$0xff]
    %v2134 = vld [vmem:[%s6 + $0x48] sm:$0xff]
    %v2135 = vld [vmem:[%s6 + $0x50] sm:$0xff]
    %v2136 = vld [vmem:[%s6 + $0x58] sm:$0xff]
    %v2137 = vld [vmem:[%s6 + $0x60] sm:$0xff]
    %v2138 = vld [vmem:[%s6 + $0x68] sm:$0xff]
    %v2139 = vld [vmem:[%s6 + $0x70] sm:$0xff]
    %v2140 = vld [vmem:[%s6 + $0x78] sm:$0xff]
    %v2141 = vld [vmem:[%s7] sm:$0x1]
    %v2143 = vperm.slane %v2141, 0
    %2145 = vmatpush.msra.mxu0 %v2140
    %2146 = vmatpush.msra.mxu0 %v2139
    %2147 = vmatpush.msra.mxu0 %v2138
    %2148 = vmatpush.msra.mxu0 %v2137
    %2149 = vmatpush.msra.mxu0 %v2136
    %2150 = vmatpush.msra.mxu0 %v2135
    %2151 = vmatpush.msra.mxu0 %v2134
    %2152 = vmatpush.msra.mxu0 %v2133
    %2153 = vmatpush.msra.mxu0 %v2132
    %2154 = vmatpush.msra.mxu0 %v2131
    %2155 = vmatpush.msra.mxu0 %v2130
    %2156 = vmatpush.msra.mxu0 %v2129
    %2157 = vmatpush.msra.mxu0 %v2128
    %2158 = vmatpush.msra.mxu0 %v2127
    %2159 = vmatpush.msra.mxu0 %v2126
    %2160 = vmatpush.msra.mxu0 %v2125
    %2161 = vmatmul.f32.gmra.mxu0 %v2124
    %v2162 = vpop.f32.mrf.mxu0
    %v2163 = vadd.f32 %v2143, %v2162
    %2164 = vdwg.mxu0
    %v2165 = vmul.f32 %v2163, 0.5
    %v2166 = vadd.f32 %v2165, 0.0
    %vm2167 = vcmp.ge.f32.partialorder %v2166, 1.0
    %v2168 = vsel %vm2167, 1, 0
    %v2169 = vcvt.s32.f32 %v2168
    %v2170 = vsub.f32 1.0, %v2169
    %v2171 = vmul.f32 %v2166, %v2170
    %v2172 = vadd.f32 %v2169, 0.0
    %v2173 = vsub.f32 %v111, %v223
    %v2174 = vsub.f32 %v131, %v224
    %v2175 = vsub.f32 %v151, %v225
    %v2176 = vsub.f32 %v171, %v226
    %v2177 = vsub.f32 %v191, %v227
    %v2178 = vmul.f32 %v2173, 0.5
    %v2179 = vmul.f32 %v2174, 0.5
    %v2180 = vmul.f32 %v2175, 0.5
    %v2181 = vmul.f32 %v2176, 0.5
    %v2182 = vmul.f32 %v2177, 0.5
    %v2183 = vadd.f32 %v223, %v2178
    %v2184 = vadd.f32 %v224, %v2179
    %v2185 = vadd.f32 %v225, %v2180
    %v2186 = vadd.f32 %v226, %v2181
    %v2187 = vadd.f32 %v227, %v2182
    %vm2188 = vcmp.ge.f32.partialorder %v2183, 1.0
    %vm2189 = vcmp.ge.f32.partialorder %v2184, 1.0
    %vm2190 = vcmp.ge.f32.partialorder %v2185, 1.0
    %vm2191 = vcmp.ge.f32.partialorder %v2186, 1.0
    %vm2192 = vcmp.ge.f32.partialorder %v2187, 1.0
    %v2193 = vsel %vm2188, 1, 0
    %v2194 = vsel %vm2189, 1, 0
    %v2195 = vsel %vm2190, 1, 0
    %v2196 = vsel %vm2191, 1, 0
    %v2197 = vsel %vm2192, 1, 0
    %v2198 = vcvt.s32.f32 %v2193
    %v2199 = vcvt.s32.f32 %v2194
    %v2200 = vcvt.s32.f32 %v2195
    %v2201 = vcvt.s32.f32 %v2196
    %v2202 = vcvt.s32.f32 %v2197
    %v2203 = vsub.f32 1.0, %v2198
    %v2204 = vsub.f32 1.0, %v2199
    %v2205 = vsub.f32 1.0, %v2200
    %v2206 = vsub.f32 1.0, %v2201
    %v2207 = vsub.f32 1.0, %v2202
    %v2208 = vmul.f32 %v2183, %v2203
    %v2209 = vmul.f32 %v2184, %v2204
    %v2210 = vmul.f32 %v2185, %v2205
    %v2211 = vmul.f32 %v2186, %v2206
    %v2212 = vmul.f32 %v2187, %v2207
    %v2213 = vpack.c.bf16 %v2198, %v2198
    %v2214 = vpack.c.bf16 %v2199, %v2199
    %v2215 = vpack.c.bf16 %v2200, %v2200
    %v2216 = vpack.c.bf16 %v2201, %v2201
    %v2217 = vpack.c.bf16 %v2202, %v2202
    %v2219 = vsel %vm665, %v2217, 0
    %2221 = vmatpush.bf16.msra.mxu0 %v535
    %2222 = vmatpush.bf16.msra.mxu0 %v533
    %2223 = vmatpush.bf16.msra.mxu0 %v531
    %2224 = vmatpush.bf16.msra.mxu0 %v529
    %2225 = vmatpush.bf16.msra.mxu0 %v527
    %2226 = vmatpush.bf16.msra.mxu0 %v525
    %2227 = vmatpush.bf16.msra.mxu0 %v523
    %2228 = vmatpush.bf16.msra.mxu0 %v521
    %2229 = vmatmul.bf16.gmra.mxu0 %v2213
    %v2230 = vpop.f32.mrf.mxu0
    %v2231 = vadd.f32 0.0, %v2230
    %v2232 = vpop.f32.mrf.mxu0
    %2233 = vdwg.mxu0
    %2234 = vmatpush.bf16.msra.mxu0 %v551
    %2235 = vmatpush.bf16.msra.mxu0 %v549
    %2236 = vmatpush.bf16.msra.mxu0 %v547
    %2237 = vmatpush.bf16.msra.mxu0 %v545
    %2238 = vmatpush.bf16.msra.mxu0 %v543
    %2239 = vmatpush.bf16.msra.mxu0 %v541
    %2240 = vmatpush.bf16.msra.mxu0 %v539
    %2241 = vmatpush.bf16.msra.mxu0 %v537
    %2242 = vmatmul.bf16.gmra.mxu0 %v2214
    %v2243 = vpop.f32.mrf.mxu0
    %v2244 = vadd.f32 %v2231, %v2243
    %v2245 = vpop.f32.mrf.mxu0
    %2246 = vdwg.mxu0
    %2247 = vmatpush.bf16.msra.mxu0 %v567
    %2248 = vmatpush.bf16.msra.mxu0 %v565
    %2249 = vmatpush.bf16.msra.mxu0 %v563
    %2250 = vmatpush.bf16.msra.mxu0 %v561
    %2251 = vmatpush.bf16.msra.mxu0 %v559
    %2252 = vmatpush.bf16.msra.mxu0 %v557
    %2253 = vmatpush.bf16.msra.mxu0 %v555
    %2254 = vmatpush.bf16.msra.mxu0 %v553
    %2255 = vmatmul.bf16.gmra.mxu0 %v2215
    %v2256 = vpop.f32.mrf.mxu0
    %v2257 = vadd.f32 %v2244, %v2256
    %v2258 = vpop.f32.mrf.mxu0
    %2259 = vdwg.mxu0
    %2260 = vmatpush.bf16.msra.mxu0 %v583
    %2261 = vmatpush.bf16.msra.mxu0 %v581
    %2262 = vmatpush.bf16.msra.mxu0 %v579
    %2263 = vmatpush.bf16.msra.mxu0 %v577
    %2264 = vmatpush.bf16.msra.mxu0 %v575
    %2265 = vmatpush.bf16.msra.mxu0 %v573
    %2266 = vmatpush.bf16.msra.mxu0 %v571
    %2267 = vmatpush.bf16.msra.mxu0 %v569
    %2268 = vmatmul.bf16.gmra.mxu0 %v2216
    %v2269 = vpop.f32.mrf.mxu0
    %v2270 = vadd.f32 %v2257, %v2269
    %v2271 = vpop.f32.mrf.mxu0
    %2272 = vdwg.mxu0
    %2273 = vmatpush.bf16.msra.mxu0 0
    %2274 = vmatpush.bf16.msra.mxu0 0
    %2275 = vmatpush.bf16.msra.mxu0 0
    %2276 = vmatpush.bf16.msra.mxu0 0
    %2277 = vmatpush.bf16.msra.mxu0 %v591
    %2278 = vmatpush.bf16.msra.mxu0 %v589
    %2279 = vmatpush.bf16.msra.mxu0 %v587
    %2280 = vmatpush.bf16.msra.mxu0 %v585
    %2281 = vmatmul.bf16.gmra.mxu0 %v2219
    %v2282 = vpop.f32.mrf.mxu0
    %v2283 = vadd.f32 %v2270, %v2282
    %v2284 = vpop.f32.mrf.mxu0
    %2285 = vdwg.mxu0
    %2286 = vmatpush.bf16.msra.mxu0 %v536
    %2287 = vmatpush.bf16.msra.mxu0 %v534
    %2288 = vmatpush.bf16.msra.mxu0 %v532
    %2289 = vmatpush.bf16.msra.mxu0 %v530
    %2290 = vmatpush.bf16.msra.mxu0 %v528
    %2291 = vmatpush.bf16.msra.mxu0 %v526
    %2292 = vmatpush.bf16.msra.mxu0 %v524
    %2293 = vmatpush.bf16.msra.mxu0 %v522
    %2294 = vmatmul.bf16.gmra.mxu0 %v2213
    %v2295 = vpop.f32.mrf.mxu0
    %v2296 = vadd.f32 0.0, %v2295
    %v2297 = vpop.f32.mrf.mxu0
    %2298 = vdwg.mxu0
    %2299 = vmatpush.bf16.msra.mxu0 %v552
    %2300 = vmatpush.bf16.msra.mxu0 %v550
    %2301 = vmatpush.bf16.msra.mxu0 %v548
    %2302 = vmatpush.bf16.msra.mxu0 %v546
    %2303 = vmatpush.bf16.msra.mxu0 %v544
    %2304 = vmatpush.bf16.msra.mxu0 %v542
    %2305 = vmatpush.bf16.msra.mxu0 %v540
    %2306 = vmatpush.bf16.msra.mxu0 %v538
    %2307 = vmatmul.bf16.gmra.mxu0 %v2214
    %v2308 = vpop.f32.mrf.mxu0
    %v2309 = vadd.f32 %v2296, %v2308
    %v2310 = vpop.f32.mrf.mxu0
    %2311 = vdwg.mxu0
    %2312 = vmatpush.bf16.msra.mxu0 %v568
    %2313 = vmatpush.bf16.msra.mxu0 %v566
    %2314 = vmatpush.bf16.msra.mxu0 %v564
    %2315 = vmatpush.bf16.msra.mxu0 %v562
    %2316 = vmatpush.bf16.msra.mxu0 %v560
    %2317 = vmatpush.bf16.msra.mxu0 %v558
    %2318 = vmatpush.bf16.msra.mxu0 %v556
    %2319 = vmatpush.bf16.msra.mxu0 %v554
    %2320 = vmatmul.bf16.gmra.mxu0 %v2215
    %v2321 = vpop.f32.mrf.mxu0
    %v2322 = vadd.f32 %v2309, %v2321
    %v2323 = vpop.f32.mrf.mxu0
    %2324 = vdwg.mxu0
    %2325 = vmatpush.bf16.msra.mxu0 %v584
    %2326 = vmatpush.bf16.msra.mxu0 %v582
    %2327 = vmatpush.bf16.msra.mxu0 %v580
    %2328 = vmatpush.bf16.msra.mxu0 %v578
    %2329 = vmatpush.bf16.msra.mxu0 %v576
    %2330 = vmatpush.bf16.msra.mxu0 %v574
    %2331 = vmatpush.bf16.msra.mxu0 %v572
    %2332 = vmatpush.bf16.msra.mxu0 %v570
    %2333 = vmatmul.bf16.gmra.mxu0 %v2216
    %v2334 = vpop.f32.mrf.mxu0
    %v2335 = vadd.f32 %v2322, %v2334
    %v2336 = vpop.f32.mrf.mxu0
    %2337 = vdwg.mxu0
    %2338 = vmatpush.bf16.msra.mxu0 0
    %2339 = vmatpush.bf16.msra.mxu0 0
    %2340 = vmatpush.bf16.msra.mxu0 0
    %2341 = vmatpush.bf16.msra.mxu0 0
    %2342 = vmatpush.bf16.msra.mxu0 %v592
    %2343 = vmatpush.bf16.msra.mxu0 %v590
    %2344 = vmatpush.bf16.msra.mxu0 %v588
    %2345 = vmatpush.bf16.msra.mxu0 %v586
    %2346 = vmatmul.bf16.gmra.mxu0 %v2219
    %v2347 = vpop.f32.mrf.mxu0
    %v2348 = vadd.f32 %v2335, %v2347
    %v2349 = vpop.f32.mrf.mxu0
    %2350 = vdwg.mxu0
    %vm2351 = vcmp.gt.f32.partialorder %v2283, 0.5
    %vm2352 = vcmp.gt.f32.partialorder %v2348, 0.5
    %v2353 = vsel %vm2351, 1, 0
    %v2354 = vsel %vm2352, 1, 0
    %v2355 = vcvt.s32.f32 %v2353
    %v2356 = vcvt.s32.f32 %v2354
    %v2358 = vsel %vm878, %v2356, 0
    %2360 = vmatpush.msra.mxu0 %v866
    %2361 = vmatpush.msra.mxu0 %v862
    %2362 = vmatpush.msra.mxu0 %v858
    %2363 = vmatpush.msra.mxu0 %v854
    %2364 = vmatpush.msra.mxu0 %v850
    %2365 = vmatpush.msra.mxu0 %v846
    %2366 = vmatpush.msra.mxu0 %v842
    %2367 = vmatpush.msra.mxu0 %v838
    %2368 = vmatpush.msra.mxu0 %v834
    %2369 = vmatpush.msra.mxu0 %v830
    %2370 = vmatpush.msra.mxu0 %v826
    %2371 = vmatpush.msra.mxu0 %v822
    %2372 = vmatpush.msra.mxu0 %v818
    %2373 = vmatpush.msra.mxu0 %v814
    %2374 = vmatpush.msra.mxu0 %v810
    %2375 = vmatpush.msra.mxu0 %v806
    %2376 = vmatmul.f32.gmra.mxu0 %v2355
    %v2377 = vpop.f32.mrf.mxu0
    %v2378 = vadd.f32 0.0, %v2377
    %2379 = vdwg.mxu0
    %2380 = vmatpush.msra.mxu0 0.0
    %2381 = vmatpush.msra.mxu0 0.0
    %2382 = vmatpush.msra.mxu0 0.0
    %2383 = vmatpush.msra.mxu0 0.0
    %2384 = vmatpush.msra.mxu0 0.0
    %2385 = vmatpush.msra.mxu0 0.0
    %2386 = vmatpush.msra.mxu0 0.0
    %2387 = vmatpush.msra.mxu0 0.0
    %2388 = vmatpush.msra.mxu0 0.0
    %2389 = vmatpush.msra.mxu0 0.0
    %2390 = vmatpush.msra.mxu0 0.0
    %2391 = vmatpush.msra.mxu0 0.0
    %2392 = vmatpush.msra.mxu0 0.0
    %2393 = vmatpush.msra.mxu0 0.0
    %2394 = vmatpush.msra.mxu0 %v874
    %2395 = vmatpush.msra.mxu0 %v870
    %2396 = vmatmul.f32.gmra.mxu0 %v2358
    %v2397 = vpop.f32.mrf.mxu0
    %v2398 = vadd.f32 %v2378, %v2397
    %2399 = vdwg.mxu0
    %2400 = vmatpush.msra.mxu0 %v867
    %2401 = vmatpush.msra.mxu0 %v863
    %2402 = vmatpush.msra.mxu0 %v859
    %2403 = vmatpush.msra.mxu0 %v855
    %2404 = vmatpush.msra.mxu0 %v851
    %2405 = vmatpush.msra.mxu0 %v847
    %2406 = vmatpush.msra.mxu0 %v843
    %2407 = vmatpush.msra.mxu0 %v839
    %2408 = vmatpush.msra.mxu0 %v835
    %2409 = vmatpush.msra.mxu0 %v831
    %2410 = vmatpush.msra.mxu0 %v827
    %2411 = vmatpush.msra.mxu0 %v823
    %2412 = vmatpush.msra.mxu0 %v819
    %2413 = vmatpush.msra.mxu0 %v815
    %2414 = vmatpush.msra.mxu0 %v811
    %2415 = vmatpush.msra.mxu0 %v807
    %2416 = vmatmul.f32.gmra.mxu0 %v2355
    %v2417 = vpop.f32.mrf.mxu0
    %v2418 = vadd.f32 0.0, %v2417
    %2419 = vdwg.mxu0
    %2420 = vmatpush.msra.mxu0 0.0
    %2421 = vmatpush.msra.mxu0 0.0
    %2422 = vmatpush.msra.mxu0 0.0
    %2423 = vmatpush.msra.mxu0 0.0
    %2424 = vmatpush.msra.mxu0 0.0
    %2425 = vmatpush.msra.mxu0 0.0
    %2426 = vmatpush.msra.mxu0 0.0
    %2427 = vmatpush.msra.mxu0 0.0
    %2428 = vmatpush.msra.mxu0 0.0
    %2429 = vmatpush.msra.mxu0 0.0
    %2430 = vmatpush.msra.mxu0 0.0
    %2431 = vmatpush.msra.mxu0 0.0
    %2432 = vmatpush.msra.mxu0 0.0
    %2433 = vmatpush.msra.mxu0 0.0
    %2434 = vmatpush.msra.mxu0 %v875
    %2435 = vmatpush.msra.mxu0 %v871
    %2436 = vmatmul.f32.gmra.mxu0 %v2358
    %v2437 = vpop.f32.mrf.mxu0
    %v2438 = vadd.f32 %v2418, %v2437
    %2439 = vdwg.mxu0
    %2440 = vmatpush.msra.mxu0 %v868
    %2441 = vmatpush.msra.mxu0 %v864
    %2442 = vmatpush.msra.mxu0 %v860
    %2443 = vmatpush.msra.mxu0 %v856
    %2444 = vmatpush.msra.mxu0 %v852
    %2445 = vmatpush.msra.mxu0 %v848
    %2446 = vmatpush.msra.mxu0 %v844
    %2447 = vmatpush.msra.mxu0 %v840
    %2448 = vmatpush.msra.mxu0 %v836
    %2449 = vmatpush.msra.mxu0 %v832
    %2450 = vmatpush.msra.mxu0 %v828
    %2451 = vmatpush.msra.mxu0 %v824
    %2452 = vmatpush.msra.mxu0 %v820
    %2453 = vmatpush.msra.mxu0 %v816
    %2454 = vmatpush.msra.mxu0 %v812
    %2455 = vmatpush.msra.mxu0 %v808
    %2456 = vmatmul.f32.gmra.mxu0 %v2355
    %v2457 = vpop.f32.mrf.mxu0
    %v2458 = vadd.f32 0.0, %v2457
    %2459 = vdwg.mxu0
    %2460 = vmatpush.msra.mxu0 0.0
    %2461 = vmatpush.msra.mxu0 0.0
    %2462 = vmatpush.msra.mxu0 0.0
    %2463 = vmatpush.msra.mxu0 0.0
    %2464 = vmatpush.msra.mxu0 0.0
    %2465 = vmatpush.msra.mxu0 0.0
    %2466 = vmatpush.msra.mxu0 0.0
    %2467 = vmatpush.msra.mxu0 0.0
    %2468 = vmatpush.msra.mxu0 0.0
    %2469 = vmatpush.msra.mxu0 0.0
    %2470 = vmatpush.msra.mxu0 0.0
    %2471 = vmatpush.msra.mxu0 0.0
    %2472 = vmatpush.msra.mxu0 0.0
    %2473 = vmatpush.msra.mxu0 0.0
    %2474 = vmatpush.msra.mxu0 %v876
    %2475 = vmatpush.msra.mxu0 %v872
    %2476 = vmatmul.f32.gmra.mxu0 %v2358
    %v2477 = vpop.f32.mrf.mxu0
    %v2478 = vadd.f32 %v2458, %v2477
    %2479 = vdwg.mxu0
    %2480 = vmatpush.msra.mxu0 %v869
    %2481 = vmatpush.msra.mxu0 %v865
    %2482 = vmatpush.msra.mxu0 %v861
    %2483 = vmatpush.msra.mxu0 %v857
    %2484 = vmatpush.msra.mxu0 %v853
    %2485 = vmatpush.msra.mxu0 %v849
    %2486 = vmatpush.msra.mxu0 %v845
    %2487 = vmatpush.msra.mxu0 %v841
    %2488 = vmatpush.msra.mxu0 %v837
    %2489 = vmatpush.msra.mxu0 %v833
    %2490 = vmatpush.msra.mxu0 %v829
    %2491 = vmatpush.msra.mxu0 %v825
    %2492 = vmatpush.msra.mxu0 %v821
    %2493 = vmatpush.msra.mxu0 %v817
    %2494 = vmatpush.msra.mxu0 %v813
    %2495 = vmatpush.msra.mxu0 %v809
    %2496 = vmatmul.f32.gmra.mxu0 %v2355
    %v2497 = vpop.f32.mrf.mxu0
    %v2498 = vadd.f32 0.0, %v2497
    %2499 = vdwg.mxu0
    %2500 = vmatpush.msra.mxu0 0.0
    %2501 = vmatpush.msra.mxu0 0.0
    %2502 = vmatpush.msra.mxu0 0.0
    %2503 = vmatpush.msra.mxu0 0.0
    %2504 = vmatpush.msra.mxu0 0.0
    %2505 = vmatpush.msra.mxu0 0.0
    %2506 = vmatpush.msra.mxu0 0.0
    %2507 = vmatpush.msra.mxu0 0.0
    %2508 = vmatpush.msra.mxu0 0.0
    %2509 = vmatpush.msra.mxu0 0.0
    %2510 = vmatpush.msra.mxu0 0.0
    %2511 = vmatpush.msra.mxu0 0.0
    %2512 = vmatpush.msra.mxu0 0.0
    %2513 = vmatpush.msra.mxu0 0.0
    %2514 = vmatpush.msra.mxu0 %v877
    %2515 = vmatpush.msra.mxu0 %v873
    %2516 = vmatmul.f32.gmra.mxu0 %v2358
    %v2517 = vpop.f32.mrf.mxu0
    %v2518 = vadd.f32 %v2498, %v2517
    %2519 = vdwg.mxu0
    %v2520 = vadd.f32 %v1043, %v2398
    %v2521 = vadd.f32 %v1044, %v2438
    %v2522 = vadd.f32 %v1045, %v2478
    %v2523 = vadd.f32 %v1046, %v2518
    %v2525 = vrot.slane %v2355, 2
    %v2526 = vrot.slane %v2356, 2
    %v2528 = vsel %vm878, %v2526, 0
    %2530 = vmatpush.msra.mxu0 %v1116
    %2531 = vmatpush.msra.mxu0 %v1112
    %2532 = vmatpush.msra.mxu0 %v1108
    %2533 = vmatpush.msra.mxu0 %v1104
    %2534 = vmatpush.msra.mxu0 %v1100
    %2535 = vmatpush.msra.mxu0 %v1096
    %2536 = vmatpush.msra.mxu0 %v1092
    %2537 = vmatpush.msra.mxu0 %v1088
    %2538 = vmatpush.msra.mxu0 %v1084
    %2539 = vmatpush.msra.mxu0 %v1080
    %2540 = vmatpush.msra.mxu0 %v1076
    %2541 = vmatpush.msra.mxu0 %v1072
    %2542 = vmatpush.msra.mxu0 %v1068
    %2543 = vmatpush.msra.mxu0 %v1064
    %2544 = vmatpush.msra.mxu0 %v1060
    %2545 = vmatpush.msra.mxu0 %v1056
    %2546 = vmatmul.f32.gmra.mxu0 %v2525
    %v2547 = vpop.f32.mrf.mxu0
    %v2548 = vadd.f32 0.0, %v2547
    %2549 = vdwg.mxu0
    %2550 = vmatpush.msra.mxu0 0.0
    %2551 = vmatpush.msra.mxu0 0.0
    %2552 = vmatpush.msra.mxu0 0.0
    %2553 = vmatpush.msra.mxu0 0.0
    %2554 = vmatpush.msra.mxu0 0.0
    %2555 = vmatpush.msra.mxu0 0.0
    %2556 = vmatpush.msra.mxu0 0.0
    %2557 = vmatpush.msra.mxu0 0.0
    %2558 = vmatpush.msra.mxu0 0.0
    %2559 = vmatpush.msra.mxu0 0.0
    %2560 = vmatpush.msra.mxu0 0.0
    %2561 = vmatpush.msra.mxu0 0.0
    %2562 = vmatpush.msra.mxu0 0.0
    %2563 = vmatpush.msra.mxu0 0.0
    %2564 = vmatpush.msra.mxu0 %v1124
    %2565 = vmatpush.msra.mxu0 %v1120
    %2566 = vmatmul.f32.gmra.mxu0 %v2528
    %v2567 = vpop.f32.mrf.mxu0
    %v2568 = vadd.f32 %v2548, %v2567
    %2569 = vdwg.mxu0
    %2570 = vmatpush.msra.mxu0 %v1117
    %2571 = vmatpush.msra.mxu0 %v1113
    %2572 = vmatpush.msra.mxu0 %v1109
    %2573 = vmatpush.msra.mxu0 %v1105
    %2574 = vmatpush.msra.mxu0 %v1101
    %2575 = vmatpush.msra.mxu0 %v1097
    %2576 = vmatpush.msra.mxu0 %v1093
    %2577 = vmatpush.msra.mxu0 %v1089
    %2578 = vmatpush.msra.mxu0 %v1085
    %2579 = vmatpush.msra.mxu0 %v1081
    %2580 = vmatpush.msra.mxu0 %v1077
    %2581 = vmatpush.msra.mxu0 %v1073
    %2582 = vmatpush.msra.mxu0 %v1069
    %2583 = vmatpush.msra.mxu0 %v1065
    %2584 = vmatpush.msra.mxu0 %v1061
    %2585 = vmatpush.msra.mxu0 %v1057
    %2586 = vmatmul.f32.gmra.mxu0 %v2525
    %v2587 = vpop.f32.mrf.mxu0
    %v2588 = vadd.f32 0.0, %v2587
    %2589 = vdwg.mxu0
    %2590 = vmatpush.msra.mxu0 0.0
    %2591 = vmatpush.msra.mxu0 0.0
    %2592 = vmatpush.msra.mxu0 0.0
    %2593 = vmatpush.msra.mxu0 0.0
    %2594 = vmatpush.msra.mxu0 0.0
    %2595 = vmatpush.msra.mxu0 0.0
    %2596 = vmatpush.msra.mxu0 0.0
    %2597 = vmatpush.msra.mxu0 0.0
    %2598 = vmatpush.msra.mxu0 0.0
    %2599 = vmatpush.msra.mxu0 0.0
    %2600 = vmatpush.msra.mxu0 0.0
    %2601 = vmatpush.msra.mxu0 0.0
    %2602 = vmatpush.msra.mxu0 0.0
    %2603 = vmatpush.msra.mxu0 0.0
    %2604 = vmatpush.msra.mxu0 %v1125
    %2605 = vmatpush.msra.mxu0 %v1121
    %2606 = vmatmul.f32.gmra.mxu0 %v2528
    %v2607 = vpop.f32.mrf.mxu0
    %v2608 = vadd.f32 %v2588, %v2607
    %2609 = vdwg.mxu0
    %2610 = vmatpush.msra.mxu0 %v1118
    %2611 = vmatpush.msra.mxu0 %v1114
    %2612 = vmatpush.msra.mxu0 %v1110
    %2613 = vmatpush.msra.mxu0 %v1106
    %2614 = vmatpush.msra.mxu0 %v1102
    %2615 = vmatpush.msra.mxu0 %v1098
    %2616 = vmatpush.msra.mxu0 %v1094
    %2617 = vmatpush.msra.mxu0 %v1090
    %2618 = vmatpush.msra.mxu0 %v1086
    %2619 = vmatpush.msra.mxu0 %v1082
    %2620 = vmatpush.msra.mxu0 %v1078
    %2621 = vmatpush.msra.mxu0 %v1074
    %2622 = vmatpush.msra.mxu0 %v1070
    %2623 = vmatpush.msra.mxu0 %v1066
    %2624 = vmatpush.msra.mxu0 %v1062
    %2625 = vmatpush.msra.mxu0 %v1058
    %2626 = vmatmul.f32.gmra.mxu0 %v2525
    %v2627 = vpop.f32.mrf.mxu0
    %v2628 = vadd.f32 0.0, %v2627
    %2629 = vdwg.mxu0
    %2630 = vmatpush.msra.mxu0 0.0
    %2631 = vmatpush.msra.mxu0 0.0
    %2632 = vmatpush.msra.mxu0 0.0
    %2633 = vmatpush.msra.mxu0 0.0
    %2634 = vmatpush.msra.mxu0 0.0
    %2635 = vmatpush.msra.mxu0 0.0
    %2636 = vmatpush.msra.mxu0 0.0
    %2637 = vmatpush.msra.mxu0 0.0
    %2638 = vmatpush.msra.mxu0 0.0
    %2639 = vmatpush.msra.mxu0 0.0
    %2640 = vmatpush.msra.mxu0 0.0
    %2641 = vmatpush.msra.mxu0 0.0
    %2642 = vmatpush.msra.mxu0 0.0
    %2643 = vmatpush.msra.mxu0 0.0
    %2644 = vmatpush.msra.mxu0 %v1126
    %2645 = vmatpush.msra.mxu0 %v1122
    %2646 = vmatmul.f32.gmra.mxu0 %v2528
    %v2647 = vpop.f32.mrf.mxu0
    %v2648 = vadd.f32 %v2628, %v2647
    %2649 = vdwg.mxu0
    %2650 = vmatpush.msra.mxu0 %v1119
    %2651 = vmatpush.msra.mxu0 %v1115
    %2652 = vmatpush.msra.mxu0 %v1111
    %2653 = vmatpush.msra.mxu0 %v1107
    %2654 = vmatpush.msra.mxu0 %v1103
    %2655 = vmatpush.msra.mxu0 %v1099
    %2656 = vmatpush.msra.mxu0 %v1095
    %2657 = vmatpush.msra.mxu0 %v1091
    %2658 = vmatpush.msra.mxu0 %v1087
    %2659 = vmatpush.msra.mxu0 %v1083
    %2660 = vmatpush.msra.mxu0 %v1079
    %2661 = vmatpush.msra.mxu0 %v1075
    %2662 = vmatpush.msra.mxu0 %v1071
    %2663 = vmatpush.msra.mxu0 %v1067
    %2664 = vmatpush.msra.mxu0 %v1063
    %2665 = vmatpush.msra.mxu0 %v1059
    %2666 = vmatmul.f32.gmra.mxu0 %v2525
    %v2667 = vpop.f32.mrf.mxu0
    %v2668 = vadd.f32 0.0, %v2667
    %2669 = vdwg.mxu0
    %2670 = vmatpush.msra.mxu0 0.0
    %2671 = vmatpush.msra.mxu0 0.0
    %2672 = vmatpush.msra.mxu0 0.0
    %2673 = vmatpush.msra.mxu0 0.0
    %2674 = vmatpush.msra.mxu0 0.0
    %2675 = vmatpush.msra.mxu0 0.0
    %2676 = vmatpush.msra.mxu0 0.0
    %2677 = vmatpush.msra.mxu0 0.0
    %2678 = vmatpush.msra.mxu0 0.0
    %2679 = vmatpush.msra.mxu0 0.0
    %2680 = vmatpush.msra.mxu0 0.0
    %2681 = vmatpush.msra.mxu0 0.0
    %2682 = vmatpush.msra.mxu0 0.0
    %2683 = vmatpush.msra.mxu0 0.0
    %2684 = vmatpush.msra.mxu0 %v1127
    %2685 = vmatpush.msra.mxu0 %v1123
    %2686 = vmatmul.f32.gmra.mxu0 %v2528
    %v2687 = vpop.f32.mrf.mxu0
    %v2688 = vadd.f32 %v2668, %v2687
    %2689 = vdwg.mxu0
    %v2690 = vadd.f32 %v2520, %v2568
    %v2691 = vadd.f32 %v2521, %v2608
    %v2692 = vadd.f32 %v2522, %v2648
    %v2693 = vadd.f32 %v2523, %v2688
    %v2694 = vrot.slane %v2355, 4
    %v2695 = vrot.slane %v2356, 4
    %v2697 = vsel %vm878, %v2695, 0
    %2699 = vmatpush.msra.mxu0 %v1359
    %2700 = vmatpush.msra.mxu0 %v1355
    %2701 = vmatpush.msra.mxu0 %v1351
    %2702 = vmatpush.msra.mxu0 %v1347
    %2703 = vmatpush.msra.mxu0 %v1343
    %2704 = vmatpush.msra.mxu0 %v1339
    %2705 = vmatpush.msra.mxu0 %v1335
    %2706 = vmatpush.msra.mxu0 %v1331
    %2707 = vmatpush.msra.mxu0 %v1327
    %2708 = vmatpush.msra.mxu0 %v1323
    %2709 = vmatpush.msra.mxu0 %v1319
    %2710 = vmatpush.msra.mxu0 %v1315
    %2711 = vmatpush.msra.mxu0 %v1311
    %2712 = vmatpush.msra.mxu0 %v1307
    %2713 = vmatpush.msra.mxu0 %v1303
    %2714 = vmatpush.msra.mxu0 %v1299
    %2715 = vmatmul.f32.gmra.mxu0 %v2694
    %v2716 = vpop.f32.mrf.mxu0
    %v2717 = vadd.f32 0.0, %v2716
    %2718 = vdwg.mxu0
    %2719 = vmatpush.msra.mxu0 0.0
    %2720 = vmatpush.msra.mxu0 0.0
    %2721 = vmatpush.msra.mxu0 0.0
    %2722 = vmatpush.msra.mxu0 0.0
    %2723 = vmatpush.msra.mxu0 0.0
    %2724 = vmatpush.msra.mxu0 0.0
    %2725 = vmatpush.msra.mxu0 0.0
    %2726 = vmatpush.msra.mxu0 0.0
    %2727 = vmatpush.msra.mxu0 0.0
    %2728 = vmatpush.msra.mxu0 0.0
    %2729 = vmatpush.msra.mxu0 0.0
    %2730 = vmatpush.msra.mxu0 0.0
    %2731 = vmatpush.msra.mxu0 0.0
    %2732 = vmatpush.msra.mxu0 0.0
    %2733 = vmatpush.msra.mxu0 %v1367
    %2734 = vmatpush.msra.mxu0 %v1363
    %2735 = vmatmul.f32.gmra.mxu0 %v2697
    %v2736 = vpop.f32.mrf.mxu0
    %v2737 = vadd.f32 %v2717, %v2736
    %2738 = vdwg.mxu0
    %2739 = vmatpush.msra.mxu0 %v1360
    %2740 = vmatpush.msra.mxu0 %v1356
    %2741 = vmatpush.msra.mxu0 %v1352
    %2742 = vmatpush.msra.mxu0 %v1348
    %2743 = vmatpush.msra.mxu0 %v1344
    %2744 = vmatpush.msra.mxu0 %v1340
    %2745 = vmatpush.msra.mxu0 %v1336
    %2746 = vmatpush.msra.mxu0 %v1332
    %2747 = vmatpush.msra.mxu0 %v1328
    %2748 = vmatpush.msra.mxu0 %v1324
    %2749 = vmatpush.msra.mxu0 %v1320
    %2750 = vmatpush.msra.mxu0 %v1316
    %2751 = vmatpush.msra.mxu0 %v1312
    %2752 = vmatpush.msra.mxu0 %v1308
    %2753 = vmatpush.msra.mxu0 %v1304
    %2754 = vmatpush.msra.mxu0 %v1300
    %2755 = vmatmul.f32.gmra.mxu0 %v2694
    %v2756 = vpop.f32.mrf.mxu0
    %v2757 = vadd.f32 0.0, %v2756
    %2758 = vdwg.mxu0
    %2759 = vmatpush.msra.mxu0 0.0
    %2760 = vmatpush.msra.mxu0 0.0
    %2761 = vmatpush.msra.mxu0 0.0
    %2762 = vmatpush.msra.mxu0 0.0
    %2763 = vmatpush.msra.mxu0 0.0
    %2764 = vmatpush.msra.mxu0 0.0
    %2765 = vmatpush.msra.mxu0 0.0
    %2766 = vmatpush.msra.mxu0 0.0
    %2767 = vmatpush.msra.mxu0 0.0
    %2768 = vmatpush.msra.mxu0 0.0
    %2769 = vmatpush.msra.mxu0 0.0
    %2770 = vmatpush.msra.mxu0 0.0
    %2771 = vmatpush.msra.mxu0 0.0
    %2772 = vmatpush.msra.mxu0 0.0
    %2773 = vmatpush.msra.mxu0 %v1368
    %2774 = vmatpush.msra.mxu0 %v1364
    %2775 = vmatmul.f32.gmra.mxu0 %v2697
    %v2776 = vpop.f32.mrf.mxu0
    %v2777 = vadd.f32 %v2757, %v2776
    %2778 = vdwg.mxu0
    %2779 = vmatpush.msra.mxu0 %v1361
    %2780 = vmatpush.msra.mxu0 %v1357
    %2781 = vmatpush.msra.mxu0 %v1353
    %2782 = vmatpush.msra.mxu0 %v1349
    %2783 = vmatpush.msra.mxu0 %v1345
    %2784 = vmatpush.msra.mxu0 %v1341
    %2785 = vmatpush.msra.mxu0 %v1337
    %2786 = vmatpush.msra.mxu0 %v1333
    %2787 = vmatpush.msra.mxu0 %v1329
    %2788 = vmatpush.msra.mxu0 %v1325
    %2789 = vmatpush.msra.mxu0 %v1321
    %2790 = vmatpush.msra.mxu0 %v1317
    %2791 = vmatpush.msra.mxu0 %v1313
    %2792 = vmatpush.msra.mxu0 %v1309
    %2793 = vmatpush.msra.mxu0 %v1305
    %2794 = vmatpush.msra.mxu0 %v1301
    %2795 = vmatmul.f32.gmra.mxu0 %v2694
    %v2796 = vpop.f32.mrf.mxu0
    %v2797 = vadd.f32 0.0, %v2796
    %2798 = vdwg.mxu0
    %2799 = vmatpush.msra.mxu0 0.0
    %2800 = vmatpush.msra.mxu0 0.0
    %2801 = vmatpush.msra.mxu0 0.0
    %2802 = vmatpush.msra.mxu0 0.0
    %2803 = vmatpush.msra.mxu0 0.0
    %2804 = vmatpush.msra.mxu0 0.0
    %2805 = vmatpush.msra.mxu0 0.0
    %2806 = vmatpush.msra.mxu0 0.0
    %2807 = vmatpush.msra.mxu0 0.0
    %2808 = vmatpush.msra.mxu0 0.0
    %2809 = vmatpush.msra.mxu0 0.0
    %2810 = vmatpush.msra.mxu0 0.0
    %2811 = vmatpush.msra.mxu0 0.0
    %2812 = vmatpush.msra.mxu0 0.0
    %2813 = vmatpush.msra.mxu0 %v1369
    %2814 = vmatpush.msra.mxu0 %v1365
    %2815 = vmatmul.f32.gmra.mxu0 %v2697
    %v2816 = vpop.f32.mrf.mxu0
    %v2817 = vadd.f32 %v2797, %v2816
    %2818 = vdwg.mxu0
    %2819 = vmatpush.msra.mxu0 %v1362
    %2820 = vmatpush.msra.mxu0 %v1358
    %2821 = vmatpush.msra.mxu0 %v1354
    %2822 = vmatpush.msra.mxu0 %v1350
    %2823 = vmatpush.msra.mxu0 %v1346
    %2824 = vmatpush.msra.mxu0 %v1342
    %2825 = vmatpush.msra.mxu0 %v1338
    %2826 = vmatpush.msra.mxu0 %v1334
    %2827 = vmatpush.msra.mxu0 %v1330
    %2828 = vmatpush.msra.mxu0 %v1326
    %2829 = vmatpush.msra.mxu0 %v1322
    %2830 = vmatpush.msra.mxu0 %v1318
    %2831 = vmatpush.msra.mxu0 %v1314
    %2832 = vmatpush.msra.mxu0 %v1310
    %2833 = vmatpush.msra.mxu0 %v1306
    %2834 = vmatpush.msra.mxu0 %v1302
    %2835 = vmatmul.f32.gmra.mxu0 %v2694
    %v2836 = vpop.f32.mrf.mxu0
    %v2837 = vadd.f32 0.0, %v2836
    %2838 = vdwg.mxu0
    %2839 = vmatpush.msra.mxu0 0.0
    %2840 = vmatpush.msra.mxu0 0.0
    %2841 = vmatpush.msra.mxu0 0.0
    %2842 = vmatpush.msra.mxu0 0.0
    %2843 = vmatpush.msra.mxu0 0.0
    %2844 = vmatpush.msra.mxu0 0.0
    %2845 = vmatpush.msra.mxu0 0.0
    %2846 = vmatpush.msra.mxu0 0.0
    %2847 = vmatpush.msra.mxu0 0.0
    %2848 = vmatpush.msra.mxu0 0.0
    %2849 = vmatpush.msra.mxu0 0.0
    %2850 = vmatpush.msra.mxu0 0.0
    %2851 = vmatpush.msra.mxu0 0.0
    %2852 = vmatpush.msra.mxu0 0.0
    %2853 = vmatpush.msra.mxu0 %v1370
    %2854 = vmatpush.msra.mxu0 %v1366
    %2855 = vmatmul.f32.gmra.mxu0 %v2697
    %v2856 = vpop.f32.mrf.mxu0
    %v2857 = vadd.f32 %v2837, %v2856
    %2858 = vdwg.mxu0
    %v2859 = vadd.f32 %v2690, %v2737
    %v2860 = vadd.f32 %v2691, %v2777
    %v2861 = vadd.f32 %v2692, %v2817
    %v2862 = vadd.f32 %v2693, %v2857
    %v2863 = vrot.slane %v2355, 6
    %v2864 = vrot.slane %v2356, 6
    %v2866 = vsel %vm878, %v2864, 0
    %2868 = vmatpush.msra.mxu0 %v1601
    %2869 = vmatpush.msra.mxu0 %v1597
    %2870 = vmatpush.msra.mxu0 %v1593
    %2871 = vmatpush.msra.mxu0 %v1589
    %2872 = vmatpush.msra.mxu0 %v1585
    %2873 = vmatpush.msra.mxu0 %v1581
    %2874 = vmatpush.msra.mxu0 %v1577
    %2875 = vmatpush.msra.mxu0 %v1573
    %2876 = vmatpush.msra.mxu0 %v1569
    %2877 = vmatpush.msra.mxu0 %v1565
    %2878 = vmatpush.msra.mxu0 %v1561
    %2879 = vmatpush.msra.mxu0 %v1557
    %2880 = vmatpush.msra.mxu0 %v1553
    %2881 = vmatpush.msra.mxu0 %v1549
    %2882 = vmatpush.msra.mxu0 %v1545
    %2883 = vmatpush.msra.mxu0 %v1541
    %2884 = vmatmul.f32.gmra.mxu0 %v2863
    %v2885 = vpop.f32.mrf.mxu0
    %v2886 = vadd.f32 0.0, %v2885
    %2887 = vdwg.mxu0
    %2888 = vmatpush.msra.mxu0 0.0
    %2889 = vmatpush.msra.mxu0 0.0
    %2890 = vmatpush.msra.mxu0 0.0
    %2891 = vmatpush.msra.mxu0 0.0
    %2892 = vmatpush.msra.mxu0 0.0
    %2893 = vmatpush.msra.mxu0 0.0
    %2894 = vmatpush.msra.mxu0 0.0
    %2895 = vmatpush.msra.mxu0 0.0
    %2896 = vmatpush.msra.mxu0 0.0
    %2897 = vmatpush.msra.mxu0 0.0
    %2898 = vmatpush.msra.mxu0 0.0
    %2899 = vmatpush.msra.mxu0 0.0
    %2900 = vmatpush.msra.mxu0 0.0
    %2901 = vmatpush.msra.mxu0 0.0
    %2902 = vmatpush.msra.mxu0 %v1609
    %2903 = vmatpush.msra.mxu0 %v1605
    %2904 = vmatmul.f32.gmra.mxu0 %v2866
    %v2905 = vpop.f32.mrf.mxu0
    %v2906 = vadd.f32 %v2886, %v2905
    %2907 = vdwg.mxu0
    %2908 = vmatpush.msra.mxu0 %v1602
    %2909 = vmatpush.msra.mxu0 %v1598
    %2910 = vmatpush.msra.mxu0 %v1594
    %2911 = vmatpush.msra.mxu0 %v1590
    %2912 = vmatpush.msra.mxu0 %v1586
    %2913 = vmatpush.msra.mxu0 %v1582
    %2914 = vmatpush.msra.mxu0 %v1578
    %2915 = vmatpush.msra.mxu0 %v1574
    %2916 = vmatpush.msra.mxu0 %v1570
    %2917 = vmatpush.msra.mxu0 %v1566
    %2918 = vmatpush.msra.mxu0 %v1562
    %2919 = vmatpush.msra.mxu0 %v1558
    %2920 = vmatpush.msra.mxu0 %v1554
    %2921 = vmatpush.msra.mxu0 %v1550
    %2922 = vmatpush.msra.mxu0 %v1546
    %2923 = vmatpush.msra.mxu0 %v1542
    %2924 = vmatmul.f32.gmra.mxu0 %v2863
    %v2925 = vpop.f32.mrf.mxu0
    %v2926 = vadd.f32 0.0, %v2925
    %2927 = vdwg.mxu0
    %2928 = vmatpush.msra.mxu0 0.0
    %2929 = vmatpush.msra.mxu0 0.0
    %2930 = vmatpush.msra.mxu0 0.0
    %2931 = vmatpush.msra.mxu0 0.0
    %2932 = vmatpush.msra.mxu0 0.0
    %2933 = vmatpush.msra.mxu0 0.0
    %2934 = vmatpush.msra.mxu0 0.0
    %2935 = vmatpush.msra.mxu0 0.0
    %2936 = vmatpush.msra.mxu0 0.0
    %2937 = vmatpush.msra.mxu0 0.0
    %2938 = vmatpush.msra.mxu0 0.0
    %2939 = vmatpush.msra.mxu0 0.0
    %2940 = vmatpush.msra.mxu0 0.0
    %2941 = vmatpush.msra.mxu0 0.0
    %2942 = vmatpush.msra.mxu0 %v1610
    %2943 = vmatpush.msra.mxu0 %v1606
    %2944 = vmatmul.f32.gmra.mxu0 %v2866
    %v2945 = vpop.f32.mrf.mxu0
    %v2946 = vadd.f32 %v2926, %v2945
    %2947 = vdwg.mxu0
    %2948 = vmatpush.msra.mxu0 %v1603
    %2949 = vmatpush.msra.mxu0 %v1599
    %2950 = vmatpush.msra.mxu0 %v1595
    %2951 = vmatpush.msra.mxu0 %v1591
    %2952 = vmatpush.msra.mxu0 %v1587
    %2953 = vmatpush.msra.mxu0 %v1583
    %2954 = vmatpush.msra.mxu0 %v1579
    %2955 = vmatpush.msra.mxu0 %v1575
    %2956 = vmatpush.msra.mxu0 %v1571
    %2957 = vmatpush.msra.mxu0 %v1567
    %2958 = vmatpush.msra.mxu0 %v1563
    %2959 = vmatpush.msra.mxu0 %v1559
    %2960 = vmatpush.msra.mxu0 %v1555
    %2961 = vmatpush.msra.mxu0 %v1551
    %2962 = vmatpush.msra.mxu0 %v1547
    %2963 = vmatpush.msra.mxu0 %v1543
    %2964 = vmatmul.f32.gmra.mxu0 %v2863
    %v2965 = vpop.f32.mrf.mxu0
    %v2966 = vadd.f32 0.0, %v2965
    %2967 = vdwg.mxu0
    %2968 = vmatpush.msra.mxu0 0.0
    %2969 = vmatpush.msra.mxu0 0.0
    %2970 = vmatpush.msra.mxu0 0.0
    %2971 = vmatpush.msra.mxu0 0.0
    %2972 = vmatpush.msra.mxu0 0.0
    %2973 = vmatpush.msra.mxu0 0.0
    %2974 = vmatpush.msra.mxu0 0.0
    %2975 = vmatpush.msra.mxu0 0.0
    %2976 = vmatpush.msra.mxu0 0.0
    %2977 = vmatpush.msra.mxu0 0.0
    %2978 = vmatpush.msra.mxu0 0.0
    %2979 = vmatpush.msra.mxu0 0.0
    %2980 = vmatpush.msra.mxu0 0.0
    %2981 = vmatpush.msra.mxu0 0.0
    %2982 = vmatpush.msra.mxu0 %v1611
    %2983 = vmatpush.msra.mxu0 %v1607
    %2984 = vmatmul.f32.gmra.mxu0 %v2866
    %v2985 = vpop.f32.mrf.mxu0
    %v2986 = vadd.f32 %v2966, %v2985
    %2987 = vdwg.mxu0
    %2988 = vmatpush.msra.mxu0 %v1604
    %2989 = vmatpush.msra.mxu0 %v1600
    %2990 = vmatpush.msra.mxu0 %v1596
    %2991 = vmatpush.msra.mxu0 %v1592
    %2992 = vmatpush.msra.mxu0 %v1588
    %2993 = vmatpush.msra.mxu0 %v1584
    %2994 = vmatpush.msra.mxu0 %v1580
    %2995 = vmatpush.msra.mxu0 %v1576
    %2996 = vmatpush.msra.mxu0 %v1572
    %2997 = vmatpush.msra.mxu0 %v1568
    %2998 = vmatpush.msra.mxu0 %v1564
    %2999 = vmatpush.msra.mxu0 %v1560
    %3000 = vmatpush.msra.mxu0 %v1556
    %3001 = vmatpush.msra.mxu0 %v1552
    %3002 = vmatpush.msra.mxu0 %v1548
    %3003 = vmatpush.msra.mxu0 %v1544
    %3004 = vmatmul.f32.gmra.mxu0 %v2863
    %v3005 = vpop.f32.mrf.mxu0
    %v3006 = vadd.f32 0.0, %v3005
    %3007 = vdwg.mxu0
    %3008 = vmatpush.msra.mxu0 0.0
    %3009 = vmatpush.msra.mxu0 0.0
    %3010 = vmatpush.msra.mxu0 0.0
    %3011 = vmatpush.msra.mxu0 0.0
    %3012 = vmatpush.msra.mxu0 0.0
    %3013 = vmatpush.msra.mxu0 0.0
    %3014 = vmatpush.msra.mxu0 0.0
    %3015 = vmatpush.msra.mxu0 0.0
    %3016 = vmatpush.msra.mxu0 0.0
    %3017 = vmatpush.msra.mxu0 0.0
    %3018 = vmatpush.msra.mxu0 0.0
    %3019 = vmatpush.msra.mxu0 0.0
    %3020 = vmatpush.msra.mxu0 0.0
    %3021 = vmatpush.msra.mxu0 0.0
    %3022 = vmatpush.msra.mxu0 %v1612
    %3023 = vmatpush.msra.mxu0 %v1608
    %3024 = vmatmul.f32.gmra.mxu0 %v2866
    %v3025 = vpop.f32.mrf.mxu0
    %v3026 = vadd.f32 %v3006, %v3025
    %3027 = vdwg.mxu0
    %v3028 = vadd.f32 %v2859, %v2906
    %v3029 = vadd.f32 %v2860, %v2946
    %v3030 = vadd.f32 %v2861, %v2986
    %v3031 = vadd.f32 %v2862, %v3026
    %v3032 = vsub.f32 %v3028, %v1806
    %v3033 = vsub.f32 %v3029, %v1807
    %v3034 = vsub.f32 %v3030, %v1808
    %v3035 = vsub.f32 %v3031, %v1809
    %v3036 = vmul.f32 %v3032, 0.5
    %v3037 = vmul.f32 %v3033, 0.5
    %v3038 = vmul.f32 %v3034, 0.5
    %v3039 = vmul.f32 %v3035, 0.5
    %v3040 = vadd.f32 %v1806, %v3036
    %v3041 = vadd.f32 %v1807, %v3037
    %v3042 = vadd.f32 %v1808, %v3038
    %v3043 = vadd.f32 %v1809, %v3039
    %vm3044 = vcmp.ge.f32.partialorder %v3040, 1.0
    %vm3045 = vcmp.ge.f32.partialorder %v3041, 1.0
    %vm3046 = vcmp.ge.f32.partialorder %v3042, 1.0
    %vm3047 = vcmp.ge.f32.partialorder %v3043, 1.0
    %v3048 = vsel %vm3044, 1, 0
    %v3049 = vsel %vm3045, 1, 0
    %v3050 = vsel %vm3046, 1, 0
    %v3051 = vsel %vm3047, 1, 0
    %v3052 = vcvt.s32.f32 %v3048
    %v3053 = vcvt.s32.f32 %v3049
    %v3054 = vcvt.s32.f32 %v3050
    %v3055 = vcvt.s32.f32 %v3051
    %v3056 = vsub.f32 1.0, %v3052
    %v3057 = vsub.f32 1.0, %v3053
    %v3058 = vsub.f32 1.0, %v3054
    %v3059 = vsub.f32 1.0, %v3055
    %v3060 = vmul.f32 %v3040, %v3056
    %v3061 = vmul.f32 %v3041, %v3057
    %v3062 = vmul.f32 %v3042, %v3058
    %v3063 = vmul.f32 %v3043, %v3059
    %v3064 = vpack.c.bf16 %v3052, %v3052
    %v3065 = vpack.c.bf16 %v3053, %v3053
    %v3066 = vpack.c.bf16 %v3054, %v3054
    %v3067 = vpack.c.bf16 %v3055, %v3055
    %3068 = vmatpush.bf16.msra.mxu0 %v2013
    %3069 = vmatpush.bf16.msra.mxu0 %v2012
    %3070 = vmatpush.bf16.msra.mxu0 %v2011
    %3071 = vmatpush.bf16.msra.mxu0 %v2010
    %3072 = vmatpush.bf16.msra.mxu0 %v2009
    %3073 = vmatpush.bf16.msra.mxu0 %v2008
    %3074 = vmatpush.bf16.msra.mxu0 %v2007
    %3075 = vmatpush.bf16.msra.mxu0 %v2006
    %3076 = vmatmul.bf16.gmra.mxu0 %v3064
    %v3077 = vpop.f32.mrf.mxu0
    %v3078 = vadd.f32 0.0, %v3077
    %v3079 = vpop.f32.mrf.mxu0
    %3080 = vdwg.mxu0
    %3081 = vmatpush.bf16.msra.mxu0 %v2021
    %3082 = vmatpush.bf16.msra.mxu0 %v2020
    %3083 = vmatpush.bf16.msra.mxu0 %v2019
    %3084 = vmatpush.bf16.msra.mxu0 %v2018
    %3085 = vmatpush.bf16.msra.mxu0 %v2017
    %3086 = vmatpush.bf16.msra.mxu0 %v2016
    %3087 = vmatpush.bf16.msra.mxu0 %v2015
    %3088 = vmatpush.bf16.msra.mxu0 %v2014
    %3089 = vmatmul.bf16.gmra.mxu0 %v3065
    %v3090 = vpop.f32.mrf.mxu0
    %v3091 = vadd.f32 %v3078, %v3090
    %v3092 = vpop.f32.mrf.mxu0
    %3093 = vdwg.mxu0
    %3094 = vmatpush.bf16.msra.mxu0 %v2029
    %3095 = vmatpush.bf16.msra.mxu0 %v2028
    %3096 = vmatpush.bf16.msra.mxu0 %v2027
    %3097 = vmatpush.bf16.msra.mxu0 %v2026
    %3098 = vmatpush.bf16.msra.mxu0 %v2025
    %3099 = vmatpush.bf16.msra.mxu0 %v2024
    %3100 = vmatpush.bf16.msra.mxu0 %v2023
    %3101 = vmatpush.bf16.msra.mxu0 %v2022
    %3102 = vmatmul.bf16.gmra.mxu0 %v3066
    %v3103 = vpop.f32.mrf.mxu0
    %v3104 = vadd.f32 %v3091, %v3103
    %v3105 = vpop.f32.mrf.mxu0
    %3106 = vdwg.mxu0
    %3107 = vmatpush.bf16.msra.mxu0 %v2037
    %3108 = vmatpush.bf16.msra.mxu0 %v2036
    %3109 = vmatpush.bf16.msra.mxu0 %v2035
    %3110 = vmatpush.bf16.msra.mxu0 %v2034
    %3111 = vmatpush.bf16.msra.mxu0 %v2033
    %3112 = vmatpush.bf16.msra.mxu0 %v2032
    %3113 = vmatpush.bf16.msra.mxu0 %v2031
    %3114 = vmatpush.bf16.msra.mxu0 %v2030
    %3115 = vmatmul.bf16.gmra.mxu0 %v3067
    %v3116 = vpop.f32.mrf.mxu0
    %v3117 = vadd.f32 %v3104, %v3116
    %v3118 = vpop.f32.mrf.mxu0
    %3119 = vdwg.mxu0
    %vm3120 = vcmp.gt.f32.partialorder %v3117, 0.5
    %v3121 = vsel %vm3120, 1, 0
    %v3122 = vcvt.s32.f32 %v3121
    %3123 = vmatpush.msra.mxu0 %v2140
    %3124 = vmatpush.msra.mxu0 %v2139
    %3125 = vmatpush.msra.mxu0 %v2138
    %3126 = vmatpush.msra.mxu0 %v2137
    %3127 = vmatpush.msra.mxu0 %v2136
    %3128 = vmatpush.msra.mxu0 %v2135
    %3129 = vmatpush.msra.mxu0 %v2134
    %3130 = vmatpush.msra.mxu0 %v2133
    %3131 = vmatpush.msra.mxu0 %v2132
    %3132 = vmatpush.msra.mxu0 %v2131
    %3133 = vmatpush.msra.mxu0 %v2130
    %3134 = vmatpush.msra.mxu0 %v2129
    %3135 = vmatpush.msra.mxu0 %v2128
    %3136 = vmatpush.msra.mxu0 %v2127
    %3137 = vmatpush.msra.mxu0 %v2126
    %3138 = vmatpush.msra.mxu0 %v2125
    %3139 = vmatmul.f32.gmra.mxu0 %v3122
    %v3140 = vpop.f32.mrf.mxu0
    %v3141 = vadd.f32 %v2143, %v3140
    %3142 = vdwg.mxu0
    %v3143 = vsub.f32 %v3141, %v2171
    %v3144 = vmul.f32 %v3143, 0.5
    %v3145 = vadd.f32 %v2171, %v3144
    %vm3146 = vcmp.ge.f32.partialorder %v3145, 1.0
    %v3147 = vsel %vm3146, 1, 0
    %v3148 = vcvt.s32.f32 %v3147
    %v3149 = vsub.f32 1.0, %v3148
    %v3150 = vmul.f32 %v3145, %v3149
    %v3151 = vadd.f32 %v2172, %v3148
    %v3152 = vsub.f32 %v111, %v2208
    %v3153 = vsub.f32 %v131, %v2209
    %v3154 = vsub.f32 %v151, %v2210
    %v3155 = vsub.f32 %v171, %v2211
    %v3156 = vsub.f32 %v191, %v2212
    %v3157 = vmul.f32 %v3152, 0.5
    %v3158 = vmul.f32 %v3153, 0.5
    %v3159 = vmul.f32 %v3154, 0.5
    %v3160 = vmul.f32 %v3155, 0.5
    %v3161 = vmul.f32 %v3156, 0.5
    %v3162 = vadd.f32 %v2208, %v3157
    %v3163 = vadd.f32 %v2209, %v3158
    %v3164 = vadd.f32 %v2210, %v3159
    %v3165 = vadd.f32 %v2211, %v3160
    %v3166 = vadd.f32 %v2212, %v3161
    %vm3167 = vcmp.ge.f32.partialorder %v3162, 1.0
    %vm3168 = vcmp.ge.f32.partialorder %v3163, 1.0
    %vm3169 = vcmp.ge.f32.partialorder %v3164, 1.0
    %vm3170 = vcmp.ge.f32.partialorder %v3165, 1.0
    %vm3171 = vcmp.ge.f32.partialorder %v3166, 1.0
    %v3172 = vsel %vm3167, 1, 0
    %v3173 = vsel %vm3168, 1, 0
    %v3174 = vsel %vm3169, 1, 0
    %v3175 = vsel %vm3170, 1, 0
    %v3176 = vsel %vm3171, 1, 0
    %v3177 = vcvt.s32.f32 %v3172
    %v3178 = vcvt.s32.f32 %v3173
    %v3179 = vcvt.s32.f32 %v3174
    %v3180 = vcvt.s32.f32 %v3175
    %v3181 = vcvt.s32.f32 %v3176
    %v3182 = vsub.f32 1.0, %v3177
    %v3183 = vsub.f32 1.0, %v3178
    %v3184 = vsub.f32 1.0, %v3179
    %v3185 = vsub.f32 1.0, %v3180
    %v3186 = vsub.f32 1.0, %v3181
    %v3187 = vmul.f32 %v3162, %v3182
    %v3188 = vmul.f32 %v3163, %v3183
    %v3189 = vmul.f32 %v3164, %v3184
    %v3190 = vmul.f32 %v3165, %v3185
    %v3191 = vmul.f32 %v3166, %v3186
    %v3192 = vpack.c.bf16 %v3177, %v3177
    %v3193 = vpack.c.bf16 %v3178, %v3178
    %v3194 = vpack.c.bf16 %v3179, %v3179
    %v3195 = vpack.c.bf16 %v3180, %v3180
    %v3196 = vpack.c.bf16 %v3181, %v3181
    %v3198 = vsel %vm665, %v3196, 0
    %3200 = vmatpush.bf16.msra.mxu0 %v535
    %3201 = vmatpush.bf16.msra.mxu0 %v533
    %3202 = vmatpush.bf16.msra.mxu0 %v531
    %3203 = vmatpush.bf16.msra.mxu0 %v529
    %3204 = vmatpush.bf16.msra.mxu0 %v527
    %3205 = vmatpush.bf16.msra.mxu0 %v525
    %3206 = vmatpush.bf16.msra.mxu0 %v523
    %3207 = vmatpush.bf16.msra.mxu0 %v521
    %3208 = vmatmul.bf16.gmra.mxu0 %v3192
    %v3209 = vpop.f32.mrf.mxu0
    %v3210 = vadd.f32 0.0, %v3209
    %v3211 = vpop.f32.mrf.mxu0
    %3212 = vdwg.mxu0
    %3213 = vmatpush.bf16.msra.mxu0 %v551
    %3214 = vmatpush.bf16.msra.mxu0 %v549
    %3215 = vmatpush.bf16.msra.mxu0 %v547
    %3216 = vmatpush.bf16.msra.mxu0 %v545
    %3217 = vmatpush.bf16.msra.mxu0 %v543
    %3218 = vmatpush.bf16.msra.mxu0 %v541
    %3219 = vmatpush.bf16.msra.mxu0 %v539
    %3220 = vmatpush.bf16.msra.mxu0 %v537
    %3221 = vmatmul.bf16.gmra.mxu0 %v3193
    %v3222 = vpop.f32.mrf.mxu0
    %v3223 = vadd.f32 %v3210, %v3222
    %v3224 = vpop.f32.mrf.mxu0
    %3225 = vdwg.mxu0
    %3226 = vmatpush.bf16.msra.mxu0 %v567
    %3227 = vmatpush.bf16.msra.mxu0 %v565
    %3228 = vmatpush.bf16.msra.mxu0 %v563
    %3229 = vmatpush.bf16.msra.mxu0 %v561
    %3230 = vmatpush.bf16.msra.mxu0 %v559
    %3231 = vmatpush.bf16.msra.mxu0 %v557
    %3232 = vmatpush.bf16.msra.mxu0 %v555
    %3233 = vmatpush.bf16.msra.mxu0 %v553
    %3234 = vmatmul.bf16.gmra.mxu0 %v3194
    %v3235 = vpop.f32.mrf.mxu0
    %v3236 = vadd.f32 %v3223, %v3235
    %v3237 = vpop.f32.mrf.mxu0
    %3238 = vdwg.mxu0
    %3239 = vmatpush.bf16.msra.mxu0 %v583
    %3240 = vmatpush.bf16.msra.mxu0 %v581
    %3241 = vmatpush.bf16.msra.mxu0 %v579
    %3242 = vmatpush.bf16.msra.mxu0 %v577
    %3243 = vmatpush.bf16.msra.mxu0 %v575
    %3244 = vmatpush.bf16.msra.mxu0 %v573
    %3245 = vmatpush.bf16.msra.mxu0 %v571
    %3246 = vmatpush.bf16.msra.mxu0 %v569
    %3247 = vmatmul.bf16.gmra.mxu0 %v3195
    %v3248 = vpop.f32.mrf.mxu0
    %v3249 = vadd.f32 %v3236, %v3248
    %v3250 = vpop.f32.mrf.mxu0
    %3251 = vdwg.mxu0
    %3252 = vmatpush.bf16.msra.mxu0 0
    %3253 = vmatpush.bf16.msra.mxu0 0
    %3254 = vmatpush.bf16.msra.mxu0 0
    %3255 = vmatpush.bf16.msra.mxu0 0
    %3256 = vmatpush.bf16.msra.mxu0 %v591
    %3257 = vmatpush.bf16.msra.mxu0 %v589
    %3258 = vmatpush.bf16.msra.mxu0 %v587
    %3259 = vmatpush.bf16.msra.mxu0 %v585
    %3260 = vmatmul.bf16.gmra.mxu0 %v3198
    %v3261 = vpop.f32.mrf.mxu0
    %v3262 = vadd.f32 %v3249, %v3261
    %v3263 = vpop.f32.mrf.mxu0
    %3264 = vdwg.mxu0
    %3265 = vmatpush.bf16.msra.mxu0 %v536
    %3266 = vmatpush.bf16.msra.mxu0 %v534
    %3267 = vmatpush.bf16.msra.mxu0 %v532
    %3268 = vmatpush.bf16.msra.mxu0 %v530
    %3269 = vmatpush.bf16.msra.mxu0 %v528
    %3270 = vmatpush.bf16.msra.mxu0 %v526
    %3271 = vmatpush.bf16.msra.mxu0 %v524
    %3272 = vmatpush.bf16.msra.mxu0 %v522
    %3273 = vmatmul.bf16.gmra.mxu0 %v3192
    %v3274 = vpop.f32.mrf.mxu0
    %v3275 = vadd.f32 0.0, %v3274
    %v3276 = vpop.f32.mrf.mxu0
    %3277 = vdwg.mxu0
    %3278 = vmatpush.bf16.msra.mxu0 %v552
    %3279 = vmatpush.bf16.msra.mxu0 %v550
    %3280 = vmatpush.bf16.msra.mxu0 %v548
    %3281 = vmatpush.bf16.msra.mxu0 %v546
    %3282 = vmatpush.bf16.msra.mxu0 %v544
    %3283 = vmatpush.bf16.msra.mxu0 %v542
    %3284 = vmatpush.bf16.msra.mxu0 %v540
    %3285 = vmatpush.bf16.msra.mxu0 %v538
    %3286 = vmatmul.bf16.gmra.mxu0 %v3193
    %v3287 = vpop.f32.mrf.mxu0
    %v3288 = vadd.f32 %v3275, %v3287
    %v3289 = vpop.f32.mrf.mxu0
    %3290 = vdwg.mxu0
    %3291 = vmatpush.bf16.msra.mxu0 %v568
    %3292 = vmatpush.bf16.msra.mxu0 %v566
    %3293 = vmatpush.bf16.msra.mxu0 %v564
    %3294 = vmatpush.bf16.msra.mxu0 %v562
    %3295 = vmatpush.bf16.msra.mxu0 %v560
    %3296 = vmatpush.bf16.msra.mxu0 %v558
    %3297 = vmatpush.bf16.msra.mxu0 %v556
    %3298 = vmatpush.bf16.msra.mxu0 %v554
    %3299 = vmatmul.bf16.gmra.mxu0 %v3194
    %v3300 = vpop.f32.mrf.mxu0
    %v3301 = vadd.f32 %v3288, %v3300
    %v3302 = vpop.f32.mrf.mxu0
    %3303 = vdwg.mxu0
    %3304 = vmatpush.bf16.msra.mxu0 %v584
    %3305 = vmatpush.bf16.msra.mxu0 %v582
    %3306 = vmatpush.bf16.msra.mxu0 %v580
    %3307 = vmatpush.bf16.msra.mxu0 %v578
    %3308 = vmatpush.bf16.msra.mxu0 %v576
    %3309 = vmatpush.bf16.msra.mxu0 %v574
    %3310 = vmatpush.bf16.msra.mxu0 %v572
    %3311 = vmatpush.bf16.msra.mxu0 %v570
    %3312 = vmatmul.bf16.gmra.mxu0 %v3195
    %v3313 = vpop.f32.mrf.mxu0
    %v3314 = vadd.f32 %v3301, %v3313
    %v3315 = vpop.f32.mrf.mxu0
    %3316 = vdwg.mxu0
    %3317 = vmatpush.bf16.msra.mxu0 0
    %3318 = vmatpush.bf16.msra.mxu0 0
    %3319 = vmatpush.bf16.msra.mxu0 0
    %3320 = vmatpush.bf16.msra.mxu0 0
    %3321 = vmatpush.bf16.msra.mxu0 %v592
    %3322 = vmatpush.bf16.msra.mxu0 %v590
    %3323 = vmatpush.bf16.msra.mxu0 %v588
    %3324 = vmatpush.bf16.msra.mxu0 %v586
    %3325 = vmatmul.bf16.gmra.mxu0 %v3198
    %v3326 = vpop.f32.mrf.mxu0
    %v3327 = vadd.f32 %v3314, %v3326
    %v3328 = vpop.f32.mrf.mxu0
    %3329 = vdwg.mxu0
    %vm3330 = vcmp.gt.f32.partialorder %v3262, 0.5
    %vm3331 = vcmp.gt.f32.partialorder %v3327, 0.5
    %v3332 = vsel %vm3330, 1, 0
    %v3333 = vsel %vm3331, 1, 0
    %v3334 = vcvt.s32.f32 %v3332
    %v3335 = vcvt.s32.f32 %v3333
    %v3337 = vsel %vm878, %v3335, 0
    %3339 = vmatpush.msra.mxu0 %v866
    %3340 = vmatpush.msra.mxu0 %v862
    %3341 = vmatpush.msra.mxu0 %v858
    %3342 = vmatpush.msra.mxu0 %v854
    %3343 = vmatpush.msra.mxu0 %v850
    %3344 = vmatpush.msra.mxu0 %v846
    %3345 = vmatpush.msra.mxu0 %v842
    %3346 = vmatpush.msra.mxu0 %v838
    %3347 = vmatpush.msra.mxu0 %v834
    %3348 = vmatpush.msra.mxu0 %v830
    %3349 = vmatpush.msra.mxu0 %v826
    %3350 = vmatpush.msra.mxu0 %v822
    %3351 = vmatpush.msra.mxu0 %v818
    %3352 = vmatpush.msra.mxu0 %v814
    %3353 = vmatpush.msra.mxu0 %v810
    %3354 = vmatpush.msra.mxu0 %v806
    %3355 = vmatmul.f32.gmra.mxu0 %v3334
    %v3356 = vpop.f32.mrf.mxu0
    %v3357 = vadd.f32 0.0, %v3356
    %3358 = vdwg.mxu0
    %3359 = vmatpush.msra.mxu0 0.0
    %3360 = vmatpush.msra.mxu0 0.0
    %3361 = vmatpush.msra.mxu0 0.0
    %3362 = vmatpush.msra.mxu0 0.0
    %3363 = vmatpush.msra.mxu0 0.0
    %3364 = vmatpush.msra.mxu0 0.0
    %3365 = vmatpush.msra.mxu0 0.0
    %3366 = vmatpush.msra.mxu0 0.0
    %3367 = vmatpush.msra.mxu0 0.0
    %3368 = vmatpush.msra.mxu0 0.0
    %3369 = vmatpush.msra.mxu0 0.0
    %3370 = vmatpush.msra.mxu0 0.0
    %3371 = vmatpush.msra.mxu0 0.0
    %3372 = vmatpush.msra.mxu0 0.0
    %3373 = vmatpush.msra.mxu0 %v874
    %3374 = vmatpush.msra.mxu0 %v870
    %3375 = vmatmul.f32.gmra.mxu0 %v3337
    %v3376 = vpop.f32.mrf.mxu0
    %v3377 = vadd.f32 %v3357, %v3376
    %3378 = vdwg.mxu0
    %3379 = vmatpush.msra.mxu0 %v867
    %3380 = vmatpush.msra.mxu0 %v863
    %3381 = vmatpush.msra.mxu0 %v859
    %3382 = vmatpush.msra.mxu0 %v855
    %3383 = vmatpush.msra.mxu0 %v851
    %3384 = vmatpush.msra.mxu0 %v847
    %3385 = vmatpush.msra.mxu0 %v843
    %3386 = vmatpush.msra.mxu0 %v839
    %3387 = vmatpush.msra.mxu0 %v835
    %3388 = vmatpush.msra.mxu0 %v831
    %3389 = vmatpush.msra.mxu0 %v827
    %3390 = vmatpush.msra.mxu0 %v823
    %3391 = vmatpush.msra.mxu0 %v819
    %3392 = vmatpush.msra.mxu0 %v815
    %3393 = vmatpush.msra.mxu0 %v811
    %3394 = vmatpush.msra.mxu0 %v807
    %3395 = vmatmul.f32.gmra.mxu0 %v3334
    %v3396 = vpop.f32.mrf.mxu0
    %v3397 = vadd.f32 0.0, %v3396
    %3398 = vdwg.mxu0
    %3399 = vmatpush.msra.mxu0 0.0
    %3400 = vmatpush.msra.mxu0 0.0
    %3401 = vmatpush.msra.mxu0 0.0
    %3402 = vmatpush.msra.mxu0 0.0
    %3403 = vmatpush.msra.mxu0 0.0
    %3404 = vmatpush.msra.mxu0 0.0
    %3405 = vmatpush.msra.mxu0 0.0
    %3406 = vmatpush.msra.mxu0 0.0
    %3407 = vmatpush.msra.mxu0 0.0
    %3408 = vmatpush.msra.mxu0 0.0
    %3409 = vmatpush.msra.mxu0 0.0
    %3410 = vmatpush.msra.mxu0 0.0
    %3411 = vmatpush.msra.mxu0 0.0
    %3412 = vmatpush.msra.mxu0 0.0
    %3413 = vmatpush.msra.mxu0 %v875
    %3414 = vmatpush.msra.mxu0 %v871
    %3415 = vmatmul.f32.gmra.mxu0 %v3337
    %v3416 = vpop.f32.mrf.mxu0
    %v3417 = vadd.f32 %v3397, %v3416
    %3418 = vdwg.mxu0
    %3419 = vmatpush.msra.mxu0 %v868
    %3420 = vmatpush.msra.mxu0 %v864
    %3421 = vmatpush.msra.mxu0 %v860
    %3422 = vmatpush.msra.mxu0 %v856
    %3423 = vmatpush.msra.mxu0 %v852
    %3424 = vmatpush.msra.mxu0 %v848
    %3425 = vmatpush.msra.mxu0 %v844
    %3426 = vmatpush.msra.mxu0 %v840
    %3427 = vmatpush.msra.mxu0 %v836
    %3428 = vmatpush.msra.mxu0 %v832
    %3429 = vmatpush.msra.mxu0 %v828
    %3430 = vmatpush.msra.mxu0 %v824
    %3431 = vmatpush.msra.mxu0 %v820
    %3432 = vmatpush.msra.mxu0 %v816
    %3433 = vmatpush.msra.mxu0 %v812
    %3434 = vmatpush.msra.mxu0 %v808
    %3435 = vmatmul.f32.gmra.mxu0 %v3334
    %v3436 = vpop.f32.mrf.mxu0
    %v3437 = vadd.f32 0.0, %v3436
    %3438 = vdwg.mxu0
    %3439 = vmatpush.msra.mxu0 0.0
    %3440 = vmatpush.msra.mxu0 0.0
    %3441 = vmatpush.msra.mxu0 0.0
    %3442 = vmatpush.msra.mxu0 0.0
    %3443 = vmatpush.msra.mxu0 0.0
    %3444 = vmatpush.msra.mxu0 0.0
    %3445 = vmatpush.msra.mxu0 0.0
    %3446 = vmatpush.msra.mxu0 0.0
    %3447 = vmatpush.msra.mxu0 0.0
    %3448 = vmatpush.msra.mxu0 0.0
    %3449 = vmatpush.msra.mxu0 0.0
    %3450 = vmatpush.msra.mxu0 0.0
    %3451 = vmatpush.msra.mxu0 0.0
    %3452 = vmatpush.msra.mxu0 0.0
    %3453 = vmatpush.msra.mxu0 %v876
    %3454 = vmatpush.msra.mxu0 %v872
    %3455 = vmatmul.f32.gmra.mxu0 %v3337
    %v3456 = vpop.f32.mrf.mxu0
    %v3457 = vadd.f32 %v3437, %v3456
    %3458 = vdwg.mxu0
    %3459 = vmatpush.msra.mxu0 %v869
    %3460 = vmatpush.msra.mxu0 %v865
    %3461 = vmatpush.msra.mxu0 %v861
    %3462 = vmatpush.msra.mxu0 %v857
    %3463 = vmatpush.msra.mxu0 %v853
    %3464 = vmatpush.msra.mxu0 %v849
    %3465 = vmatpush.msra.mxu0 %v845
    %3466 = vmatpush.msra.mxu0 %v841
    %3467 = vmatpush.msra.mxu0 %v837
    %3468 = vmatpush.msra.mxu0 %v833
    %3469 = vmatpush.msra.mxu0 %v829
    %3470 = vmatpush.msra.mxu0 %v825
    %3471 = vmatpush.msra.mxu0 %v821
    %3472 = vmatpush.msra.mxu0 %v817
    %3473 = vmatpush.msra.mxu0 %v813
    %3474 = vmatpush.msra.mxu0 %v809
    %3475 = vmatmul.f32.gmra.mxu0 %v3334
    %v3476 = vpop.f32.mrf.mxu0
    %v3477 = vadd.f32 0.0, %v3476
    %3478 = vdwg.mxu0
    %3479 = vmatpush.msra.mxu0 0.0
    %3480 = vmatpush.msra.mxu0 0.0
    %3481 = vmatpush.msra.mxu0 0.0
    %3482 = vmatpush.msra.mxu0 0.0
    %3483 = vmatpush.msra.mxu0 0.0
    %3484 = vmatpush.msra.mxu0 0.0
    %3485 = vmatpush.msra.mxu0 0.0
    %3486 = vmatpush.msra.mxu0 0.0
    %3487 = vmatpush.msra.mxu0 0.0
    %3488 = vmatpush.msra.mxu0 0.0
    %3489 = vmatpush.msra.mxu0 0.0
    %3490 = vmatpush.msra.mxu0 0.0
    %3491 = vmatpush.msra.mxu0 0.0
    %3492 = vmatpush.msra.mxu0 0.0
    %3493 = vmatpush.msra.mxu0 %v877
    %3494 = vmatpush.msra.mxu0 %v873
    %3495 = vmatmul.f32.gmra.mxu0 %v3337
    %v3496 = vpop.f32.mrf.mxu0
    %v3497 = vadd.f32 %v3477, %v3496
    %3498 = vdwg.mxu0
    %v3499 = vadd.f32 %v1043, %v3377
    %v3500 = vadd.f32 %v1044, %v3417
    %v3501 = vadd.f32 %v1045, %v3457
    %v3502 = vadd.f32 %v1046, %v3497
    %v3504 = vrot.slane %v3334, 2
    %v3505 = vrot.slane %v3335, 2
    %v3507 = vsel %vm878, %v3505, 0
    %3509 = vmatpush.msra.mxu0 %v1116
    %3510 = vmatpush.msra.mxu0 %v1112
    %3511 = vmatpush.msra.mxu0 %v1108
    %3512 = vmatpush.msra.mxu0 %v1104
    %3513 = vmatpush.msra.mxu0 %v1100
    %3514 = vmatpush.msra.mxu0 %v1096
    %3515 = vmatpush.msra.mxu0 %v1092
    %3516 = vmatpush.msra.mxu0 %v1088
    %3517 = vmatpush.msra.mxu0 %v1084
    %3518 = vmatpush.msra.mxu0 %v1080
    %3519 = vmatpush.msra.mxu0 %v1076
    %3520 = vmatpush.msra.mxu0 %v1072
    %3521 = vmatpush.msra.mxu0 %v1068
    %3522 = vmatpush.msra.mxu0 %v1064
    %3523 = vmatpush.msra.mxu0 %v1060
    %3524 = vmatpush.msra.mxu0 %v1056
    %3525 = vmatmul.f32.gmra.mxu0 %v3504
    %v3526 = vpop.f32.mrf.mxu0
    %v3527 = vadd.f32 0.0, %v3526
    %3528 = vdwg.mxu0
    %3529 = vmatpush.msra.mxu0 0.0
    %3530 = vmatpush.msra.mxu0 0.0
    %3531 = vmatpush.msra.mxu0 0.0
    %3532 = vmatpush.msra.mxu0 0.0
    %3533 = vmatpush.msra.mxu0 0.0
    %3534 = vmatpush.msra.mxu0 0.0
    %3535 = vmatpush.msra.mxu0 0.0
    %3536 = vmatpush.msra.mxu0 0.0
    %3537 = vmatpush.msra.mxu0 0.0
    %3538 = vmatpush.msra.mxu0 0.0
    %3539 = vmatpush.msra.mxu0 0.0
    %3540 = vmatpush.msra.mxu0 0.0
    %3541 = vmatpush.msra.mxu0 0.0
    %3542 = vmatpush.msra.mxu0 0.0
    %3543 = vmatpush.msra.mxu0 %v1124
    %3544 = vmatpush.msra.mxu0 %v1120
    %3545 = vmatmul.f32.gmra.mxu0 %v3507
    %v3546 = vpop.f32.mrf.mxu0
    %v3547 = vadd.f32 %v3527, %v3546
    %3548 = vdwg.mxu0
    %3549 = vmatpush.msra.mxu0 %v1117
    %3550 = vmatpush.msra.mxu0 %v1113
    %3551 = vmatpush.msra.mxu0 %v1109
    %3552 = vmatpush.msra.mxu0 %v1105
    %3553 = vmatpush.msra.mxu0 %v1101
    %3554 = vmatpush.msra.mxu0 %v1097
    %3555 = vmatpush.msra.mxu0 %v1093
    %3556 = vmatpush.msra.mxu0 %v1089
    %3557 = vmatpush.msra.mxu0 %v1085
    %3558 = vmatpush.msra.mxu0 %v1081
    %3559 = vmatpush.msra.mxu0 %v1077
    %3560 = vmatpush.msra.mxu0 %v1073
    %3561 = vmatpush.msra.mxu0 %v1069
    %3562 = vmatpush.msra.mxu0 %v1065
    %3563 = vmatpush.msra.mxu0 %v1061
    %3564 = vmatpush.msra.mxu0 %v1057
    %3565 = vmatmul.f32.gmra.mxu0 %v3504
    %v3566 = vpop.f32.mrf.mxu0
    %v3567 = vadd.f32 0.0, %v3566
    %3568 = vdwg.mxu0
    %3569 = vmatpush.msra.mxu0 0.0
    %3570 = vmatpush.msra.mxu0 0.0
    %3571 = vmatpush.msra.mxu0 0.0
    %3572 = vmatpush.msra.mxu0 0.0
    %3573 = vmatpush.msra.mxu0 0.0
    %3574 = vmatpush.msra.mxu0 0.0
    %3575 = vmatpush.msra.mxu0 0.0
    %3576 = vmatpush.msra.mxu0 0.0
    %3577 = vmatpush.msra.mxu0 0.0
    %3578 = vmatpush.msra.mxu0 0.0
    %3579 = vmatpush.msra.mxu0 0.0
    %3580 = vmatpush.msra.mxu0 0.0
    %3581 = vmatpush.msra.mxu0 0.0
    %3582 = vmatpush.msra.mxu0 0.0
    %3583 = vmatpush.msra.mxu0 %v1125
    %3584 = vmatpush.msra.mxu0 %v1121
    %3585 = vmatmul.f32.gmra.mxu0 %v3507
    %v3586 = vpop.f32.mrf.mxu0
    %v3587 = vadd.f32 %v3567, %v3586
    %3588 = vdwg.mxu0
    %3589 = vmatpush.msra.mxu0 %v1118
    %3590 = vmatpush.msra.mxu0 %v1114
    %3591 = vmatpush.msra.mxu0 %v1110
    %3592 = vmatpush.msra.mxu0 %v1106
    %3593 = vmatpush.msra.mxu0 %v1102
    %3594 = vmatpush.msra.mxu0 %v1098
    %3595 = vmatpush.msra.mxu0 %v1094
    %3596 = vmatpush.msra.mxu0 %v1090
    %3597 = vmatpush.msra.mxu0 %v1086
    %3598 = vmatpush.msra.mxu0 %v1082
    %3599 = vmatpush.msra.mxu0 %v1078
    %3600 = vmatpush.msra.mxu0 %v1074
    %3601 = vmatpush.msra.mxu0 %v1070
    %3602 = vmatpush.msra.mxu0 %v1066
    %3603 = vmatpush.msra.mxu0 %v1062
    %3604 = vmatpush.msra.mxu0 %v1058
    %3605 = vmatmul.f32.gmra.mxu0 %v3504
    %v3606 = vpop.f32.mrf.mxu0
    %v3607 = vadd.f32 0.0, %v3606
    %3608 = vdwg.mxu0
    %3609 = vmatpush.msra.mxu0 0.0
    %3610 = vmatpush.msra.mxu0 0.0
    %3611 = vmatpush.msra.mxu0 0.0
    %3612 = vmatpush.msra.mxu0 0.0
    %3613 = vmatpush.msra.mxu0 0.0
    %3614 = vmatpush.msra.mxu0 0.0
    %3615 = vmatpush.msra.mxu0 0.0
    %3616 = vmatpush.msra.mxu0 0.0
    %3617 = vmatpush.msra.mxu0 0.0
    %3618 = vmatpush.msra.mxu0 0.0
    %3619 = vmatpush.msra.mxu0 0.0
    %3620 = vmatpush.msra.mxu0 0.0
    %3621 = vmatpush.msra.mxu0 0.0
    %3622 = vmatpush.msra.mxu0 0.0
    %3623 = vmatpush.msra.mxu0 %v1126
    %3624 = vmatpush.msra.mxu0 %v1122
    %3625 = vmatmul.f32.gmra.mxu0 %v3507
    %v3626 = vpop.f32.mrf.mxu0
    %v3627 = vadd.f32 %v3607, %v3626
    %3628 = vdwg.mxu0
    %3629 = vmatpush.msra.mxu0 %v1119
    %3630 = vmatpush.msra.mxu0 %v1115
    %3631 = vmatpush.msra.mxu0 %v1111
    %3632 = vmatpush.msra.mxu0 %v1107
    %3633 = vmatpush.msra.mxu0 %v1103
    %3634 = vmatpush.msra.mxu0 %v1099
    %3635 = vmatpush.msra.mxu0 %v1095
    %3636 = vmatpush.msra.mxu0 %v1091
    %3637 = vmatpush.msra.mxu0 %v1087
    %3638 = vmatpush.msra.mxu0 %v1083
    %3639 = vmatpush.msra.mxu0 %v1079
    %3640 = vmatpush.msra.mxu0 %v1075
    %3641 = vmatpush.msra.mxu0 %v1071
    %3642 = vmatpush.msra.mxu0 %v1067
    %3643 = vmatpush.msra.mxu0 %v1063
    %3644 = vmatpush.msra.mxu0 %v1059
    %3645 = vmatmul.f32.gmra.mxu0 %v3504
    %v3646 = vpop.f32.mrf.mxu0
    %v3647 = vadd.f32 0.0, %v3646
    %3648 = vdwg.mxu0
    %3649 = vmatpush.msra.mxu0 0.0
    %3650 = vmatpush.msra.mxu0 0.0
    %3651 = vmatpush.msra.mxu0 0.0
    %3652 = vmatpush.msra.mxu0 0.0
    %3653 = vmatpush.msra.mxu0 0.0
    %3654 = vmatpush.msra.mxu0 0.0
    %3655 = vmatpush.msra.mxu0 0.0
    %3656 = vmatpush.msra.mxu0 0.0
    %3657 = vmatpush.msra.mxu0 0.0
    %3658 = vmatpush.msra.mxu0 0.0
    %3659 = vmatpush.msra.mxu0 0.0
    %3660 = vmatpush.msra.mxu0 0.0
    %3661 = vmatpush.msra.mxu0 0.0
    %3662 = vmatpush.msra.mxu0 0.0
    %3663 = vmatpush.msra.mxu0 %v1127
    %3664 = vmatpush.msra.mxu0 %v1123
    %3665 = vmatmul.f32.gmra.mxu0 %v3507
    %v3666 = vpop.f32.mrf.mxu0
    %v3667 = vadd.f32 %v3647, %v3666
    %3668 = vdwg.mxu0
    %v3669 = vadd.f32 %v3499, %v3547
    %v3670 = vadd.f32 %v3500, %v3587
    %v3671 = vadd.f32 %v3501, %v3627
    %v3672 = vadd.f32 %v3502, %v3667
    %v3673 = vrot.slane %v3334, 4
    %v3674 = vrot.slane %v3335, 4
    %v3676 = vsel %vm878, %v3674, 0
    %3678 = vmatpush.msra.mxu0 %v1359
    %3679 = vmatpush.msra.mxu0 %v1355
    %3680 = vmatpush.msra.mxu0 %v1351
    %3681 = vmatpush.msra.mxu0 %v1347
    %3682 = vmatpush.msra.mxu0 %v1343
    %3683 = vmatpush.msra.mxu0 %v1339
    %3684 = vmatpush.msra.mxu0 %v1335
    %3685 = vmatpush.msra.mxu0 %v1331
    %3686 = vmatpush.msra.mxu0 %v1327
    %3687 = vmatpush.msra.mxu0 %v1323
    %3688 = vmatpush.msra.mxu0 %v1319
    %3689 = vmatpush.msra.mxu0 %v1315
    %3690 = vmatpush.msra.mxu0 %v1311
    %3691 = vmatpush.msra.mxu0 %v1307
    %3692 = vmatpush.msra.mxu0 %v1303
    %3693 = vmatpush.msra.mxu0 %v1299
    %3694 = vmatmul.f32.gmra.mxu0 %v3673
    %v3695 = vpop.f32.mrf.mxu0
    %v3696 = vadd.f32 0.0, %v3695
    %3697 = vdwg.mxu0
    %3698 = vmatpush.msra.mxu0 0.0
    %3699 = vmatpush.msra.mxu0 0.0
    %3700 = vmatpush.msra.mxu0 0.0
    %3701 = vmatpush.msra.mxu0 0.0
    %3702 = vmatpush.msra.mxu0 0.0
    %3703 = vmatpush.msra.mxu0 0.0
    %3704 = vmatpush.msra.mxu0 0.0
    %3705 = vmatpush.msra.mxu0 0.0
    %3706 = vmatpush.msra.mxu0 0.0
    %3707 = vmatpush.msra.mxu0 0.0
    %3708 = vmatpush.msra.mxu0 0.0
    %3709 = vmatpush.msra.mxu0 0.0
    %3710 = vmatpush.msra.mxu0 0.0
    %3711 = vmatpush.msra.mxu0 0.0
    %3712 = vmatpush.msra.mxu0 %v1367
    %3713 = vmatpush.msra.mxu0 %v1363
    %3714 = vmatmul.f32.gmra.mxu0 %v3676
    %v3715 = vpop.f32.mrf.mxu0
    %v3716 = vadd.f32 %v3696, %v3715
    %3717 = vdwg.mxu0
    %3718 = vmatpush.msra.mxu0 %v1360
    %3719 = vmatpush.msra.mxu0 %v1356
    %3720 = vmatpush.msra.mxu0 %v1352
    %3721 = vmatpush.msra.mxu0 %v1348
    %3722 = vmatpush.msra.mxu0 %v1344
    %3723 = vmatpush.msra.mxu0 %v1340
    %3724 = vmatpush.msra.mxu0 %v1336
    %3725 = vmatpush.msra.mxu0 %v1332
    %3726 = vmatpush.msra.mxu0 %v1328
    %3727 = vmatpush.msra.mxu0 %v1324
    %3728 = vmatpush.msra.mxu0 %v1320
    %3729 = vmatpush.msra.mxu0 %v1316
    %3730 = vmatpush.msra.mxu0 %v1312
    %3731 = vmatpush.msra.mxu0 %v1308
    %3732 = vmatpush.msra.mxu0 %v1304
    %3733 = vmatpush.msra.mxu0 %v1300
    %3734 = vmatmul.f32.gmra.mxu0 %v3673
    %v3735 = vpop.f32.mrf.mxu0
    %v3736 = vadd.f32 0.0, %v3735
    %3737 = vdwg.mxu0
    %3738 = vmatpush.msra.mxu0 0.0
    %3739 = vmatpush.msra.mxu0 0.0
    %3740 = vmatpush.msra.mxu0 0.0
    %3741 = vmatpush.msra.mxu0 0.0
    %3742 = vmatpush.msra.mxu0 0.0
    %3743 = vmatpush.msra.mxu0 0.0
    %3744 = vmatpush.msra.mxu0 0.0
    %3745 = vmatpush.msra.mxu0 0.0
    %3746 = vmatpush.msra.mxu0 0.0
    %3747 = vmatpush.msra.mxu0 0.0
    %3748 = vmatpush.msra.mxu0 0.0
    %3749 = vmatpush.msra.mxu0 0.0
    %3750 = vmatpush.msra.mxu0 0.0
    %3751 = vmatpush.msra.mxu0 0.0
    %3752 = vmatpush.msra.mxu0 %v1368
    %3753 = vmatpush.msra.mxu0 %v1364
    %3754 = vmatmul.f32.gmra.mxu0 %v3676
    %v3755 = vpop.f32.mrf.mxu0
    %v3756 = vadd.f32 %v3736, %v3755
    %3757 = vdwg.mxu0
    %3758 = vmatpush.msra.mxu0 %v1361
    %3759 = vmatpush.msra.mxu0 %v1357
    %3760 = vmatpush.msra.mxu0 %v1353
    %3761 = vmatpush.msra.mxu0 %v1349
    %3762 = vmatpush.msra.mxu0 %v1345
    %3763 = vmatpush.msra.mxu0 %v1341
    %3764 = vmatpush.msra.mxu0 %v1337
    %3765 = vmatpush.msra.mxu0 %v1333
    %3766 = vmatpush.msra.mxu0 %v1329
    %3767 = vmatpush.msra.mxu0 %v1325
    %3768 = vmatpush.msra.mxu0 %v1321
    %3769 = vmatpush.msra.mxu0 %v1317
    %3770 = vmatpush.msra.mxu0 %v1313
    %3771 = vmatpush.msra.mxu0 %v1309
    %3772 = vmatpush.msra.mxu0 %v1305
    %3773 = vmatpush.msra.mxu0 %v1301
    %3774 = vmatmul.f32.gmra.mxu0 %v3673
    %v3775 = vpop.f32.mrf.mxu0
    %v3776 = vadd.f32 0.0, %v3775
    %3777 = vdwg.mxu0
    %3778 = vmatpush.msra.mxu0 0.0
    %3779 = vmatpush.msra.mxu0 0.0
    %3780 = vmatpush.msra.mxu0 0.0
    %3781 = vmatpush.msra.mxu0 0.0
    %3782 = vmatpush.msra.mxu0 0.0
    %3783 = vmatpush.msra.mxu0 0.0
    %3784 = vmatpush.msra.mxu0 0.0
    %3785 = vmatpush.msra.mxu0 0.0
    %3786 = vmatpush.msra.mxu0 0.0
    %3787 = vmatpush.msra.mxu0 0.0
    %3788 = vmatpush.msra.mxu0 0.0
    %3789 = vmatpush.msra.mxu0 0.0
    %3790 = vmatpush.msra.mxu0 0.0
    %3791 = vmatpush.msra.mxu0 0.0
    %3792 = vmatpush.msra.mxu0 %v1369
    %3793 = vmatpush.msra.mxu0 %v1365
    %3794 = vmatmul.f32.gmra.mxu0 %v3676
    %v3795 = vpop.f32.mrf.mxu0
    %v3796 = vadd.f32 %v3776, %v3795
    %3797 = vdwg.mxu0
    %3798 = vmatpush.msra.mxu0 %v1362
    %3799 = vmatpush.msra.mxu0 %v1358
    %3800 = vmatpush.msra.mxu0 %v1354
    %3801 = vmatpush.msra.mxu0 %v1350
    %3802 = vmatpush.msra.mxu0 %v1346
    %3803 = vmatpush.msra.mxu0 %v1342
    %3804 = vmatpush.msra.mxu0 %v1338
    %3805 = vmatpush.msra.mxu0 %v1334
    %3806 = vmatpush.msra.mxu0 %v1330
    %3807 = vmatpush.msra.mxu0 %v1326
    %3808 = vmatpush.msra.mxu0 %v1322
    %3809 = vmatpush.msra.mxu0 %v1318
    %3810 = vmatpush.msra.mxu0 %v1314
    %3811 = vmatpush.msra.mxu0 %v1310
    %3812 = vmatpush.msra.mxu0 %v1306
    %3813 = vmatpush.msra.mxu0 %v1302
    %3814 = vmatmul.f32.gmra.mxu0 %v3673
    %v3815 = vpop.f32.mrf.mxu0
    %v3816 = vadd.f32 0.0, %v3815
    %3817 = vdwg.mxu0
    %3818 = vmatpush.msra.mxu0 0.0
    %3819 = vmatpush.msra.mxu0 0.0
    %3820 = vmatpush.msra.mxu0 0.0
    %3821 = vmatpush.msra.mxu0 0.0
    %3822 = vmatpush.msra.mxu0 0.0
    %3823 = vmatpush.msra.mxu0 0.0
    %3824 = vmatpush.msra.mxu0 0.0
    %3825 = vmatpush.msra.mxu0 0.0
    %3826 = vmatpush.msra.mxu0 0.0
    %3827 = vmatpush.msra.mxu0 0.0
    %3828 = vmatpush.msra.mxu0 0.0
    %3829 = vmatpush.msra.mxu0 0.0
    %3830 = vmatpush.msra.mxu0 0.0
    %3831 = vmatpush.msra.mxu0 0.0
    %3832 = vmatpush.msra.mxu0 %v1370
    %3833 = vmatpush.msra.mxu0 %v1366
    %3834 = vmatmul.f32.gmra.mxu0 %v3676
    %v3835 = vpop.f32.mrf.mxu0
    %v3836 = vadd.f32 %v3816, %v3835
    %3837 = vdwg.mxu0
    %v3838 = vadd.f32 %v3669, %v3716
    %v3839 = vadd.f32 %v3670, %v3756
    %v3840 = vadd.f32 %v3671, %v3796
    %v3841 = vadd.f32 %v3672, %v3836
    %v3842 = vrot.slane %v3334, 6
    %v3843 = vrot.slane %v3335, 6
    %v3845 = vsel %vm878, %v3843, 0
    %3847 = vmatpush.msra.mxu0 %v1601
    %3848 = vmatpush.msra.mxu0 %v1597
    %3849 = vmatpush.msra.mxu0 %v1593
    %3850 = vmatpush.msra.mxu0 %v1589
    %3851 = vmatpush.msra.mxu0 %v1585
    %3852 = vmatpush.msra.mxu0 %v1581
    %3853 = vmatpush.msra.mxu0 %v1577
    %3854 = vmatpush.msra.mxu0 %v1573
    %3855 = vmatpush.msra.mxu0 %v1569
    %3856 = vmatpush.msra.mxu0 %v1565
    %3857 = vmatpush.msra.mxu0 %v1561
    %3858 = vmatpush.msra.mxu0 %v1557
    %3859 = vmatpush.msra.mxu0 %v1553
    %3860 = vmatpush.msra.mxu0 %v1549
    %3861 = vmatpush.msra.mxu0 %v1545
    %3862 = vmatpush.msra.mxu0 %v1541
    %3863 = vmatmul.f32.gmra.mxu0 %v3842
    %v3864 = vpop.f32.mrf.mxu0
    %v3865 = vadd.f32 0.0, %v3864
    %3866 = vdwg.mxu0
    %3867 = vmatpush.msra.mxu0 0.0
    %3868 = vmatpush.msra.mxu0 0.0
    %3869 = vmatpush.msra.mxu0 0.0
    %3870 = vmatpush.msra.mxu0 0.0
    %3871 = vmatpush.msra.mxu0 0.0
    %3872 = vmatpush.msra.mxu0 0.0
    %3873 = vmatpush.msra.mxu0 0.0
    %3874 = vmatpush.msra.mxu0 0.0
    %3875 = vmatpush.msra.mxu0 0.0
    %3876 = vmatpush.msra.mxu0 0.0
    %3877 = vmatpush.msra.mxu0 0.0
    %3878 = vmatpush.msra.mxu0 0.0
    %3879 = vmatpush.msra.mxu0 0.0
    %3880 = vmatpush.msra.mxu0 0.0
    %3881 = vmatpush.msra.mxu0 %v1609
    %3882 = vmatpush.msra.mxu0 %v1605
    %3883 = vmatmul.f32.gmra.mxu0 %v3845
    %v3884 = vpop.f32.mrf.mxu0
    %v3885 = vadd.f32 %v3865, %v3884
    %3886 = vdwg.mxu0
    %3887 = vmatpush.msra.mxu0 %v1602
    %3888 = vmatpush.msra.mxu0 %v1598
    %3889 = vmatpush.msra.mxu0 %v1594
    %3890 = vmatpush.msra.mxu0 %v1590
    %3891 = vmatpush.msra.mxu0 %v1586
    %3892 = vmatpush.msra.mxu0 %v1582
    %3893 = vmatpush.msra.mxu0 %v1578
    %3894 = vmatpush.msra.mxu0 %v1574
    %3895 = vmatpush.msra.mxu0 %v1570
    %3896 = vmatpush.msra.mxu0 %v1566
    %3897 = vmatpush.msra.mxu0 %v1562
    %3898 = vmatpush.msra.mxu0 %v1558
    %3899 = vmatpush.msra.mxu0 %v1554
    %3900 = vmatpush.msra.mxu0 %v1550
    %3901 = vmatpush.msra.mxu0 %v1546
    %3902 = vmatpush.msra.mxu0 %v1542
    %3903 = vmatmul.f32.gmra.mxu0 %v3842
    %v3904 = vpop.f32.mrf.mxu0
    %v3905 = vadd.f32 0.0, %v3904
    %3906 = vdwg.mxu0
    %3907 = vmatpush.msra.mxu0 0.0
    %3908 = vmatpush.msra.mxu0 0.0
    %3909 = vmatpush.msra.mxu0 0.0
    %3910 = vmatpush.msra.mxu0 0.0
    %3911 = vmatpush.msra.mxu0 0.0
    %3912 = vmatpush.msra.mxu0 0.0
    %3913 = vmatpush.msra.mxu0 0.0
    %3914 = vmatpush.msra.mxu0 0.0
    %3915 = vmatpush.msra.mxu0 0.0
    %3916 = vmatpush.msra.mxu0 0.0
    %3917 = vmatpush.msra.mxu0 0.0
    %3918 = vmatpush.msra.mxu0 0.0
    %3919 = vmatpush.msra.mxu0 0.0
    %3920 = vmatpush.msra.mxu0 0.0
    %3921 = vmatpush.msra.mxu0 %v1610
    %3922 = vmatpush.msra.mxu0 %v1606
    %3923 = vmatmul.f32.gmra.mxu0 %v3845
    %v3924 = vpop.f32.mrf.mxu0
    %v3925 = vadd.f32 %v3905, %v3924
    %3926 = vdwg.mxu0
    %3927 = vmatpush.msra.mxu0 %v1603
    %3928 = vmatpush.msra.mxu0 %v1599
    %3929 = vmatpush.msra.mxu0 %v1595
    %3930 = vmatpush.msra.mxu0 %v1591
    %3931 = vmatpush.msra.mxu0 %v1587
    %3932 = vmatpush.msra.mxu0 %v1583
    %3933 = vmatpush.msra.mxu0 %v1579
    %3934 = vmatpush.msra.mxu0 %v1575
    %3935 = vmatpush.msra.mxu0 %v1571
    %3936 = vmatpush.msra.mxu0 %v1567
    %3937 = vmatpush.msra.mxu0 %v1563
    %3938 = vmatpush.msra.mxu0 %v1559
    %3939 = vmatpush.msra.mxu0 %v1555
    %3940 = vmatpush.msra.mxu0 %v1551
    %3941 = vmatpush.msra.mxu0 %v1547
    %3942 = vmatpush.msra.mxu0 %v1543
    %3943 = vmatmul.f32.gmra.mxu0 %v3842
    %v3944 = vpop.f32.mrf.mxu0
    %v3945 = vadd.f32 0.0, %v3944
    %3946 = vdwg.mxu0
    %3947 = vmatpush.msra.mxu0 0.0
    %3948 = vmatpush.msra.mxu0 0.0
    %3949 = vmatpush.msra.mxu0 0.0
    %3950 = vmatpush.msra.mxu0 0.0
    %3951 = vmatpush.msra.mxu0 0.0
    %3952 = vmatpush.msra.mxu0 0.0
    %3953 = vmatpush.msra.mxu0 0.0
    %3954 = vmatpush.msra.mxu0 0.0
    %3955 = vmatpush.msra.mxu0 0.0
    %3956 = vmatpush.msra.mxu0 0.0
    %3957 = vmatpush.msra.mxu0 0.0
    %3958 = vmatpush.msra.mxu0 0.0
    %3959 = vmatpush.msra.mxu0 0.0
    %3960 = vmatpush.msra.mxu0 0.0
    %3961 = vmatpush.msra.mxu0 %v1611
    %3962 = vmatpush.msra.mxu0 %v1607
    %3963 = vmatmul.f32.gmra.mxu0 %v3845
    %v3964 = vpop.f32.mrf.mxu0
    %v3965 = vadd.f32 %v3945, %v3964
    %3966 = vdwg.mxu0
    %3967 = vmatpush.msra.mxu0 %v1604
    %3968 = vmatpush.msra.mxu0 %v1600
    %3969 = vmatpush.msra.mxu0 %v1596
    %3970 = vmatpush.msra.mxu0 %v1592
    %3971 = vmatpush.msra.mxu0 %v1588
    %3972 = vmatpush.msra.mxu0 %v1584
    %3973 = vmatpush.msra.mxu0 %v1580
    %3974 = vmatpush.msra.mxu0 %v1576
    %3975 = vmatpush.msra.mxu0 %v1572
    %3976 = vmatpush.msra.mxu0 %v1568
    %3977 = vmatpush.msra.mxu0 %v1564
    %3978 = vmatpush.msra.mxu0 %v1560
    %3979 = vmatpush.msra.mxu0 %v1556
    %3980 = vmatpush.msra.mxu0 %v1552
    %3981 = vmatpush.msra.mxu0 %v1548
    %3982 = vmatpush.msra.mxu0 %v1544
    %3983 = vmatmul.f32.gmra.mxu0 %v3842
    %v3984 = vpop.f32.mrf.mxu0
    %v3985 = vadd.f32 0.0, %v3984
    %3986 = vdwg.mxu0
    %3987 = vmatpush.msra.mxu0 0.0
    %3988 = vmatpush.msra.mxu0 0.0
    %3989 = vmatpush.msra.mxu0 0.0
    %3990 = vmatpush.msra.mxu0 0.0
    %3991 = vmatpush.msra.mxu0 0.0
    %3992 = vmatpush.msra.mxu0 0.0
    %3993 = vmatpush.msra.mxu0 0.0
    %3994 = vmatpush.msra.mxu0 0.0
    %3995 = vmatpush.msra.mxu0 0.0
    %3996 = vmatpush.msra.mxu0 0.0
    %3997 = vmatpush.msra.mxu0 0.0
    %3998 = vmatpush.msra.mxu0 0.0
    %3999 = vmatpush.msra.mxu0 0.0
    %4000 = vmatpush.msra.mxu0 0.0
    %4001 = vmatpush.msra.mxu0 %v1612
    %4002 = vmatpush.msra.mxu0 %v1608
    %4003 = vmatmul.f32.gmra.mxu0 %v3845
    %v4004 = vpop.f32.mrf.mxu0
    %v4005 = vadd.f32 %v3985, %v4004
    %4006 = vdwg.mxu0
    %v4007 = vadd.f32 %v3838, %v3885
    %v4008 = vadd.f32 %v3839, %v3925
    %v4009 = vadd.f32 %v3840, %v3965
    %v4010 = vadd.f32 %v3841, %v4005
    %v4011 = vsub.f32 %v4007, %v3060
    %v4012 = vsub.f32 %v4008, %v3061
    %v4013 = vsub.f32 %v4009, %v3062
    %v4014 = vsub.f32 %v4010, %v3063
    %v4015 = vmul.f32 %v4011, 0.5
    %v4016 = vmul.f32 %v4012, 0.5
    %v4017 = vmul.f32 %v4013, 0.5
    %v4018 = vmul.f32 %v4014, 0.5
    %v4019 = vadd.f32 %v3060, %v4015
    %v4020 = vadd.f32 %v3061, %v4016
    %v4021 = vadd.f32 %v3062, %v4017
    %v4022 = vadd.f32 %v3063, %v4018
    %vm4023 = vcmp.ge.f32.partialorder %v4019, 1.0
    %vm4024 = vcmp.ge.f32.partialorder %v4020, 1.0
    %vm4025 = vcmp.ge.f32.partialorder %v4021, 1.0
    %vm4026 = vcmp.ge.f32.partialorder %v4022, 1.0
    %v4027 = vsel %vm4023, 1, 0
    %v4028 = vsel %vm4024, 1, 0
    %v4029 = vsel %vm4025, 1, 0
    %v4030 = vsel %vm4026, 1, 0
    %v4031 = vcvt.s32.f32 %v4027
    %v4032 = vcvt.s32.f32 %v4028
    %v4033 = vcvt.s32.f32 %v4029
    %v4034 = vcvt.s32.f32 %v4030
    %v4035 = vsub.f32 1.0, %v4031
    %v4036 = vsub.f32 1.0, %v4032
    %v4037 = vsub.f32 1.0, %v4033
    %v4038 = vsub.f32 1.0, %v4034
    %v4039 = vmul.f32 %v4019, %v4035
    %v4040 = vmul.f32 %v4020, %v4036
    %v4041 = vmul.f32 %v4021, %v4037
    %v4042 = vmul.f32 %v4022, %v4038
    %v4043 = vpack.c.bf16 %v4031, %v4031
    %v4044 = vpack.c.bf16 %v4032, %v4032
    %v4045 = vpack.c.bf16 %v4033, %v4033
    %v4046 = vpack.c.bf16 %v4034, %v4034
    %4047 = vmatpush.bf16.msra.mxu0 %v2013
    %4048 = vmatpush.bf16.msra.mxu0 %v2012
    %4049 = vmatpush.bf16.msra.mxu0 %v2011
    %4050 = vmatpush.bf16.msra.mxu0 %v2010
    %4051 = vmatpush.bf16.msra.mxu0 %v2009
    %4052 = vmatpush.bf16.msra.mxu0 %v2008
    %4053 = vmatpush.bf16.msra.mxu0 %v2007
    %4054 = vmatpush.bf16.msra.mxu0 %v2006
    %4055 = vmatmul.bf16.gmra.mxu0 %v4043
    %v4056 = vpop.f32.mrf.mxu0
    %v4057 = vadd.f32 0.0, %v4056
    %v4058 = vpop.f32.mrf.mxu0
    %4059 = vdwg.mxu0
    %4060 = vmatpush.bf16.msra.mxu0 %v2021
    %4061 = vmatpush.bf16.msra.mxu0 %v2020
    %4062 = vmatpush.bf16.msra.mxu0 %v2019
    %4063 = vmatpush.bf16.msra.mxu0 %v2018
    %4064 = vmatpush.bf16.msra.mxu0 %v2017
    %4065 = vmatpush.bf16.msra.mxu0 %v2016
    %4066 = vmatpush.bf16.msra.mxu0 %v2015
    %4067 = vmatpush.bf16.msra.mxu0 %v2014
    %4068 = vmatmul.bf16.gmra.mxu0 %v4044
    %v4069 = vpop.f32.mrf.mxu0
    %v4070 = vadd.f32 %v4057, %v4069
    %v4071 = vpop.f32.mrf.mxu0
    %4072 = vdwg.mxu0
    %4073 = vmatpush.bf16.msra.mxu0 %v2029
    %4074 = vmatpush.bf16.msra.mxu0 %v2028
    %4075 = vmatpush.bf16.msra.mxu0 %v2027
    %4076 = vmatpush.bf16.msra.mxu0 %v2026
    %4077 = vmatpush.bf16.msra.mxu0 %v2025
    %4078 = vmatpush.bf16.msra.mxu0 %v2024
    %4079 = vmatpush.bf16.msra.mxu0 %v2023
    %4080 = vmatpush.bf16.msra.mxu0 %v2022
    %4081 = vmatmul.bf16.gmra.mxu0 %v4045
    %v4082 = vpop.f32.mrf.mxu0
    %v4083 = vadd.f32 %v4070, %v4082
    %v4084 = vpop.f32.mrf.mxu0
    %4085 = vdwg.mxu0
    %4086 = vmatpush.bf16.msra.mxu0 %v2037
    %4087 = vmatpush.bf16.msra.mxu0 %v2036
    %4088 = vmatpush.bf16.msra.mxu0 %v2035
    %4089 = vmatpush.bf16.msra.mxu0 %v2034
    %4090 = vmatpush.bf16.msra.mxu0 %v2033
    %4091 = vmatpush.bf16.msra.mxu0 %v2032
    %4092 = vmatpush.bf16.msra.mxu0 %v2031
    %4093 = vmatpush.bf16.msra.mxu0 %v2030
    %4094 = vmatmul.bf16.gmra.mxu0 %v4046
    %v4095 = vpop.f32.mrf.mxu0
    %v4096 = vadd.f32 %v4083, %v4095
    %v4097 = vpop.f32.mrf.mxu0
    %4098 = vdwg.mxu0
    %vm4099 = vcmp.gt.f32.partialorder %v4096, 0.5
    %v4100 = vsel %vm4099, 1, 0
    %v4101 = vcvt.s32.f32 %v4100
    %4102 = vmatpush.msra.mxu0 %v2140
    %4103 = vmatpush.msra.mxu0 %v2139
    %4104 = vmatpush.msra.mxu0 %v2138
    %4105 = vmatpush.msra.mxu0 %v2137
    %4106 = vmatpush.msra.mxu0 %v2136
    %4107 = vmatpush.msra.mxu0 %v2135
    %4108 = vmatpush.msra.mxu0 %v2134
    %4109 = vmatpush.msra.mxu0 %v2133
    %4110 = vmatpush.msra.mxu0 %v2132
    %4111 = vmatpush.msra.mxu0 %v2131
    %4112 = vmatpush.msra.mxu0 %v2130
    %4113 = vmatpush.msra.mxu0 %v2129
    %4114 = vmatpush.msra.mxu0 %v2128
    %4115 = vmatpush.msra.mxu0 %v2127
    %4116 = vmatpush.msra.mxu0 %v2126
    %4117 = vmatpush.msra.mxu0 %v2125
    %4118 = vmatmul.f32.gmra.mxu0 %v4101
    %v4119 = vpop.f32.mrf.mxu0
    %v4120 = vadd.f32 %v2143, %v4119
    %4121 = vdwg.mxu0
    %v4122 = vsub.f32 %v4120, %v3150
    %v4123 = vmul.f32 %v4122, 0.5
    %v4124 = vadd.f32 %v3150, %v4123
    %vm4125 = vcmp.ge.f32.partialorder %v4124, 1.0
    %v4126 = vsel %vm4125, 1, 0
    %v4127 = vcvt.s32.f32 %v4126
    %v4128 = vsub.f32 1.0, %v4127
    %v4129 = vmul.f32 %v4124, %v4128
    %v4130 = vadd.f32 %v3151, %v4127
    %v4131 = vsub.f32 %v111, %v3187
    %v4132 = vsub.f32 %v131, %v3188
    %v4133 = vsub.f32 %v151, %v3189
    %v4134 = vsub.f32 %v171, %v3190
    %v4135 = vsub.f32 %v191, %v3191
    %v4136 = vmul.f32 %v4131, 0.5
    %v4137 = vmul.f32 %v4132, 0.5
    %v4138 = vmul.f32 %v4133, 0.5
    %v4139 = vmul.f32 %v4134, 0.5
    %v4140 = vmul.f32 %v4135, 0.5
    %v4141 = vadd.f32 %v3187, %v4136
    %v4142 = vadd.f32 %v3188, %v4137
    %v4143 = vadd.f32 %v3189, %v4138
    %v4144 = vadd.f32 %v3190, %v4139
    %v4145 = vadd.f32 %v3191, %v4140
    %vm4146 = vcmp.ge.f32.partialorder %v4141, 1.0
    %vm4147 = vcmp.ge.f32.partialorder %v4142, 1.0
    %vm4148 = vcmp.ge.f32.partialorder %v4143, 1.0
    %vm4149 = vcmp.ge.f32.partialorder %v4144, 1.0
    %vm4150 = vcmp.ge.f32.partialorder %v4145, 1.0
    %v4151 = vsel %vm4146, 1, 0
    %v4152 = vsel %vm4147, 1, 0
    %v4153 = vsel %vm4148, 1, 0
    %v4154 = vsel %vm4149, 1, 0
    %v4155 = vsel %vm4150, 1, 0
    %v4156 = vcvt.s32.f32 %v4151
    %v4157 = vcvt.s32.f32 %v4152
    %v4158 = vcvt.s32.f32 %v4153
    %v4159 = vcvt.s32.f32 %v4154
    %v4160 = vcvt.s32.f32 %v4155
    %v4161 = vpack.c.bf16 %v4156, %v4156
    %v4162 = vpack.c.bf16 %v4157, %v4157
    %v4163 = vpack.c.bf16 %v4158, %v4158
    %v4164 = vpack.c.bf16 %v4159, %v4159
    %v4165 = vpack.c.bf16 %v4160, %v4160
    %v4167 = vsel %vm665, %v4165, 0
    %4169 = vmatpush.bf16.msra.mxu0 %v535
    %4170 = vmatpush.bf16.msra.mxu0 %v533
    %4171 = vmatpush.bf16.msra.mxu0 %v531
    %4172 = vmatpush.bf16.msra.mxu0 %v529
    %4173 = vmatpush.bf16.msra.mxu0 %v527
    %4174 = vmatpush.bf16.msra.mxu0 %v525
    %4175 = vmatpush.bf16.msra.mxu0 %v523
    %4176 = vmatpush.bf16.msra.mxu0 %v521
    %4177 = vmatmul.bf16.gmra.mxu0 %v4161
    %v4178 = vpop.f32.mrf.mxu0
    %v4179 = vadd.f32 0.0, %v4178
    %v4180 = vpop.f32.mrf.mxu0
    %4181 = vdwg.mxu0
    %4182 = vmatpush.bf16.msra.mxu0 %v551
    %4183 = vmatpush.bf16.msra.mxu0 %v549
    %4184 = vmatpush.bf16.msra.mxu0 %v547
    %4185 = vmatpush.bf16.msra.mxu0 %v545
    %4186 = vmatpush.bf16.msra.mxu0 %v543
    %4187 = vmatpush.bf16.msra.mxu0 %v541
    %4188 = vmatpush.bf16.msra.mxu0 %v539
    %4189 = vmatpush.bf16.msra.mxu0 %v537
    %4190 = vmatmul.bf16.gmra.mxu0 %v4162
    %v4191 = vpop.f32.mrf.mxu0
    %v4192 = vadd.f32 %v4179, %v4191
    %v4193 = vpop.f32.mrf.mxu0
    %4194 = vdwg.mxu0
    %4195 = vmatpush.bf16.msra.mxu0 %v567
    %4196 = vmatpush.bf16.msra.mxu0 %v565
    %4197 = vmatpush.bf16.msra.mxu0 %v563
    %4198 = vmatpush.bf16.msra.mxu0 %v561
    %4199 = vmatpush.bf16.msra.mxu0 %v559
    %4200 = vmatpush.bf16.msra.mxu0 %v557
    %4201 = vmatpush.bf16.msra.mxu0 %v555
    %4202 = vmatpush.bf16.msra.mxu0 %v553
    %4203 = vmatmul.bf16.gmra.mxu0 %v4163
    %v4204 = vpop.f32.mrf.mxu0
    %v4205 = vadd.f32 %v4192, %v4204
    %v4206 = vpop.f32.mrf.mxu0
    %4207 = vdwg.mxu0
    %4208 = vmatpush.bf16.msra.mxu0 %v583
    %4209 = vmatpush.bf16.msra.mxu0 %v581
    %4210 = vmatpush.bf16.msra.mxu0 %v579
    %4211 = vmatpush.bf16.msra.mxu0 %v577
    %4212 = vmatpush.bf16.msra.mxu0 %v575
    %4213 = vmatpush.bf16.msra.mxu0 %v573
    %4214 = vmatpush.bf16.msra.mxu0 %v571
    %4215 = vmatpush.bf16.msra.mxu0 %v569
    %4216 = vmatmul.bf16.gmra.mxu0 %v4164
    %v4217 = vpop.f32.mrf.mxu0
    %v4218 = vadd.f32 %v4205, %v4217
    %v4219 = vpop.f32.mrf.mxu0
    %4220 = vdwg.mxu0
    %4221 = vmatpush.bf16.msra.mxu0 0
    %4222 = vmatpush.bf16.msra.mxu0 0
    %4223 = vmatpush.bf16.msra.mxu0 0
    %4224 = vmatpush.bf16.msra.mxu0 0
    %4225 = vmatpush.bf16.msra.mxu0 %v591
    %4226 = vmatpush.bf16.msra.mxu0 %v589
    %4227 = vmatpush.bf16.msra.mxu0 %v587
    %4228 = vmatpush.bf16.msra.mxu0 %v585
    %4229 = vmatmul.bf16.gmra.mxu0 %v4167
    %v4230 = vpop.f32.mrf.mxu0
    %v4231 = vadd.f32 %v4218, %v4230
    %v4232 = vpop.f32.mrf.mxu0
    %4233 = vdwg.mxu0
    %4234 = vmatpush.bf16.msra.mxu0 %v536
    %4235 = vmatpush.bf16.msra.mxu0 %v534
    %4236 = vmatpush.bf16.msra.mxu0 %v532
    %4237 = vmatpush.bf16.msra.mxu0 %v530
    %4238 = vmatpush.bf16.msra.mxu0 %v528
    %4239 = vmatpush.bf16.msra.mxu0 %v526
    %4240 = vmatpush.bf16.msra.mxu0 %v524
    %4241 = vmatpush.bf16.msra.mxu0 %v522
    %4242 = vmatmul.bf16.gmra.mxu0 %v4161
    %v4243 = vpop.f32.mrf.mxu0
    %v4244 = vadd.f32 0.0, %v4243
    %v4245 = vpop.f32.mrf.mxu0
    %4246 = vdwg.mxu0
    %4247 = vmatpush.bf16.msra.mxu0 %v552
    %4248 = vmatpush.bf16.msra.mxu0 %v550
    %4249 = vmatpush.bf16.msra.mxu0 %v548
    %4250 = vmatpush.bf16.msra.mxu0 %v546
    %4251 = vmatpush.bf16.msra.mxu0 %v544
    %4252 = vmatpush.bf16.msra.mxu0 %v542
    %4253 = vmatpush.bf16.msra.mxu0 %v540
    %4254 = vmatpush.bf16.msra.mxu0 %v538
    %4255 = vmatmul.bf16.gmra.mxu0 %v4162
    %v4256 = vpop.f32.mrf.mxu0
    %v4257 = vadd.f32 %v4244, %v4256
    %v4258 = vpop.f32.mrf.mxu0
    %4259 = vdwg.mxu0
    %4260 = vmatpush.bf16.msra.mxu0 %v568
    %4261 = vmatpush.bf16.msra.mxu0 %v566
    %4262 = vmatpush.bf16.msra.mxu0 %v564
    %4263 = vmatpush.bf16.msra.mxu0 %v562
    %4264 = vmatpush.bf16.msra.mxu0 %v560
    %4265 = vmatpush.bf16.msra.mxu0 %v558
    %4266 = vmatpush.bf16.msra.mxu0 %v556
    %4267 = vmatpush.bf16.msra.mxu0 %v554
    %4268 = vmatmul.bf16.gmra.mxu0 %v4163
    %v4269 = vpop.f32.mrf.mxu0
    %v4270 = vadd.f32 %v4257, %v4269
    %v4271 = vpop.f32.mrf.mxu0
    %4272 = vdwg.mxu0
    %4273 = vmatpush.bf16.msra.mxu0 %v584
    %4274 = vmatpush.bf16.msra.mxu0 %v582
    %4275 = vmatpush.bf16.msra.mxu0 %v580
    %4276 = vmatpush.bf16.msra.mxu0 %v578
    %4277 = vmatpush.bf16.msra.mxu0 %v576
    %4278 = vmatpush.bf16.msra.mxu0 %v574
    %4279 = vmatpush.bf16.msra.mxu0 %v572
    %4280 = vmatpush.bf16.msra.mxu0 %v570
    %4281 = vmatmul.bf16.gmra.mxu0 %v4164
    %v4282 = vpop.f32.mrf.mxu0
    %v4283 = vadd.f32 %v4270, %v4282
    %v4284 = vpop.f32.mrf.mxu0
    %4285 = vdwg.mxu0
    %4286 = vmatpush.bf16.msra.mxu0 0
    %4287 = vmatpush.bf16.msra.mxu0 0
    %4288 = vmatpush.bf16.msra.mxu0 0
    %4289 = vmatpush.bf16.msra.mxu0 0
    %4290 = vmatpush.bf16.msra.mxu0 %v592
    %4291 = vmatpush.bf16.msra.mxu0 %v590
    %4292 = vmatpush.bf16.msra.mxu0 %v588
    %4293 = vmatpush.bf16.msra.mxu0 %v586
    %4294 = vmatmul.bf16.gmra.mxu0 %v4167
    %v4295 = vpop.f32.mrf.mxu0
    %v4296 = vadd.f32 %v4283, %v4295
    %v4297 = vpop.f32.mrf.mxu0
    %4298 = vdwg.mxu0
    %vm4299 = vcmp.gt.f32.partialorder %v4231, 0.5
    %vm4300 = vcmp.gt.f32.partialorder %v4296, 0.5
    %v4301 = vsel %vm4299, 1, 0
    %v4302 = vsel %vm4300, 1, 0
    %v4303 = vcvt.s32.f32 %v4301
    %v4304 = vcvt.s32.f32 %v4302
    %v4306 = vsel %vm878, %v4304, 0
    %4308 = vmatpush.msra.mxu0 %v866
    %4309 = vmatpush.msra.mxu0 %v862
    %4310 = vmatpush.msra.mxu0 %v858
    %4311 = vmatpush.msra.mxu0 %v854
    %4312 = vmatpush.msra.mxu0 %v850
    %4313 = vmatpush.msra.mxu0 %v846
    %4314 = vmatpush.msra.mxu0 %v842
    %4315 = vmatpush.msra.mxu0 %v838
    %4316 = vmatpush.msra.mxu0 %v834
    %4317 = vmatpush.msra.mxu0 %v830
    %4318 = vmatpush.msra.mxu0 %v826
    %4319 = vmatpush.msra.mxu0 %v822
    %4320 = vmatpush.msra.mxu0 %v818
    %4321 = vmatpush.msra.mxu0 %v814
    %4322 = vmatpush.msra.mxu0 %v810
    %4323 = vmatpush.msra.mxu0 %v806
    %4324 = vmatmul.f32.gmra.mxu0 %v4303
    %v4325 = vpop.f32.mrf.mxu0
    %v4326 = vadd.f32 0.0, %v4325
    %4327 = vdwg.mxu0
    %4328 = vmatpush.msra.mxu0 0.0
    %4329 = vmatpush.msra.mxu0 0.0
    %4330 = vmatpush.msra.mxu0 0.0
    %4331 = vmatpush.msra.mxu0 0.0
    %4332 = vmatpush.msra.mxu0 0.0
    %4333 = vmatpush.msra.mxu0 0.0
    %4334 = vmatpush.msra.mxu0 0.0
    %4335 = vmatpush.msra.mxu0 0.0
    %4336 = vmatpush.msra.mxu0 0.0
    %4337 = vmatpush.msra.mxu0 0.0
    %4338 = vmatpush.msra.mxu0 0.0
    %4339 = vmatpush.msra.mxu0 0.0
    %4340 = vmatpush.msra.mxu0 0.0
    %4341 = vmatpush.msra.mxu0 0.0
    %4342 = vmatpush.msra.mxu0 %v874
    %4343 = vmatpush.msra.mxu0 %v870
    %4344 = vmatmul.f32.gmra.mxu0 %v4306
    %v4345 = vpop.f32.mrf.mxu0
    %v4346 = vadd.f32 %v4326, %v4345
    %4347 = vdwg.mxu0
    %4348 = vmatpush.msra.mxu0 %v867
    %4349 = vmatpush.msra.mxu0 %v863
    %4350 = vmatpush.msra.mxu0 %v859
    %4351 = vmatpush.msra.mxu0 %v855
    %4352 = vmatpush.msra.mxu0 %v851
    %4353 = vmatpush.msra.mxu0 %v847
    %4354 = vmatpush.msra.mxu0 %v843
    %4355 = vmatpush.msra.mxu0 %v839
    %4356 = vmatpush.msra.mxu0 %v835
    %4357 = vmatpush.msra.mxu0 %v831
    %4358 = vmatpush.msra.mxu0 %v827
    %4359 = vmatpush.msra.mxu0 %v823
    %4360 = vmatpush.msra.mxu0 %v819
    %4361 = vmatpush.msra.mxu0 %v815
    %4362 = vmatpush.msra.mxu0 %v811
    %4363 = vmatpush.msra.mxu0 %v807
    %4364 = vmatmul.f32.gmra.mxu0 %v4303
    %v4365 = vpop.f32.mrf.mxu0
    %v4366 = vadd.f32 0.0, %v4365
    %4367 = vdwg.mxu0
    %4368 = vmatpush.msra.mxu0 0.0
    %4369 = vmatpush.msra.mxu0 0.0
    %4370 = vmatpush.msra.mxu0 0.0
    %4371 = vmatpush.msra.mxu0 0.0
    %4372 = vmatpush.msra.mxu0 0.0
    %4373 = vmatpush.msra.mxu0 0.0
    %4374 = vmatpush.msra.mxu0 0.0
    %4375 = vmatpush.msra.mxu0 0.0
    %4376 = vmatpush.msra.mxu0 0.0
    %4377 = vmatpush.msra.mxu0 0.0
    %4378 = vmatpush.msra.mxu0 0.0
    %4379 = vmatpush.msra.mxu0 0.0
    %4380 = vmatpush.msra.mxu0 0.0
    %4381 = vmatpush.msra.mxu0 0.0
    %4382 = vmatpush.msra.mxu0 %v875
    %4383 = vmatpush.msra.mxu0 %v871
    %4384 = vmatmul.f32.gmra.mxu0 %v4306
    %v4385 = vpop.f32.mrf.mxu0
    %v4386 = vadd.f32 %v4366, %v4385
    %4387 = vdwg.mxu0
    %4388 = vmatpush.msra.mxu0 %v868
    %4389 = vmatpush.msra.mxu0 %v864
    %4390 = vmatpush.msra.mxu0 %v860
    %4391 = vmatpush.msra.mxu0 %v856
    %4392 = vmatpush.msra.mxu0 %v852
    %4393 = vmatpush.msra.mxu0 %v848
    %4394 = vmatpush.msra.mxu0 %v844
    %4395 = vmatpush.msra.mxu0 %v840
    %4396 = vmatpush.msra.mxu0 %v836
    %4397 = vmatpush.msra.mxu0 %v832
    %4398 = vmatpush.msra.mxu0 %v828
    %4399 = vmatpush.msra.mxu0 %v824
    %4400 = vmatpush.msra.mxu0 %v820
    %4401 = vmatpush.msra.mxu0 %v816
    %4402 = vmatpush.msra.mxu0 %v812
    %4403 = vmatpush.msra.mxu0 %v808
    %4404 = vmatmul.f32.gmra.mxu0 %v4303
    %v4405 = vpop.f32.mrf.mxu0
    %v4406 = vadd.f32 0.0, %v4405
    %4407 = vdwg.mxu0
    %4408 = vmatpush.msra.mxu0 0.0
    %4409 = vmatpush.msra.mxu0 0.0
    %4410 = vmatpush.msra.mxu0 0.0
    %4411 = vmatpush.msra.mxu0 0.0
    %4412 = vmatpush.msra.mxu0 0.0
    %4413 = vmatpush.msra.mxu0 0.0
    %4414 = vmatpush.msra.mxu0 0.0
    %4415 = vmatpush.msra.mxu0 0.0
    %4416 = vmatpush.msra.mxu0 0.0
    %4417 = vmatpush.msra.mxu0 0.0
    %4418 = vmatpush.msra.mxu0 0.0
    %4419 = vmatpush.msra.mxu0 0.0
    %4420 = vmatpush.msra.mxu0 0.0
    %4421 = vmatpush.msra.mxu0 0.0
    %4422 = vmatpush.msra.mxu0 %v876
    %4423 = vmatpush.msra.mxu0 %v872
    %4424 = vmatmul.f32.gmra.mxu0 %v4306
    %v4425 = vpop.f32.mrf.mxu0
    %v4426 = vadd.f32 %v4406, %v4425
    %4427 = vdwg.mxu0
    %4428 = vmatpush.msra.mxu0 %v869
    %4429 = vmatpush.msra.mxu0 %v865
    %4430 = vmatpush.msra.mxu0 %v861
    %4431 = vmatpush.msra.mxu0 %v857
    %4432 = vmatpush.msra.mxu0 %v853
    %4433 = vmatpush.msra.mxu0 %v849
    %4434 = vmatpush.msra.mxu0 %v845
    %4435 = vmatpush.msra.mxu0 %v841
    %4436 = vmatpush.msra.mxu0 %v837
    %4437 = vmatpush.msra.mxu0 %v833
    %4438 = vmatpush.msra.mxu0 %v829
    %4439 = vmatpush.msra.mxu0 %v825
    %4440 = vmatpush.msra.mxu0 %v821
    %4441 = vmatpush.msra.mxu0 %v817
    %4442 = vmatpush.msra.mxu0 %v813
    %4443 = vmatpush.msra.mxu0 %v809
    %4444 = vmatmul.f32.gmra.mxu0 %v4303
    %v4445 = vpop.f32.mrf.mxu0
    %v4446 = vadd.f32 0.0, %v4445
    %4447 = vdwg.mxu0
    %4448 = vmatpush.msra.mxu0 0.0
    %4449 = vmatpush.msra.mxu0 0.0
    %4450 = vmatpush.msra.mxu0 0.0
    %4451 = vmatpush.msra.mxu0 0.0
    %4452 = vmatpush.msra.mxu0 0.0
    %4453 = vmatpush.msra.mxu0 0.0
    %4454 = vmatpush.msra.mxu0 0.0
    %4455 = vmatpush.msra.mxu0 0.0
    %4456 = vmatpush.msra.mxu0 0.0
    %4457 = vmatpush.msra.mxu0 0.0
    %4458 = vmatpush.msra.mxu0 0.0
    %4459 = vmatpush.msra.mxu0 0.0
    %4460 = vmatpush.msra.mxu0 0.0
    %4461 = vmatpush.msra.mxu0 0.0
    %4462 = vmatpush.msra.mxu0 %v877
    %4463 = vmatpush.msra.mxu0 %v873
    %4464 = vmatmul.f32.gmra.mxu0 %v4306
    %v4465 = vpop.f32.mrf.mxu0
    %v4466 = vadd.f32 %v4446, %v4465
    %4467 = vdwg.mxu0
    %v4468 = vadd.f32 %v1043, %v4346
    %v4469 = vadd.f32 %v1044, %v4386
    %v4470 = vadd.f32 %v1045, %v4426
    %v4471 = vadd.f32 %v1046, %v4466
    %v4473 = vrot.slane %v4303, 2
    %v4474 = vrot.slane %v4304, 2
    %v4476 = vsel %vm878, %v4474, 0
    %4478 = vmatpush.msra.mxu0 %v1116
    %4479 = vmatpush.msra.mxu0 %v1112
    %4480 = vmatpush.msra.mxu0 %v1108
    %4481 = vmatpush.msra.mxu0 %v1104
    %4482 = vmatpush.msra.mxu0 %v1100
    %4483 = vmatpush.msra.mxu0 %v1096
    %4484 = vmatpush.msra.mxu0 %v1092
    %4485 = vmatpush.msra.mxu0 %v1088
    %4486 = vmatpush.msra.mxu0 %v1084
    %4487 = vmatpush.msra.mxu0 %v1080
    %4488 = vmatpush.msra.mxu0 %v1076
    %4489 = vmatpush.msra.mxu0 %v1072
    %4490 = vmatpush.msra.mxu0 %v1068
    %4491 = vmatpush.msra.mxu0 %v1064
    %4492 = vmatpush.msra.mxu0 %v1060
    %4493 = vmatpush.msra.mxu0 %v1056
    %4494 = vmatmul.f32.gmra.mxu0 %v4473
    %v4495 = vpop.f32.mrf.mxu0
    %v4496 = vadd.f32 0.0, %v4495
    %4497 = vdwg.mxu0
    %4498 = vmatpush.msra.mxu0 0.0
    %4499 = vmatpush.msra.mxu0 0.0
    %4500 = vmatpush.msra.mxu0 0.0
    %4501 = vmatpush.msra.mxu0 0.0
    %4502 = vmatpush.msra.mxu0 0.0
    %4503 = vmatpush.msra.mxu0 0.0
    %4504 = vmatpush.msra.mxu0 0.0
    %4505 = vmatpush.msra.mxu0 0.0
    %4506 = vmatpush.msra.mxu0 0.0
    %4507 = vmatpush.msra.mxu0 0.0
    %4508 = vmatpush.msra.mxu0 0.0
    %4509 = vmatpush.msra.mxu0 0.0
    %4510 = vmatpush.msra.mxu0 0.0
    %4511 = vmatpush.msra.mxu0 0.0
    %4512 = vmatpush.msra.mxu0 %v1124
    %4513 = vmatpush.msra.mxu0 %v1120
    %4514 = vmatmul.f32.gmra.mxu0 %v4476
    %v4515 = vpop.f32.mrf.mxu0
    %v4516 = vadd.f32 %v4496, %v4515
    %4517 = vdwg.mxu0
    %4518 = vmatpush.msra.mxu0 %v1117
    %4519 = vmatpush.msra.mxu0 %v1113
    %4520 = vmatpush.msra.mxu0 %v1109
    %4521 = vmatpush.msra.mxu0 %v1105
    %4522 = vmatpush.msra.mxu0 %v1101
    %4523 = vmatpush.msra.mxu0 %v1097
    %4524 = vmatpush.msra.mxu0 %v1093
    %4525 = vmatpush.msra.mxu0 %v1089
    %4526 = vmatpush.msra.mxu0 %v1085
    %4527 = vmatpush.msra.mxu0 %v1081
    %4528 = vmatpush.msra.mxu0 %v1077
    %4529 = vmatpush.msra.mxu0 %v1073
    %4530 = vmatpush.msra.mxu0 %v1069
    %4531 = vmatpush.msra.mxu0 %v1065
    %4532 = vmatpush.msra.mxu0 %v1061
    %4533 = vmatpush.msra.mxu0 %v1057
    %4534 = vmatmul.f32.gmra.mxu0 %v4473
    %v4535 = vpop.f32.mrf.mxu0
    %v4536 = vadd.f32 0.0, %v4535
    %4537 = vdwg.mxu0
    %4538 = vmatpush.msra.mxu0 0.0
    %4539 = vmatpush.msra.mxu0 0.0
    %4540 = vmatpush.msra.mxu0 0.0
    %4541 = vmatpush.msra.mxu0 0.0
    %4542 = vmatpush.msra.mxu0 0.0
    %4543 = vmatpush.msra.mxu0 0.0
    %4544 = vmatpush.msra.mxu0 0.0
    %4545 = vmatpush.msra.mxu0 0.0
    %4546 = vmatpush.msra.mxu0 0.0
    %4547 = vmatpush.msra.mxu0 0.0
    %4548 = vmatpush.msra.mxu0 0.0
    %4549 = vmatpush.msra.mxu0 0.0
    %4550 = vmatpush.msra.mxu0 0.0
    %4551 = vmatpush.msra.mxu0 0.0
    %4552 = vmatpush.msra.mxu0 %v1125
    %4553 = vmatpush.msra.mxu0 %v1121
    %4554 = vmatmul.f32.gmra.mxu0 %v4476
    %v4555 = vpop.f32.mrf.mxu0
    %v4556 = vadd.f32 %v4536, %v4555
    %4557 = vdwg.mxu0
    %4558 = vmatpush.msra.mxu0 %v1118
    %4559 = vmatpush.msra.mxu0 %v1114
    %4560 = vmatpush.msra.mxu0 %v1110
    %4561 = vmatpush.msra.mxu0 %v1106
    %4562 = vmatpush.msra.mxu0 %v1102
    %4563 = vmatpush.msra.mxu0 %v1098
    %4564 = vmatpush.msra.mxu0 %v1094
    %4565 = vmatpush.msra.mxu0 %v1090
    %4566 = vmatpush.msra.mxu0 %v1086
    %4567 = vmatpush.msra.mxu0 %v1082
    %4568 = vmatpush.msra.mxu0 %v1078
    %4569 = vmatpush.msra.mxu0 %v1074
    %4570 = vmatpush.msra.mxu0 %v1070
    %4571 = vmatpush.msra.mxu0 %v1066
    %4572 = vmatpush.msra.mxu0 %v1062
    %4573 = vmatpush.msra.mxu0 %v1058
    %4574 = vmatmul.f32.gmra.mxu0 %v4473
    %v4575 = vpop.f32.mrf.mxu0
    %v4576 = vadd.f32 0.0, %v4575
    %4577 = vdwg.mxu0
    %4578 = vmatpush.msra.mxu0 0.0
    %4579 = vmatpush.msra.mxu0 0.0
    %4580 = vmatpush.msra.mxu0 0.0
    %4581 = vmatpush.msra.mxu0 0.0
    %4582 = vmatpush.msra.mxu0 0.0
    %4583 = vmatpush.msra.mxu0 0.0
    %4584 = vmatpush.msra.mxu0 0.0
    %4585 = vmatpush.msra.mxu0 0.0
    %4586 = vmatpush.msra.mxu0 0.0
    %4587 = vmatpush.msra.mxu0 0.0
    %4588 = vmatpush.msra.mxu0 0.0
    %4589 = vmatpush.msra.mxu0 0.0
    %4590 = vmatpush.msra.mxu0 0.0
    %4591 = vmatpush.msra.mxu0 0.0
    %4592 = vmatpush.msra.mxu0 %v1126
    %4593 = vmatpush.msra.mxu0 %v1122
    %4594 = vmatmul.f32.gmra.mxu0 %v4476
    %v4595 = vpop.f32.mrf.mxu0
    %v4596 = vadd.f32 %v4576, %v4595
    %4597 = vdwg.mxu0
    %4598 = vmatpush.msra.mxu0 %v1119
    %4599 = vmatpush.msra.mxu0 %v1115
    %4600 = vmatpush.msra.mxu0 %v1111
    %4601 = vmatpush.msra.mxu0 %v1107
    %4602 = vmatpush.msra.mxu0 %v1103
    %4603 = vmatpush.msra.mxu0 %v1099
    %4604 = vmatpush.msra.mxu0 %v1095
    %4605 = vmatpush.msra.mxu0 %v1091
    %4606 = vmatpush.msra.mxu0 %v1087
    %4607 = vmatpush.msra.mxu0 %v1083
    %4608 = vmatpush.msra.mxu0 %v1079
    %4609 = vmatpush.msra.mxu0 %v1075
    %4610 = vmatpush.msra.mxu0 %v1071
    %4611 = vmatpush.msra.mxu0 %v1067
    %4612 = vmatpush.msra.mxu0 %v1063
    %4613 = vmatpush.msra.mxu0 %v1059
    %4614 = vmatmul.f32.gmra.mxu0 %v4473
    %v4615 = vpop.f32.mrf.mxu0
    %v4616 = vadd.f32 0.0, %v4615
    %4617 = vdwg.mxu0
    %4618 = vmatpush.msra.mxu0 0.0
    %4619 = vmatpush.msra.mxu0 0.0
    %4620 = vmatpush.msra.mxu0 0.0
    %4621 = vmatpush.msra.mxu0 0.0
    %4622 = vmatpush.msra.mxu0 0.0
    %4623 = vmatpush.msra.mxu0 0.0
    %4624 = vmatpush.msra.mxu0 0.0
    %4625 = vmatpush.msra.mxu0 0.0
    %4626 = vmatpush.msra.mxu0 0.0
    %4627 = vmatpush.msra.mxu0 0.0
    %4628 = vmatpush.msra.mxu0 0.0
    %4629 = vmatpush.msra.mxu0 0.0
    %4630 = vmatpush.msra.mxu0 0.0
    %4631 = vmatpush.msra.mxu0 0.0
    %4632 = vmatpush.msra.mxu0 %v1127
    %4633 = vmatpush.msra.mxu0 %v1123
    %4634 = vmatmul.f32.gmra.mxu0 %v4476
    %v4635 = vpop.f32.mrf.mxu0
    %v4636 = vadd.f32 %v4616, %v4635
    %4637 = vdwg.mxu0
    %v4638 = vadd.f32 %v4468, %v4516
    %v4639 = vadd.f32 %v4469, %v4556
    %v4640 = vadd.f32 %v4470, %v4596
    %v4641 = vadd.f32 %v4471, %v4636
    %v4642 = vrot.slane %v4303, 4
    %v4643 = vrot.slane %v4304, 4
    %v4645 = vsel %vm878, %v4643, 0
    %4647 = vmatpush.msra.mxu0 %v1359
    %4648 = vmatpush.msra.mxu0 %v1355
    %4649 = vmatpush.msra.mxu0 %v1351
    %4650 = vmatpush.msra.mxu0 %v1347
    %4651 = vmatpush.msra.mxu0 %v1343
    %4652 = vmatpush.msra.mxu0 %v1339
    %4653 = vmatpush.msra.mxu0 %v1335
    %4654 = vmatpush.msra.mxu0 %v1331
    %4655 = vmatpush.msra.mxu0 %v1327
    %4656 = vmatpush.msra.mxu0 %v1323
    %4657 = vmatpush.msra.mxu0 %v1319
    %4658 = vmatpush.msra.mxu0 %v1315
    %4659 = vmatpush.msra.mxu0 %v1311
    %4660 = vmatpush.msra.mxu0 %v1307
    %4661 = vmatpush.msra.mxu0 %v1303
    %4662 = vmatpush.msra.mxu0 %v1299
    %4663 = vmatmul.f32.gmra.mxu0 %v4642
    %v4664 = vpop.f32.mrf.mxu0
    %v4665 = vadd.f32 0.0, %v4664
    %4666 = vdwg.mxu0
    %4667 = vmatpush.msra.mxu0 0.0
    %4668 = vmatpush.msra.mxu0 0.0
    %4669 = vmatpush.msra.mxu0 0.0
    %4670 = vmatpush.msra.mxu0 0.0
    %4671 = vmatpush.msra.mxu0 0.0
    %4672 = vmatpush.msra.mxu0 0.0
    %4673 = vmatpush.msra.mxu0 0.0
    %4674 = vmatpush.msra.mxu0 0.0
    %4675 = vmatpush.msra.mxu0 0.0
    %4676 = vmatpush.msra.mxu0 0.0
    %4677 = vmatpush.msra.mxu0 0.0
    %4678 = vmatpush.msra.mxu0 0.0
    %4679 = vmatpush.msra.mxu0 0.0
    %4680 = vmatpush.msra.mxu0 0.0
    %4681 = vmatpush.msra.mxu0 %v1367
    %4682 = vmatpush.msra.mxu0 %v1363
    %4683 = vmatmul.f32.gmra.mxu0 %v4645
    %v4684 = vpop.f32.mrf.mxu0
    %v4685 = vadd.f32 %v4665, %v4684
    %4686 = vdwg.mxu0
    %4687 = vmatpush.msra.mxu0 %v1360
    %4688 = vmatpush.msra.mxu0 %v1356
    %4689 = vmatpush.msra.mxu0 %v1352
    %4690 = vmatpush.msra.mxu0 %v1348
    %4691 = vmatpush.msra.mxu0 %v1344
    %4692 = vmatpush.msra.mxu0 %v1340
    %4693 = vmatpush.msra.mxu0 %v1336
    %4694 = vmatpush.msra.mxu0 %v1332
    %4695 = vmatpush.msra.mxu0 %v1328
    %4696 = vmatpush.msra.mxu0 %v1324
    %4697 = vmatpush.msra.mxu0 %v1320
    %4698 = vmatpush.msra.mxu0 %v1316
    %4699 = vmatpush.msra.mxu0 %v1312
    %4700 = vmatpush.msra.mxu0 %v1308
    %4701 = vmatpush.msra.mxu0 %v1304
    %4702 = vmatpush.msra.mxu0 %v1300
    %4703 = vmatmul.f32.gmra.mxu0 %v4642
    %v4704 = vpop.f32.mrf.mxu0
    %v4705 = vadd.f32 0.0, %v4704
    %4706 = vdwg.mxu0
    %4707 = vmatpush.msra.mxu0 0.0
    %4708 = vmatpush.msra.mxu0 0.0
    %4709 = vmatpush.msra.mxu0 0.0
    %4710 = vmatpush.msra.mxu0 0.0
    %4711 = vmatpush.msra.mxu0 0.0
    %4712 = vmatpush.msra.mxu0 0.0
    %4713 = vmatpush.msra.mxu0 0.0
    %4714 = vmatpush.msra.mxu0 0.0
    %4715 = vmatpush.msra.mxu0 0.0
    %4716 = vmatpush.msra.mxu0 0.0
    %4717 = vmatpush.msra.mxu0 0.0
    %4718 = vmatpush.msra.mxu0 0.0
    %4719 = vmatpush.msra.mxu0 0.0
    %4720 = vmatpush.msra.mxu0 0.0
    %4721 = vmatpush.msra.mxu0 %v1368
    %4722 = vmatpush.msra.mxu0 %v1364
    %4723 = vmatmul.f32.gmra.mxu0 %v4645
    %v4724 = vpop.f32.mrf.mxu0
    %v4725 = vadd.f32 %v4705, %v4724
    %4726 = vdwg.mxu0
    %4727 = vmatpush.msra.mxu0 %v1361
    %4728 = vmatpush.msra.mxu0 %v1357
    %4729 = vmatpush.msra.mxu0 %v1353
    %4730 = vmatpush.msra.mxu0 %v1349
    %4731 = vmatpush.msra.mxu0 %v1345
    %4732 = vmatpush.msra.mxu0 %v1341
    %4733 = vmatpush.msra.mxu0 %v1337
    %4734 = vmatpush.msra.mxu0 %v1333
    %4735 = vmatpush.msra.mxu0 %v1329
    %4736 = vmatpush.msra.mxu0 %v1325
    %4737 = vmatpush.msra.mxu0 %v1321
    %4738 = vmatpush.msra.mxu0 %v1317
    %4739 = vmatpush.msra.mxu0 %v1313
    %4740 = vmatpush.msra.mxu0 %v1309
    %4741 = vmatpush.msra.mxu0 %v1305
    %4742 = vmatpush.msra.mxu0 %v1301
    %4743 = vmatmul.f32.gmra.mxu0 %v4642
    %v4744 = vpop.f32.mrf.mxu0
    %v4745 = vadd.f32 0.0, %v4744
    %4746 = vdwg.mxu0
    %4747 = vmatpush.msra.mxu0 0.0
    %4748 = vmatpush.msra.mxu0 0.0
    %4749 = vmatpush.msra.mxu0 0.0
    %4750 = vmatpush.msra.mxu0 0.0
    %4751 = vmatpush.msra.mxu0 0.0
    %4752 = vmatpush.msra.mxu0 0.0
    %4753 = vmatpush.msra.mxu0 0.0
    %4754 = vmatpush.msra.mxu0 0.0
    %4755 = vmatpush.msra.mxu0 0.0
    %4756 = vmatpush.msra.mxu0 0.0
    %4757 = vmatpush.msra.mxu0 0.0
    %4758 = vmatpush.msra.mxu0 0.0
    %4759 = vmatpush.msra.mxu0 0.0
    %4760 = vmatpush.msra.mxu0 0.0
    %4761 = vmatpush.msra.mxu0 %v1369
    %4762 = vmatpush.msra.mxu0 %v1365
    %4763 = vmatmul.f32.gmra.mxu0 %v4645
    %v4764 = vpop.f32.mrf.mxu0
    %v4765 = vadd.f32 %v4745, %v4764
    %4766 = vdwg.mxu0
    %4767 = vmatpush.msra.mxu0 %v1362
    %4768 = vmatpush.msra.mxu0 %v1358
    %4769 = vmatpush.msra.mxu0 %v1354
    %4770 = vmatpush.msra.mxu0 %v1350
    %4771 = vmatpush.msra.mxu0 %v1346
    %4772 = vmatpush.msra.mxu0 %v1342
    %4773 = vmatpush.msra.mxu0 %v1338
    %4774 = vmatpush.msra.mxu0 %v1334
    %4775 = vmatpush.msra.mxu0 %v1330
    %4776 = vmatpush.msra.mxu0 %v1326
    %4777 = vmatpush.msra.mxu0 %v1322
    %4778 = vmatpush.msra.mxu0 %v1318
    %4779 = vmatpush.msra.mxu0 %v1314
    %4780 = vmatpush.msra.mxu0 %v1310
    %4781 = vmatpush.msra.mxu0 %v1306
    %4782 = vmatpush.msra.mxu0 %v1302
    %4783 = vmatmul.f32.gmra.mxu0 %v4642
    %v4784 = vpop.f32.mrf.mxu0
    %v4785 = vadd.f32 0.0, %v4784
    %4786 = vdwg.mxu0
    %4787 = vmatpush.msra.mxu0 0.0
    %4788 = vmatpush.msra.mxu0 0.0
    %4789 = vmatpush.msra.mxu0 0.0
    %4790 = vmatpush.msra.mxu0 0.0
    %4791 = vmatpush.msra.mxu0 0.0
    %4792 = vmatpush.msra.mxu0 0.0
    %4793 = vmatpush.msra.mxu0 0.0
    %4794 = vmatpush.msra.mxu0 0.0
    %4795 = vmatpush.msra.mxu0 0.0
    %4796 = vmatpush.msra.mxu0 0.0
    %4797 = vmatpush.msra.mxu0 0.0
    %4798 = vmatpush.msra.mxu0 0.0
    %4799 = vmatpush.msra.mxu0 0.0
    %4800 = vmatpush.msra.mxu0 0.0
    %4801 = vmatpush.msra.mxu0 %v1370
    %4802 = vmatpush.msra.mxu0 %v1366
    %4803 = vmatmul.f32.gmra.mxu0 %v4645
    %v4804 = vpop.f32.mrf.mxu0
    %v4805 = vadd.f32 %v4785, %v4804
    %4806 = vdwg.mxu0
    %v4807 = vadd.f32 %v4638, %v4685
    %v4808 = vadd.f32 %v4639, %v4725
    %v4809 = vadd.f32 %v4640, %v4765
    %v4810 = vadd.f32 %v4641, %v4805
    %v4811 = vrot.slane %v4303, 6
    %v4812 = vrot.slane %v4304, 6
    %v4814 = vsel %vm878, %v4812, 0
    %4816 = vmatpush.msra.mxu0 %v1601
    %4817 = vmatpush.msra.mxu0 %v1597
    %4818 = vmatpush.msra.mxu0 %v1593
    %4819 = vmatpush.msra.mxu0 %v1589
    %4820 = vmatpush.msra.mxu0 %v1585
    %4821 = vmatpush.msra.mxu0 %v1581
    %4822 = vmatpush.msra.mxu0 %v1577
    %4823 = vmatpush.msra.mxu0 %v1573
    %4824 = vmatpush.msra.mxu0 %v1569
    %4825 = vmatpush.msra.mxu0 %v1565
    %4826 = vmatpush.msra.mxu0 %v1561
    %4827 = vmatpush.msra.mxu0 %v1557
    %4828 = vmatpush.msra.mxu0 %v1553
    %4829 = vmatpush.msra.mxu0 %v1549
    %4830 = vmatpush.msra.mxu0 %v1545
    %4831 = vmatpush.msra.mxu0 %v1541
    %4832 = vmatmul.f32.gmra.mxu0 %v4811
    %v4833 = vpop.f32.mrf.mxu0
    %v4834 = vadd.f32 0.0, %v4833
    %4835 = vdwg.mxu0
    %4836 = vmatpush.msra.mxu0 0.0
    %4837 = vmatpush.msra.mxu0 0.0
    %4838 = vmatpush.msra.mxu0 0.0
    %4839 = vmatpush.msra.mxu0 0.0
    %4840 = vmatpush.msra.mxu0 0.0
    %4841 = vmatpush.msra.mxu0 0.0
    %4842 = vmatpush.msra.mxu0 0.0
    %4843 = vmatpush.msra.mxu0 0.0
    %4844 = vmatpush.msra.mxu0 0.0
    %4845 = vmatpush.msra.mxu0 0.0
    %4846 = vmatpush.msra.mxu0 0.0
    %4847 = vmatpush.msra.mxu0 0.0
    %4848 = vmatpush.msra.mxu0 0.0
    %4849 = vmatpush.msra.mxu0 0.0
    %4850 = vmatpush.msra.mxu0 %v1609
    %4851 = vmatpush.msra.mxu0 %v1605
    %4852 = vmatmul.f32.gmra.mxu0 %v4814
    %v4853 = vpop.f32.mrf.mxu0
    %v4854 = vadd.f32 %v4834, %v4853
    %4855 = vdwg.mxu0
    %4856 = vmatpush.msra.mxu0 %v1602
    %4857 = vmatpush.msra.mxu0 %v1598
    %4858 = vmatpush.msra.mxu0 %v1594
    %4859 = vmatpush.msra.mxu0 %v1590
    %4860 = vmatpush.msra.mxu0 %v1586
    %4861 = vmatpush.msra.mxu0 %v1582
    %4862 = vmatpush.msra.mxu0 %v1578
    %4863 = vmatpush.msra.mxu0 %v1574
    %4864 = vmatpush.msra.mxu0 %v1570
    %4865 = vmatpush.msra.mxu0 %v1566
    %4866 = vmatpush.msra.mxu0 %v1562
    %4867 = vmatpush.msra.mxu0 %v1558
    %4868 = vmatpush.msra.mxu0 %v1554
    %4869 = vmatpush.msra.mxu0 %v1550
    %4870 = vmatpush.msra.mxu0 %v1546
    %4871 = vmatpush.msra.mxu0 %v1542
    %4872 = vmatmul.f32.gmra.mxu0 %v4811
    %v4873 = vpop.f32.mrf.mxu0
    %v4874 = vadd.f32 0.0, %v4873
    %4875 = vdwg.mxu0
    %4876 = vmatpush.msra.mxu0 0.0
    %4877 = vmatpush.msra.mxu0 0.0
    %4878 = vmatpush.msra.mxu0 0.0
    %4879 = vmatpush.msra.mxu0 0.0
    %4880 = vmatpush.msra.mxu0 0.0
    %4881 = vmatpush.msra.mxu0 0.0
    %4882 = vmatpush.msra.mxu0 0.0
    %4883 = vmatpush.msra.mxu0 0.0
    %4884 = vmatpush.msra.mxu0 0.0
    %4885 = vmatpush.msra.mxu0 0.0
    %4886 = vmatpush.msra.mxu0 0.0
    %4887 = vmatpush.msra.mxu0 0.0
    %4888 = vmatpush.msra.mxu0 0.0
    %4889 = vmatpush.msra.mxu0 0.0
    %4890 = vmatpush.msra.mxu0 %v1610
    %4891 = vmatpush.msra.mxu0 %v1606
    %4892 = vmatmul.f32.gmra.mxu0 %v4814
    %v4893 = vpop.f32.mrf.mxu0
    %v4894 = vadd.f32 %v4874, %v4893
    %4895 = vdwg.mxu0
    %4896 = vmatpush.msra.mxu0 %v1603
    %4897 = vmatpush.msra.mxu0 %v1599
    %4898 = vmatpush.msra.mxu0 %v1595
    %4899 = vmatpush.msra.mxu0 %v1591
    %4900 = vmatpush.msra.mxu0 %v1587
    %4901 = vmatpush.msra.mxu0 %v1583
    %4902 = vmatpush.msra.mxu0 %v1579
    %4903 = vmatpush.msra.mxu0 %v1575
    %4904 = vmatpush.msra.mxu0 %v1571
    %4905 = vmatpush.msra.mxu0 %v1567
    %4906 = vmatpush.msra.mxu0 %v1563
    %4907 = vmatpush.msra.mxu0 %v1559
    %4908 = vmatpush.msra.mxu0 %v1555
    %4909 = vmatpush.msra.mxu0 %v1551
    %4910 = vmatpush.msra.mxu0 %v1547
    %4911 = vmatpush.msra.mxu0 %v1543
    %4912 = vmatmul.f32.gmra.mxu0 %v4811
    %v4913 = vpop.f32.mrf.mxu0
    %v4914 = vadd.f32 0.0, %v4913
    %4915 = vdwg.mxu0
    %4916 = vmatpush.msra.mxu0 0.0
    %4917 = vmatpush.msra.mxu0 0.0
    %4918 = vmatpush.msra.mxu0 0.0
    %4919 = vmatpush.msra.mxu0 0.0
    %4920 = vmatpush.msra.mxu0 0.0
    %4921 = vmatpush.msra.mxu0 0.0
    %4922 = vmatpush.msra.mxu0 0.0
    %4923 = vmatpush.msra.mxu0 0.0
    %4924 = vmatpush.msra.mxu0 0.0
    %4925 = vmatpush.msra.mxu0 0.0
    %4926 = vmatpush.msra.mxu0 0.0
    %4927 = vmatpush.msra.mxu0 0.0
    %4928 = vmatpush.msra.mxu0 0.0
    %4929 = vmatpush.msra.mxu0 0.0
    %4930 = vmatpush.msra.mxu0 %v1611
    %4931 = vmatpush.msra.mxu0 %v1607
    %4932 = vmatmul.f32.gmra.mxu0 %v4814
    %v4933 = vpop.f32.mrf.mxu0
    %v4934 = vadd.f32 %v4914, %v4933
    %4935 = vdwg.mxu0
    %4936 = vmatpush.msra.mxu0 %v1604
    %4937 = vmatpush.msra.mxu0 %v1600
    %4938 = vmatpush.msra.mxu0 %v1596
    %4939 = vmatpush.msra.mxu0 %v1592
    %4940 = vmatpush.msra.mxu0 %v1588
    %4941 = vmatpush.msra.mxu0 %v1584
    %4942 = vmatpush.msra.mxu0 %v1580
    %4943 = vmatpush.msra.mxu0 %v1576
    %4944 = vmatpush.msra.mxu0 %v1572
    %4945 = vmatpush.msra.mxu0 %v1568
    %4946 = vmatpush.msra.mxu0 %v1564
    %4947 = vmatpush.msra.mxu0 %v1560
    %4948 = vmatpush.msra.mxu0 %v1556
    %4949 = vmatpush.msra.mxu0 %v1552
    %4950 = vmatpush.msra.mxu0 %v1548
    %4951 = vmatpush.msra.mxu0 %v1544
    %4952 = vmatmul.f32.gmra.mxu0 %v4811
    %v4953 = vpop.f32.mrf.mxu0
    %v4954 = vadd.f32 0.0, %v4953
    %4955 = vdwg.mxu0
    %4956 = vmatpush.msra.mxu0 0.0
    %4957 = vmatpush.msra.mxu0 0.0
    %4958 = vmatpush.msra.mxu0 0.0
    %4959 = vmatpush.msra.mxu0 0.0
    %4960 = vmatpush.msra.mxu0 0.0
    %4961 = vmatpush.msra.mxu0 0.0
    %4962 = vmatpush.msra.mxu0 0.0
    %4963 = vmatpush.msra.mxu0 0.0
    %4964 = vmatpush.msra.mxu0 0.0
    %4965 = vmatpush.msra.mxu0 0.0
    %4966 = vmatpush.msra.mxu0 0.0
    %4967 = vmatpush.msra.mxu0 0.0
    %4968 = vmatpush.msra.mxu0 0.0
    %4969 = vmatpush.msra.mxu0 0.0
    %4970 = vmatpush.msra.mxu0 %v1612
    %4971 = vmatpush.msra.mxu0 %v1608
    %4972 = vmatmul.f32.gmra.mxu0 %v4814
    %v4973 = vpop.f32.mrf.mxu0
    %v4974 = vadd.f32 %v4954, %v4973
    %4975 = vdwg.mxu0
    %v4976 = vadd.f32 %v4807, %v4854
    %v4977 = vadd.f32 %v4808, %v4894
    %v4978 = vadd.f32 %v4809, %v4934
    %v4979 = vadd.f32 %v4810, %v4974
    %v4980 = vsub.f32 %v4976, %v4039
    %v4981 = vsub.f32 %v4977, %v4040
    %v4982 = vsub.f32 %v4978, %v4041
    %v4983 = vsub.f32 %v4979, %v4042
    %v4984 = vmul.f32 %v4980, 0.5
    %v4985 = vmul.f32 %v4981, 0.5
    %v4986 = vmul.f32 %v4982, 0.5
    %v4987 = vmul.f32 %v4983, 0.5
    %v4988 = vadd.f32 %v4039, %v4984
    %v4989 = vadd.f32 %v4040, %v4985
    %v4990 = vadd.f32 %v4041, %v4986
    %v4991 = vadd.f32 %v4042, %v4987
    %vm4992 = vcmp.ge.f32.partialorder %v4988, 1.0
    %vm4993 = vcmp.ge.f32.partialorder %v4989, 1.0
    %vm4994 = vcmp.ge.f32.partialorder %v4990, 1.0
    %vm4995 = vcmp.ge.f32.partialorder %v4991, 1.0
    %v4996 = vsel %vm4992, 1, 0
    %v4997 = vsel %vm4993, 1, 0
    %v4998 = vsel %vm4994, 1, 0
    %v4999 = vsel %vm4995, 1, 0
    %v5000 = vcvt.s32.f32 %v4996
    %v5001 = vcvt.s32.f32 %v4997
    %v5002 = vcvt.s32.f32 %v4998
    %v5003 = vcvt.s32.f32 %v4999
    %v5004 = vpack.c.bf16 %v5000, %v5000
    %v5005 = vpack.c.bf16 %v5001, %v5001
    %v5006 = vpack.c.bf16 %v5002, %v5002
    %v5007 = vpack.c.bf16 %v5003, %v5003
    %5008 = vmatpush.bf16.msra.mxu0 %v2013
    %5009 = vmatpush.bf16.msra.mxu0 %v2012
    %5010 = vmatpush.bf16.msra.mxu0 %v2011
    %5011 = vmatpush.bf16.msra.mxu0 %v2010
    %5012 = vmatpush.bf16.msra.mxu0 %v2009
    %5013 = vmatpush.bf16.msra.mxu0 %v2008
    %5014 = vmatpush.bf16.msra.mxu0 %v2007
    %5015 = vmatpush.bf16.msra.mxu0 %v2006
    %5016 = vmatmul.bf16.gmra.mxu0 %v5004
    %v5017 = vpop.f32.mrf.mxu0
    %v5018 = vadd.f32 0.0, %v5017
    %v5019 = vpop.f32.mrf.mxu0
    %5020 = vdwg.mxu0
    %5021 = vmatpush.bf16.msra.mxu0 %v2021
    %5022 = vmatpush.bf16.msra.mxu0 %v2020
    %5023 = vmatpush.bf16.msra.mxu0 %v2019
    %5024 = vmatpush.bf16.msra.mxu0 %v2018
    %5025 = vmatpush.bf16.msra.mxu0 %v2017
    %5026 = vmatpush.bf16.msra.mxu0 %v2016
    %5027 = vmatpush.bf16.msra.mxu0 %v2015
    %5028 = vmatpush.bf16.msra.mxu0 %v2014
    %5029 = vmatmul.bf16.gmra.mxu0 %v5005
    %v5030 = vpop.f32.mrf.mxu0
    %v5031 = vadd.f32 %v5018, %v5030
    %v5032 = vpop.f32.mrf.mxu0
    %5033 = vdwg.mxu0
    %5034 = vmatpush.bf16.msra.mxu0 %v2029
    %5035 = vmatpush.bf16.msra.mxu0 %v2028
    %5036 = vmatpush.bf16.msra.mxu0 %v2027
    %5037 = vmatpush.bf16.msra.mxu0 %v2026
    %5038 = vmatpush.bf16.msra.mxu0 %v2025
    %5039 = vmatpush.bf16.msra.mxu0 %v2024
    %5040 = vmatpush.bf16.msra.mxu0 %v2023
    %5041 = vmatpush.bf16.msra.mxu0 %v2022
    %5042 = vmatmul.bf16.gmra.mxu0 %v5006
    %v5043 = vpop.f32.mrf.mxu0
    %v5044 = vadd.f32 %v5031, %v5043
    %v5045 = vpop.f32.mrf.mxu0
    %5046 = vdwg.mxu0
    %5047 = vmatpush.bf16.msra.mxu0 %v2037
    %5048 = vmatpush.bf16.msra.mxu0 %v2036
    %5049 = vmatpush.bf16.msra.mxu0 %v2035
    %5050 = vmatpush.bf16.msra.mxu0 %v2034
    %5051 = vmatpush.bf16.msra.mxu0 %v2033
    %5052 = vmatpush.bf16.msra.mxu0 %v2032
    %5053 = vmatpush.bf16.msra.mxu0 %v2031
    %5054 = vmatpush.bf16.msra.mxu0 %v2030
    %5055 = vmatmul.bf16.gmra.mxu0 %v5007
    %v5056 = vpop.f32.mrf.mxu0
    %v5057 = vadd.f32 %v5044, %v5056
    %v5058 = vpop.f32.mrf.mxu0
    %5059 = vdwg.mxu0
    %vm5060 = vcmp.gt.f32.partialorder %v5057, 0.5
    %v5061 = vsel %vm5060, 1, 0
    %v5062 = vcvt.s32.f32 %v5061
    %5063 = vmatpush.msra.mxu0 %v2140
    %5064 = vmatpush.msra.mxu0 %v2139
    %5065 = vmatpush.msra.mxu0 %v2138
    %5066 = vmatpush.msra.mxu0 %v2137
    %5067 = vmatpush.msra.mxu0 %v2136
    %5068 = vmatpush.msra.mxu0 %v2135
    %5069 = vmatpush.msra.mxu0 %v2134
    %5070 = vmatpush.msra.mxu0 %v2133
    %5071 = vmatpush.msra.mxu0 %v2132
    %5072 = vmatpush.msra.mxu0 %v2131
    %5073 = vmatpush.msra.mxu0 %v2130
    %5074 = vmatpush.msra.mxu0 %v2129
    %5075 = vmatpush.msra.mxu0 %v2128
    %5076 = vmatpush.msra.mxu0 %v2127
    %5077 = vmatpush.msra.mxu0 %v2126
    %5078 = vmatpush.msra.mxu0 %v2125
    %5079 = vmatmul.f32.gmra.mxu0 %v5062
    %v5080 = vpop.f32.mrf.mxu0
    %v5081 = vadd.f32 %v2143, %v5080
    %5082 = vdwg.mxu0
    %v5083 = vsub.f32 %v5081, %v4129
    %v5084 = vmul.f32 %v5083, 0.5
    %v5085 = vadd.f32 %v4129, %v5084
    %vm5086 = vcmp.ge.f32.partialorder %v5085, 1.0
    %v5087 = vsel %vm5086, 1, 0
    %v5088 = vcvt.s32.f32 %v5087
    %v5089 = vadd.f32 %v4130, %v5088
    %v5090 = vmul.f32 %v5089, 0.25
    %vm5091 = vcmask 74752
    %5092 = vst.msk [vmem:[#allocation2] sm:$0x3] %vm5091, %v5090
    %v5093 = vld [vmem:[%s8] sm:$0x3]
    %v5094 = vsub.f32 %v5090, %v5093
    %v5095 = vmul.f32 %v5094, %v5094
    %v5096 = vsel %vm5091, %v5095, 0.0
    %5097 = vadd.xlane.f32.xlu0 %v5096
    %v5098 = vpop.xlane.xlu0 %5097
    %v5099 = vrot.slane %v5098, 4
    %v5100 = vadd.f32 %v5098, %v5099
    %v5101 = vrot.slane %v5100, 2
    %v5102 = vadd.f32 %v5100, %v5101
    %v5103 = vrot.slane %v5102, 1
    %v5104 = vadd.f32 %v5102, %v5103
    %s5105 = vtos %v5104
    %v5106 = vstv %s5105
    %v5107 = vrcp.pop 20.0
    %v5108 = vmul.f32 20.0, %v5107
    %v5109 = vsub.f32 1.0, %v5108
    %v5110 = vmul.f32 %v5107, %v5109
    %v5111 = vadd.f32 %v5107, %v5110
    %vm5112 = vweird.f32 %v5107
    %v5113 = vsel %vm5112, %v5107, %v5111
    %v5114 = vmul.f32 %v5106, %v5113
    %vm5115 = vcmask 0
    %5116 = vst.msk [vmem:[#allocation4] sm:$0x1] %vm5115, %v5114
    // Predicated region
    $region38: #{csnn_forward.1} parent=1 // pred_check
      _
    $region39: #{csnn_forward.1} parent=1 // pred_check_branch
      %5118 = sbr.rel (0) target = $region41
    $region40: #{csnn_forward.1} parent=1 // pred_region
      %5120 = vsyncadd [#allocation3], 0
      %s5122 = sshll.u32 [#allocation2], 4
      %s5123 = int_to_ptr.vmem [resolvable:$true] %s5122
      %s5124 = sshll.u32 %s9, 4
      %s5125 = int_to_ptr.hbm [resolvable:$true] %s5124
      %5127 = dma.vmem_to_hbm [thread:$0]  %s5123, 32, %s5125, [#allocation3]
    $region41: #{csnn_forward.1} parent=1 // pred_fallthru
      _
    // Predicated region
    $region42: #{csnn_forward.1} parent=1 // pred_check
      _
    $region43: #{csnn_forward.1} parent=1 // pred_check_branch
      %5129 = sbr.rel (0) target = $region45
    $region44: #{csnn_forward.1} parent=1 // pred_region
      %5131 = vsyncadd [#allocation5], 0
      %s5133 = sshll.u32 [#allocation4], 4
      %s5134 = int_to_ptr.vmem [resolvable:$true] %s5133
      %s5135 = sshll.u32 %s10, 4
      %s5136 = int_to_ptr.hbm [resolvable:$true] %s5135
      %5138 = dma.vmem_to_hbm [thread:$0]  %s5134, 16, %s5136, [#allocation5]
    $region45: #{csnn_forward.1} parent=1 // pred_fallthru
      _
    // Predicated region
    $region46: #{csnn_forward.1} parent=1 // pred_check
      _
    $region47: #{csnn_forward.1} parent=1 // pred_check_branch
      %5140 = sbr.rel (0) target = $region49
    $region48: #{csnn_forward.1} parent=1 // pred_region
      %5142 = dma.done [#allocation3], 32
    $region49: #{csnn_forward.1} parent=1 // pred_fallthru
      _
    // Predicated region
    $region50: #{csnn_forward.1} parent=1 // pred_check
      _
    $region51: #{csnn_forward.1} parent=1 // pred_check_branch
      %5144 = sbr.rel (0) target = $region53
    $region52: #{csnn_forward.1} parent=1 // pred_region
      %5146 = dma.done [#allocation5], 16
    $region53: #{csnn_forward.1} parent=1 // pred_fallthru
      _
    %5147 = vsyncpa [#allocation3], 1
    %5148 = vsyncpa [#allocation5], 1

</llo_original>
